<compile_context>
chip_gen: v6e
topology: v6e:2x2x1
jax: 0.10.0
libtpu: 0.0.40
codegen_flags: <defaults>
</compile_context>

<pallas_src>
import jax
import jax.numpy as jnp
from jax.experimental import pallas as pl
from jax.experimental.pallas import tpu as pltpu


def _round_up(x, m):
    return ((x + m - 1) // m) * m


def ae_forward_kernel(
    # batch-tiled inputs
    x_ref, eps_z_ref, eps_x_ref,
    # encoder params (constant blocks, resident across grid steps)
    we1_ref, be1_ref, we2_ref, be2_ref, weh_ref, beh_ref,
    # decoder params
    wd1_ref, bd1_ref, wd2_ref, bd2_ref, wdh_ref, bdh_ref,
    # single lane-dense packed output slab (width is a multiple of 128)
    out_ref,
):
    f32 = jnp.float32
    cdt = we1_ref.dtype                  # matmul-input dtype (bf16); accumulation is f32
    lat = eps_z_ref.shape[-1]            # true (unpadded) latent dim
    out_dim = eps_x_ref.shape[-1]        # true (unpadded) output dim

    # packed-lane layout (must match pack_params and the wrapper slicing)
    off_mu_z, off_lv_z = 0, lat
    off_mu_x, off_lv_x = 2 * lat, 2 * lat + out_dim
    off_out = 2 * lat + 2 * out_dim

    # ---- encoder hid_f: layer_c = 2 x (Linear + tanh); elementwise math in f32 ----
    x = x_ref[...].astype(cdt)
    h = jnp.tanh(jnp.dot(x, we1_ref[...], preferred_element_type=f32) + be1_ref[...])
    h = jnp.tanh(jnp.dot(h.astype(cdt), we2_ref[...], preferred_element_type=f32) + be2_ref[...])

    # ---- fused encoder heads: nonzero lanes [0 : 2*lat) only ----
    head_z = jnp.dot(h.astype(cdt), weh_ref[...], preferred_element_type=f32) + beh_ref[...]
    mu_z = head_z[:, off_mu_z:off_mu_z + lat]
    lv_z = head_z[:, off_lv_z:off_lv_z + lat]

    # ---- reparameterize: z = mu + eps * exp(0.5*logvar), at the true latent width ----
    z = mu_z + eps_z_ref[...] * jnp.exp(0.5 * lv_z)

    # ---- decoder hid_f ----
    hd = jnp.tanh(jnp.dot(z.astype(cdt), wd1_ref[...], preferred_element_type=f32) + bd1_ref[...])
    hd = jnp.tanh(jnp.dot(hd.astype(cdt), wd2_ref[...], preferred_element_type=f32) + bd2_ref[...])

    # ---- fused decoder heads: nonzero lanes [2*lat : 2*lat + 2*out_dim) only ----
    head_x = jnp.dot(hd.astype(cdt), wdh_ref[...], preferred_element_type=f32) + bdh_ref[...]
    mu_x = head_x[:, off_mu_x:off_mu_x + out_dim]
    lv_x = head_x[:, off_lv_x:off_lv_x + out_dim]
    out = mu_x + eps_x_ref[...] * jnp.exp(0.5 * lv_x)

    # ---- single lane-dense slab: head_z and head_x occupy disjoint lanes (zero elsewhere) ----
    out_ref[...] = head_z + head_x                    # one full-width unmasked store
    out_ref[:, off_out:off_out + out_dim] = out       # small masked store for the sample lanes


def _default_num_steps(batch):
    """1 grid step on 1-TC chips (v5e/v6e); split the batch across TensorCores when >1 (v7x)."""
    n = getattr(jax.devices()[0], "num_cores", 1)
    if not isinstance(n, int) or n < 1:
        n = 1
    if n > 1 and (batch % n != 0 or (batch // n) % 8 != 0):
        n = 1  # ragged / misaligned batch -> single step (block == full dim is always legal)
    return n


def ae_model_forward(x, eps_z, eps_x, p, *, num_steps=None):
    """Full AE_Model.forward in one Pallas kernel.

    `p` is the packed parameter dict from `pack_params`. Returns
    (out, mu_z, logvar_z, mu_x, logvar_x), matching the PyTorch forward.
    """
    B, in_dim = x.shape
    lat = eps_z.shape[1]
    out_dim = eps_x.shape[1]
    hid = p["we2"].shape[0]
    slab_w = p["weh"].shape[1]
    assert slab_w == p["wdh"].shape[1]
    assert slab_w % 128 == 0 and slab_w >= 2 * lat + 3 * out_dim

    if num_steps is None:
        num_steps = _default_num_steps(B)
    if num_steps > 1 and (B % num_steps != 0 or (B // num_steps) % 8 != 0):
        num_steps = 1
    tile_b = B // num_steps
    grid = (num_steps,)

    def row_spec(d):
        return pl.BlockSpec((tile_b, d), lambda i: (i, 0))

    def full_spec(arr):
        # constant block index -> Pallas keeps the block resident (no re-DMA after step 0)
        return pl.BlockSpec(arr.shape, lambda i: (0, 0))

    param_order = ["we1", "be1", "we2", "be2", "weh", "beh",
                   "wd1", "bd1", "wd2", "bd2", "wdh", "bdh"]
    param_args = [p[k] for k in param_order]
    param_specs = [full_spec(a) for a in param_args]

    out_shape = jax.ShapeDtypeStruct((B, slab_w), jnp.float32)
    out_spec = row_spec(slab_w)

    # explicit VMEM budget (v7x has only 64 MiB per TensorCore; default scoped limit is 16-32 MiB)
    def nbytes(a):
        return int(a.size) * a.dtype.itemsize
    in_tile_bytes = tile_b * (in_dim + lat + out_dim) * 4
    out_tile_bytes = tile_b * slab_w * 4
    param_bytes = sum(nbytes(a) for a in param_args)
    # live f32 intermediates per step: h (hid, 2 alternating), head_z (slab_w), z (lat),
    # hd (hid, 2 alternating), head_x (slab_w), out (out_dim), packed slab (slab_w)
    inter_bytes = tile_b * 4 * (2 * hid + 2 * hid + 3 * slab_w + lat + out_dim)
    vmem_limit = (2 * (in_tile_bytes + out_tile_bytes)   # double-buffered I/O tiles
                  + 2 * param_bytes                      # param blocks (pipeline double-buffers)
                  + 2 * inter_bytes                      # 2x safety factor on intermediates/spills
                  + (2 << 20))                           # fixed slack
    vmem_limit = int(min(64 << 20, max(4 << 20, vmem_limit)))
    # TODO(synk): if hid ever grows so param_bytes alone exceeds the v7x budget, tile the hidden
    # (K) dimension with an accumulator instead of holding all weights resident.

    slab = pl.pallas_call(
        ae_forward_kernel,
        out_shape=out_shape,
        grid_spec=pltpu.PrefetchScalarGridSpec(
            num_scalar_prefetch=0,
            grid=grid,
            in_specs=[row_spec(in_dim), row_spec(lat), row_spec(out_dim)] + param_specs,
            out_specs=out_spec,
        ),
        compiler_params=pltpu.CompilerParams(
            # TODO(synk): on v7x, confirm via xprof that this shards across both TensorCores;
            # if not, switch to pltpu.CORE_PARALLEL (or pl.core_map) or fall back to num_steps=1.
            dimension_semantics=("parallel",),
            vmem_limit_bytes=vmem_limit,
        ),
    )(x.astype(jnp.float32), eps_z.astype(jnp.float32), eps_x.astype(jnp.float32), *param_args)

    # wrapper-side slicing of the single lane-dense slab (free layout plumbing)
    off_lv_z = lat
    off_mu_x = 2 * lat
    off_lv_x = 2 * lat + out_dim
    off_out = 2 * lat + 2 * out_dim
    mu_z = slab[:, 0:lat]
    lv_z = slab[:, off_lv_z:off_lv_z + lat]
    mu_x = slab[:, off_mu_x:off_mu_x + out_dim]
    lv_x = slab[:, off_lv_x:off_lv_x + out_dim]
    out = slab[:, off_out:off_out + out_dim]
    return out, mu_z, lv_z, mu_x, lv_x


# ------------------------- parameter construction -------------------------

def init_linear(key, fan_in, fan_out):
    """PyTorch nn.Linear-style uniform init; weight already transposed to [in, out]."""
    kw, kb = jax.random.split(key)
    bound = 1.0 / (fan_in ** 0.5)
    w = jax.random.uniform(kw, (fan_in, fan_out), jnp.float32, -bound, bound)
    b = jax.random.uniform(kb, (1, fan_out), jnp.float32, -bound, bound)
    return w, b


def make_raw_params(key, in_dim, hid_dim, lat_dim, out_dim):
    keys = jax.random.split(key, 8)
    p = {}
    # encoder: in -> hid -> hid ; heads hid -> lat (mean), hid -> lat (logvar)
    p["we1"], p["be1"] = init_linear(keys[0], in_dim, hid_dim)
    p["we2"], p["be2"] = init_linear(keys[1], hid_dim, hid_dim)
    p["wem"], p["bem"] = init_linear(keys[2], hid_dim, lat_dim)
    p["welv"], p["belv"] = init_linear(keys[3], hid_dim, lat_dim)
    # decoder: lat -> hid -> hid ; heads hid -> out (mean), hid -> out (logvar)
    p["wd1"], p["bd1"] = init_linear(keys[4], lat_dim, hid_dim)
    p["wd2"], p["bd2"] = init_linear(keys[5], hid_dim, hid_dim)
    p["wdm"], p["bdm"] = init_linear(keys[6], hid_dim, out_dim)
    p["wdlv"], p["bdlv"] = init_linear(keys[7], hid_dim, out_dim)
    return p


def pack_params(raw, weight_dtype=jnp.bfloat16):
    """Fuse mean/logvar heads into one 128-lane matmul each, placing the columns at their final
    packed-output lane offsets (so head_z + head_x IS the packed slab); cast weights to bf16."""
    f32 = jnp.float32
    hid = raw["we2"].shape[0]
    lat = raw["wem"].shape[1]
    out_dim = raw["wdm"].shape[1]
    slab_w = _round_up(2 * lat + 3 * out_dim, 128)

    off_lv_z = lat
    off_mu_x = 2 * lat
    off_lv_x = 2 * lat + out_dim

    weh = jnp.zeros((hid, slab_w), f32)
    weh = weh.at[:, :lat].set(raw["wem"]).at[:, off_lv_z:off_lv_z + lat].set(raw["welv"])
    beh = jnp.zeros((1, slab_w), f32)
    beh = beh.at[:, :lat].set(raw["bem"]).at[:, off_lv_z:off_lv_z + lat].set(raw["belv"])

    wdh = jnp.zeros((hid, slab_w), f32)
    wdh = (wdh.at[:, off_mu_x:off_mu_x + out_dim].set(raw["wdm"])
              .at[:, off_lv_x:off_lv_x + out_dim].set(raw["wdlv"]))
    bdh = jnp.zeros((1, slab_w), f32)
    bdh = (bdh.at[:, off_mu_x:off_mu_x + out_dim].set(raw["bdm"])
              .at[:, off_lv_x:off_lv_x + out_dim].set(raw["bdlv"]))

    packed = {
        "we1": raw["we1"], "be1": raw["be1"],
        "we2": raw["we2"], "be2": raw["be2"],
        "weh": weh, "beh": beh,
        "wd1": raw["wd1"], "bd1": raw["bd1"],
        "wd2": raw["wd2"], "bd2": raw["bd2"],
        "wdh": wdh, "bdh": bdh,
    }
    for k in ("we1", "we2", "weh", "wd1", "wd2", "wdh"):
        packed[k] = packed[k].astype(weight_dtype)   # weights bf16; biases stay f32
    return packed


# ------------------------------- reference --------------------------------

def reference_forward(x, eps_z, eps_x, raw, compute_dtype=jnp.bfloat16):
    """Plain-JAX reference mirroring the kernel's math (same bf16 matmul inputs, f32 accum)."""
    f32 = jnp.float32

    def lin(a, w, b):
        return jnp.dot(a.astype(compute_dtype), w.astype(compute_dtype),
                       preferred_element_type=f32) + b

    h = jnp.tanh(lin(x, raw["we1"], raw["be1"]))
    h = jnp.tanh(lin(h, raw["we2"], raw["be2"]))
    mu_z = lin(h, raw["wem"], raw["bem"])
    lv_z = lin(h, raw["welv"], raw["belv"])
    z = mu_z + eps_z * jnp.exp(0.5 * lv_z)
    hd = jnp.tanh(lin(z, raw["wd1"], raw["bd1"]))
    hd = jnp.tanh(lin(hd, raw["wd2"], raw["bd2"]))
    mu_x = lin(hd, raw["wdm"], raw["bdm"])
    lv_x = lin(hd, raw["wdlv"], raw["bdlv"])
    out = mu_x + eps_x * jnp.exp(0.5 * lv_x)
    return out, mu_z, lv_z, mu_x, lv_x


if __name__ == "__main__":
    # Feature dims stay small (as the module implies); batch sized so a single grid step still
    # gives the MXU a full M dimension on v5e/v6e and splits evenly across v7x TensorCores.
    B, IN_DIM, HID_DIM, LAT_DIM = 512, 16, 128, 8
    OUT_DIM = IN_DIM  # autoencoder reconstructs the input dimensionality

    key = jax.random.PRNGKey(0)
    k_x, k_ez, k_ex, k_p = jax.random.split(key, 4)

    x = jax.random.normal(k_x, (B, IN_DIM), jnp.float32)
    eps_z = jax.random.normal(k_ez, (B, LAT_DIM), jnp.float32)   # randn_like in encoder reparam
    eps_x = jax.random.normal(k_ex, (B, OUT_DIM), jnp.float32)   # randn_like in decoder reparam

    raw_params = make_raw_params(k_p, IN_DIM, HID_DIM, LAT_DIM, OUT_DIM)
    packed_params = pack_params(raw_params, weight_dtype=jnp.bfloat16)

    outs = ae_model_forward(x, eps_z, eps_x, packed_params)
    outs = jax.block_until_ready(outs)

    refs = reference_forward(x, eps_z, eps_x, raw_params, compute_dtype=jnp.bfloat16)
    names = ("out", "mu_z", "logvar_z", "mu_x", "logvar_x")
    for name, got, want in zip(names, outs, refs):
        assert got.shape == want.shape, (name, got.shape, want.shape)
        err = float(jnp.max(jnp.abs(got - want)))
        assert err < 2e-2, f"{name}: max abs err {err} vs reference"

    print("KERNEL_OK")
</pallas_src>

<mosaic_0001>
module attributes {stable_mosaic.version = 11 : i64} {
  func.func @ae_forward_kernel(%arg0: i32, %arg1: memref<512x16xf32, #tpu.memory_space<vmem>>, %arg2: memref<512x8xf32, #tpu.memory_space<vmem>>, %arg3: memref<512x16xf32, #tpu.memory_space<vmem>>, %arg4: memref<16x128xbf16, #tpu.memory_space<vmem>>, %arg5: memref<1x128xf32, #tpu.memory_space<vmem>>, %arg6: memref<128x128xbf16, #tpu.memory_space<vmem>>, %arg7: memref<1x128xf32, #tpu.memory_space<vmem>>, %arg8: memref<128x128xbf16, #tpu.memory_space<vmem>>, %arg9: memref<1x128xf32, #tpu.memory_space<vmem>>, %arg10: memref<8x128xbf16, #tpu.memory_space<vmem>>, %arg11: memref<1x128xf32, #tpu.memory_space<vmem>>, %arg12: memref<128x128xbf16, #tpu.memory_space<vmem>>, %arg13: memref<1x128xf32, #tpu.memory_space<vmem>>, %arg14: memref<128x128xbf16, #tpu.memory_space<vmem>>, %arg15: memref<1x128xf32, #tpu.memory_space<vmem>>, %arg16: memref<512x128xf32, #tpu.memory_space<vmem>>) attributes {dimension_semantics = [#tpu.dimension_semantics<parallel>], iteration_bounds = array<i64: 1>, scalar_prefetch = 0 : i64, scratch_operands = 0 : i64, tpu.core_type = #tpu.core_type<tc>, window_params = [{transform_indices = @transform_0, window_bounds = array<i64: 512, 16>}, {transform_indices = @transform_1, window_bounds = array<i64: 512, 8>}, {transform_indices = @transform_2, window_bounds = array<i64: 512, 16>}, {pipeline_mode = #tpu.pipeline_mode<synchronous>, transform_indices = @transform_3, window_bounds = array<i64: 16, 128>}, {pipeline_mode = #tpu.pipeline_mode<synchronous>, transform_indices = @transform_4, window_bounds = array<i64: 1, 128>}, {pipeline_mode = #tpu.pipeline_mode<synchronous>, transform_indices = @transform_5, window_bounds = array<i64: 128, 128>}, {pipeline_mode = #tpu.pipeline_mode<synchronous>, transform_indices = @transform_6, window_bounds = array<i64: 1, 128>}, {pipeline_mode = #tpu.pipeline_mode<synchronous>, transform_indices = @transform_7, window_bounds = array<i64: 128, 128>}, {pipeline_mode = #tpu.pipeline_mode<synchronous>, transform_indices = @transform_8, window_bounds = array<i64: 1, 128>}, {pipeline_mode = #tpu.pipeline_mode<synchronous>, transform_indices = @transform_9, window_bounds = array<i64: 8, 128>}, {pipeline_mode = #tpu.pipeline_mode<synchronous>, transform_indices = @transform_10, window_bounds = array<i64: 1, 128>}, {pipeline_mode = #tpu.pipeline_mode<synchronous>, transform_indices = @transform_11, window_bounds = array<i64: 128, 128>}, {pipeline_mode = #tpu.pipeline_mode<synchronous>, transform_indices = @transform_12, window_bounds = array<i64: 1, 128>}, {pipeline_mode = #tpu.pipeline_mode<synchronous>, transform_indices = @transform_13, window_bounds = array<i64: 128, 128>}, {pipeline_mode = #tpu.pipeline_mode<synchronous>, transform_indices = @transform_14, window_bounds = array<i64: 1, 128>}, {transform_indices = @transform_15, window_bounds = array<i64: 512, 128>}]} {
    %c0 = arith.constant 0 : index
    %c0_0 = arith.constant 0 : index
    %0 = vector.load %arg1[%c0, %c0_0] : memref<512x16xf32, #tpu.memory_space<vmem>>, vector<512x16xf32>
    %1 = arith.truncf %0 : vector<512x16xf32> to vector<512x16xbf16>
    %c0_1 = arith.constant 0 : index
    %c0_2 = arith.constant 0 : index
    %2 = vector.load %arg4[%c0_1, %c0_2] : memref<16x128xbf16, #tpu.memory_space<vmem>>, vector<16x128xbf16>
    %cst = arith.constant dense<0.000000e+00> : vector<512x128xf32>
    %3 = tpu.matmul %1, %2, %cst {dimension_numbers = #tpu.dot_dimension_numbers<[1], [0], [0], [1], [0, 0, 1, 1], [], []>} : vector<512x16xbf16>, vector<16x128xbf16>, vector<512x128xf32> -> vector<512x128xf32>
    %c0_3 = arith.constant 0 : index
    %c0_4 = arith.constant 0 : index
    %4 = vector.load %arg5[%c0_3, %c0_4] : memref<1x128xf32, #tpu.memory_space<vmem>>, vector<1x128xf32>
    %5 = vector.broadcast %4 : vector<1x128xf32> to vector<512x128xf32>
    %6 = arith.addf %3, %5 : vector<512x128xf32>
    %7 = math.tanh %6 : vector<512x128xf32>
    %8 = arith.truncf %7 : vector<512x128xf32> to vector<512x128xbf16>
    %c0_5 = arith.constant 0 : index
    %c0_6 = arith.constant 0 : index
    %9 = vector.load %arg6[%c0_5, %c0_6] : memref<128x128xbf16, #tpu.memory_space<vmem>>, vector<128x128xbf16>
    %cst_7 = arith.constant dense<0.000000e+00> : vector<512x128xf32>
    %10 = tpu.matmul %8, %9, %cst_7 {dimension_numbers = #tpu.dot_dimension_numbers<[1], [0], [0], [1], [0, 0, 1, 1], [], []>} : vector<512x128xbf16>, vector<128x128xbf16>, vector<512x128xf32> -> vector<512x128xf32>
    %c0_8 = arith.constant 0 : index
    %c0_9 = arith.constant 0 : index
    %11 = vector.load %arg7[%c0_8, %c0_9] : memref<1x128xf32, #tpu.memory_space<vmem>>, vector<1x128xf32>
    %12 = vector.broadcast %11 : vector<1x128xf32> to vector<512x128xf32>
    %13 = arith.addf %10, %12 : vector<512x128xf32>
    %14 = math.tanh %13 : vector<512x128xf32>
    %15 = arith.truncf %14 : vector<512x128xf32> to vector<512x128xbf16>
    %c0_10 = arith.constant 0 : index
    %c0_11 = arith.constant 0 : index
    %16 = vector.load %arg8[%c0_10, %c0_11] : memref<128x128xbf16, #tpu.memory_space<vmem>>, vector<128x128xbf16>
    %cst_12 = arith.constant dense<0.000000e+00> : vector<512x128xf32>
    %17 = tpu.matmul %15, %16, %cst_12 {dimension_numbers = #tpu.dot_dimension_numbers<[1], [0], [0], [1], [0, 0, 1, 1], [], []>} : vector<512x128xbf16>, vector<128x128xbf16>, vector<512x128xf32> -> vector<512x128xf32>
    %c0_13 = arith.constant 0 : index
    %c0_14 = arith.constant 0 : index
    %18 = vector.load %arg9[%c0_13, %c0_14] : memref<1x128xf32, #tpu.memory_space<vmem>>, vector<1x128xf32>
    %19 = vector.broadcast %18 : vector<1x128xf32> to vector<512x128xf32>
    %20 = arith.addf %17, %19 : vector<512x128xf32>
    %21 = vector.extract_strided_slice %20 {offsets = [0, 0], sizes = [512, 8], strides = [1, 1]} : vector<512x128xf32> to vector<512x8xf32>
    %22 = vector.extract_strided_slice %20 {offsets = [0, 8], sizes = [512, 8], strides = [1, 1]} : vector<512x128xf32> to vector<512x8xf32>
    %c0_15 = arith.constant 0 : index
    %c0_16 = arith.constant 0 : index
    %23 = vector.load %arg2[%c0_15, %c0_16] : memref<512x8xf32, #tpu.memory_space<vmem>>, vector<512x8xf32>
    %cst_17 = arith.constant 5.000000e-01 : f32
    %24 = vector.broadcast %cst_17 : f32 to vector<512x8xf32>
    %25 = arith.mulf %24, %22 : vector<512x8xf32>
    %26 = math.exp %25 : vector<512x8xf32>
    %27 = arith.mulf %23, %26 : vector<512x8xf32>
    %28 = arith.addf %21, %27 : vector<512x8xf32>
    %29 = arith.truncf %28 : vector<512x8xf32> to vector<512x8xbf16>
    %c0_18 = arith.constant 0 : index
    %c0_19 = arith.constant 0 : index
    %30 = vector.load %arg10[%c0_18, %c0_19] : memref<8x128xbf16, #tpu.memory_space<vmem>>, vector<8x128xbf16>
    %cst_20 = arith.constant dense<0.000000e+00> : vector<512x128xf32>
    %31 = tpu.matmul %29, %30, %cst_20 {dimension_numbers = #tpu.dot_dimension_numbers<[1], [0], [0], [1], [0, 0, 1, 1], [], []>} : vector<512x8xbf16>, vector<8x128xbf16>, vector<512x128xf32> -> vector<512x128xf32>
    %c0_21 = arith.constant 0 : index
    %c0_22 = arith.constant 0 : index
    %32 = vector.load %arg11[%c0_21, %c0_22] : memref<1x128xf32, #tpu.memory_space<vmem>>, vector<1x128xf32>
    %33 = vector.broadcast %32 : vector<1x128xf32> to vector<512x128xf32>
    %34 = arith.addf %31, %33 : vector<512x128xf32>
    %35 = math.tanh %34 : vector<512x128xf32>
    %36 = arith.truncf %35 : vector<512x128xf32> to vector<512x128xbf16>
    %c0_23 = arith.constant 0 : index
    %c0_24 = arith.constant 0 : index
    %37 = vector.load %arg12[%c0_23, %c0_24] : memref<128x128xbf16, #tpu.memory_space<vmem>>, vector<128x128xbf16>
    %cst_25 = arith.constant dense<0.000000e+00> : vector<512x128xf32>
    %38 = tpu.matmul %36, %37, %cst_25 {dimension_numbers = #tpu.dot_dimension_numbers<[1], [0], [0], [1], [0, 0, 1, 1], [], []>} : vector<512x128xbf16>, vector<128x128xbf16>, vector<512x128xf32> -> vector<512x128xf32>
    %c0_26 = arith.constant 0 : index
    %c0_27 = arith.constant 0 : index
    %39 = vector.load %arg13[%c0_26, %c0_27] : memref<1x128xf32, #tpu.memory_space<vmem>>, vector<1x128xf32>
    %40 = vector.broadcast %39 : vector<1x128xf32> to vector<512x128xf32>
    %41 = arith.addf %38, %40 : vector<512x128xf32>
    %42 = math.tanh %41 : vector<512x128xf32>
    %43 = arith.truncf %42 : vector<512x128xf32> to vector<512x128xbf16>
    %c0_28 = arith.constant 0 : index
    %c0_29 = arith.constant 0 : index
    %44 = vector.load %arg14[%c0_28, %c0_29] : memref<128x128xbf16, #tpu.memory_space<vmem>>, vector<128x128xbf16>
    %cst_30 = arith.constant dense<0.000000e+00> : vector<512x128xf32>
    %45 = tpu.matmul %43, %44, %cst_30 {dimension_numbers = #tpu.dot_dimension_numbers<[1], [0], [0], [1], [0, 0, 1, 1], [], []>} : vector<512x128xbf16>, vector<128x128xbf16>, vector<512x128xf32> -> vector<512x128xf32>
    %c0_31 = arith.constant 0 : index
    %c0_32 = arith.constant 0 : index
    %46 = vector.load %arg15[%c0_31, %c0_32] : memref<1x128xf32, #tpu.memory_space<vmem>>, vector<1x128xf32>
    %47 = vector.broadcast %46 : vector<1x128xf32> to vector<512x128xf32>
    %48 = arith.addf %45, %47 : vector<512x128xf32>
    %49 = vector.extract_strided_slice %48 {offsets = [0, 16], sizes = [512, 16], strides = [1, 1]} : vector<512x128xf32> to vector<512x16xf32>
    %50 = vector.extract_strided_slice %48 {offsets = [0, 32], sizes = [512, 16], strides = [1, 1]} : vector<512x128xf32> to vector<512x16xf32>
    %c0_33 = arith.constant 0 : index
    %c0_34 = arith.constant 0 : index
    %51 = vector.load %arg3[%c0_33, %c0_34] : memref<512x16xf32, #tpu.memory_space<vmem>>, vector<512x16xf32>
    %cst_35 = arith.constant 5.000000e-01 : f32
    %52 = vector.broadcast %cst_35 : f32 to vector<512x16xf32>
    %53 = arith.mulf %52, %50 : vector<512x16xf32>
    %54 = math.exp %53 : vector<512x16xf32>
    %55 = arith.mulf %51, %54 : vector<512x16xf32>
    %56 = arith.addf %49, %55 : vector<512x16xf32>
    %57 = arith.addf %20, %48 : vector<512x128xf32>
    %c0_36 = arith.constant 0 : index
    %c0_37 = arith.constant 0 : index
    %58 = vector.load %arg16[%c0_36, %c0_37] : memref<512x128xf32, #tpu.memory_space<vmem>>, vector<512x128xf32>
    tpu.vector_store %arg16[%c0_36, %c0_37], %57 {strides = array<i32>} : memref<512x128xf32, #tpu.memory_space<vmem>>, vector<512x128xf32>,
    %c0_38 = arith.constant 0 : index
    %c48 = arith.constant 48 : index
    %59 = vector.load %arg16[%c0_38, %c48] : memref<512x128xf32, #tpu.memory_space<vmem>>, vector<512x16xf32>
    tpu.vector_store %arg16[%c0_38, %c48], %56 {strides = array<i32>} : memref<512x128xf32, #tpu.memory_space<vmem>>, vector<512x16xf32>,
    return
  }
  func.func @transform_0(%arg0: i32) -> (i32, i32) {
    %c0_i32 = arith.constant 0 : i32
    %c0_i32_0 = arith.constant 0 : i32
    return %arg0, %c0_i32 : i32, i32
  }
  func.func @transform_1(%arg0: i32) -> (i32, i32) {
    %c0_i32 = arith.constant 0 : i32
    %c0_i32_0 = arith.constant 0 : i32
    return %arg0, %c0_i32 : i32, i32
  }
  func.func @transform_2(%arg0: i32) -> (i32, i32) {
    %c0_i32 = arith.constant 0 : i32
    %c0_i32_0 = arith.constant 0 : i32
    return %arg0, %c0_i32 : i32, i32
  }
  func.func @transform_3(%arg0: i32) -> (i32, i32) {
    %c0_i32 = arith.constant 0 : i32
    %c0_i32_0 = arith.constant 0 : i32
    %c0_i32_1 = arith.constant 0 : i32
    return %c0_i32, %c0_i32_0 : i32, i32
  }
  func.func @transform_4(%arg0: i32) -> (i32, i32) {
    %c0_i32 = arith.constant 0 : i32
    %c0_i32_0 = arith.constant 0 : i32
    %c0_i32_1 = arith.constant 0 : i32
    return %c0_i32, %c0_i32_0 : i32, i32
  }
  func.func @transform_5(%arg0: i32) -> (i32, i32) {
    %c0_i32 = arith.constant 0 : i32
    %c0_i32_0 = arith.constant 0 : i32
    %c0_i32_1 = arith.constant 0 : i32
    return %c0_i32, %c0_i32_0 : i32, i32
  }
  func.func @transform_6(%arg0: i32) -> (i32, i32) {
    %c0_i32 = arith.constant 0 : i32
    %c0_i32_0 = arith.constant 0 : i32
    %c0_i32_1 = arith.constant 0 : i32
    return %c0_i32, %c0_i32_0 : i32, i32
  }
  func.func @transform_7(%arg0: i32) -> (i32, i32) {
    %c0_i32 = arith.constant 0 : i32
    %c0_i32_0 = arith.constant 0 : i32
    %c0_i32_1 = arith.constant 0 : i32
    return %c0_i32, %c0_i32_0 : i32, i32
  }
  func.func @transform_8(%arg0: i32) -> (i32, i32) {
    %c0_i32 = arith.constant 0 : i32
    %c0_i32_0 = arith.constant 0 : i32
    %c0_i32_1 = arith.constant 0 : i32
    return %c0_i32, %c0_i32_0 : i32, i32
  }
  func.func @transform_9(%arg0: i32) -> (i32, i32) {
    %c0_i32 = arith.constant 0 : i32
    %c0_i32_0 = arith.constant 0 : i32
    %c0_i32_1 = arith.constant 0 : i32
    return %c0_i32, %c0_i32_0 : i32, i32
  }
  func.func @transform_10(%arg0: i32) -> (i32, i32) {
    %c0_i32 = arith.constant 0 : i32
    %c0_i32_0 = arith.constant 0 : i32
    %c0_i32_1 = arith.constant 0 : i32
    return %c0_i32, %c0_i32_0 : i32, i32
  }
  func.func @transform_11(%arg0: i32) -> (i32, i32) {
    %c0_i32 = arith.constant 0 : i32
    %c0_i32_0 = arith.constant 0 : i32
    %c0_i32_1 = arith.constant 0 : i32
    return %c0_i32, %c0_i32_0 : i32, i32
  }
  func.func @transform_12(%arg0: i32) -> (i32, i32) {
    %c0_i32 = arith.constant 0 : i32
    %c0_i32_0 = arith.constant 0 : i32
    %c0_i32_1 = arith.constant 0 : i32
    return %c0_i32, %c0_i32_0 : i32, i32
  }
  func.func @transform_13(%arg0: i32) -> (i32, i32) {
    %c0_i32 = arith.constant 0 : i32
    %c0_i32_0 = arith.constant 0 : i32
    %c0_i32_1 = arith.constant 0 : i32
    return %c0_i32, %c0_i32_0 : i32, i32
  }
  func.func @transform_14(%arg0: i32) -> (i32, i32) {
    %c0_i32 = arith.constant 0 : i32
    %c0_i32_0 = arith.constant 0 : i32
    %c0_i32_1 = arith.constant 0 : i32
    return %c0_i32, %c0_i32_0 : i32, i32
  }
  func.func @transform_15(%arg0: i32) -> (i32, i32) {
    %c0_i32 = arith.constant 0 : i32
    %c0_i32_0 = arith.constant 0 : i32
    return %arg0, %c0_i32 : i32, i32
  }
}

</mosaic_0001>

<llo_original>
// kernel: tpu_custom_call.1
$region0: #{tpu_custom_call.1}
  #allocation0 [shape = 'u32[]', space=smem, size = 0x4, offset = 0x4, fixed_abs, tag = 'smem constant byte address 0x4 - core index']
  #allocation1 [shape = 'u32[144,128]{1,0:T(1,128)}', space=vmem, size = 0x12000, scoped, tag = 'internal scratch']
  %s0 = inlined_call_operand.vmem [shape: f32[512,16], index: 0, kind: input, shape index: {}]
  %s1 = inlined_call_operand.vmem [shape: f32[512,8], index: 1, kind: input, shape index: {}]
  %s2 = inlined_call_operand.vmem [shape: f32[512,16], index: 2, kind: input, shape index: {}]
  %s3 = inlined_call_operand.vmem [shape: bf16[16,128], index: 3, kind: input, shape index: {}]
  %s4 = inlined_call_operand.vmem [shape: f32[1,128], index: 4, kind: input, shape index: {}]
  %s5 = inlined_call_operand.vmem [shape: bf16[128,128], index: 5, kind: input, shape index: {}]
  %s6 = inlined_call_operand.vmem [shape: f32[1,128], index: 6, kind: input, shape index: {}]
  %s7 = inlined_call_operand.vmem [shape: bf16[128,128], index: 7, kind: input, shape index: {}]
  %s8 = inlined_call_operand.vmem [shape: f32[1,128], index: 8, kind: input, shape index: {}]
  %s9 = inlined_call_operand.vmem [shape: bf16[8,128], index: 9, kind: input, shape index: {}]
  %s10 = inlined_call_operand.vmem [shape: f32[1,128], index: 10, kind: input, shape index: {}]
  %s11 = inlined_call_operand.vmem [shape: bf16[128,128], index: 11, kind: input, shape index: {}]
  %s12 = inlined_call_operand.vmem [shape: f32[1,128], index: 12, kind: input, shape index: {}]
  %s13 = inlined_call_operand.vmem [shape: bf16[128,128], index: 13, kind: input, shape index: {}]
  %s14 = inlined_call_operand.vmem [shape: f32[1,128], index: 14, kind: input, shape index: {}]
  %s15 = inlined_call_operand.hbm [shape: f32[512,128], index: 15, kind: output, shape index: {}]
  %s16 = sld [smem:[#allocation0]]
  $region70: #{tpu_custom_call.1} parent=0
    _
  %s18 = ssub.s32 1, %s16
  %s19 = scalar_select 0, %s18, %s16
  $region1: #{tpu_custom_call.1} parent=0
    #allocation2 [shape = 'u8[262144]{0}', space=vmem, size = 0x40000, scoped, tag = 'output window, operand 0, single buffered']
    #allocation3 [shape = 's32[1]{0}', space=sflag, size = 0x4, scoped, tag = 'scoped memory for tpu_custom_call.1']
    %20 = vsyncpa [#allocation3], 0
    // Predicated region
    $region2: #{tpu_custom_call.1} parent=1 // pred_check
      _
    $region3: #{tpu_custom_call.1} parent=1 // pred_check_branch
      %22 = sbr.rel (0) target = $region5
    $region4: #{tpu_custom_call.1} parent=1 // pred_region
      _
    $region5: #{tpu_custom_call.1} parent=1 // pred_fallthru
      _
    // Predicated region
    $region6: #{tpu_custom_call.1} parent=1 // pred_check
      _
    $region7: #{tpu_custom_call.1} parent=1 // pred_check_branch
      %24 = sbr.rel (0) target = $region9
    $region8: #{tpu_custom_call.1} parent=1 // pred_region
      _
    $region9: #{tpu_custom_call.1} parent=1 // pred_fallthru
      _
    // Predicated region
    $region10: #{tpu_custom_call.1} parent=1 // pred_check
      _
    $region11: #{tpu_custom_call.1} parent=1 // pred_check_branch
      %26 = sbr.rel (0) target = $region13
    $region12: #{tpu_custom_call.1} parent=1 // pred_region
      _
    $region13: #{tpu_custom_call.1} parent=1 // pred_fallthru
      _
    // Predicated region
    $region14: #{tpu_custom_call.1} parent=1 // pred_check
      _
    $region15: #{tpu_custom_call.1} parent=1 // pred_check_branch
      %28 = sbr.rel (0) target = $region17
    $region16: #{tpu_custom_call.1} parent=1 // pred_region
      _
    $region17: #{tpu_custom_call.1} parent=1 // pred_fallthru
      _
    // Predicated region
    $region18: #{tpu_custom_call.1} parent=1 // pred_check
      _
    $region19: #{tpu_custom_call.1} parent=1 // pred_check_branch
      %30 = sbr.rel (0) target = $region21
    $region20: #{tpu_custom_call.1} parent=1 // pred_region
      _
    $region21: #{tpu_custom_call.1} parent=1 // pred_fallthru
      _
    // Predicated region
    $region22: #{tpu_custom_call.1} parent=1 // pred_check
      _
    $region23: #{tpu_custom_call.1} parent=1 // pred_check_branch
      %32 = sbr.rel (0) target = $region25
    $region24: #{tpu_custom_call.1} parent=1 // pred_region
      _
    $region25: #{tpu_custom_call.1} parent=1 // pred_fallthru
      _
    // Predicated region
    $region26: #{tpu_custom_call.1} parent=1 // pred_check
      _
    $region27: #{tpu_custom_call.1} parent=1 // pred_check_branch
      %34 = sbr.rel (0) target = $region29
    $region28: #{tpu_custom_call.1} parent=1 // pred_region
      _
    $region29: #{tpu_custom_call.1} parent=1 // pred_fallthru
      _
    // Predicated region
    $region30: #{tpu_custom_call.1} parent=1 // pred_check
      _
    $region31: #{tpu_custom_call.1} parent=1 // pred_check_branch
      %36 = sbr.rel (0) target = $region33
    $region32: #{tpu_custom_call.1} parent=1 // pred_region
      _
    $region33: #{tpu_custom_call.1} parent=1 // pred_fallthru
      _
    // Predicated region
    $region34: #{tpu_custom_call.1} parent=1 // pred_check
      _
    $region35: #{tpu_custom_call.1} parent=1 // pred_check_branch
      %38 = sbr.rel (0) target = $region37
    $region36: #{tpu_custom_call.1} parent=1 // pred_region
      _
    $region37: #{tpu_custom_call.1} parent=1 // pred_fallthru
      _
    // Predicated region
    $region38: #{tpu_custom_call.1} parent=1 // pred_check
      _
    $region39: #{tpu_custom_call.1} parent=1 // pred_check_branch
      %40 = sbr.rel (0) target = $region41
    $region40: #{tpu_custom_call.1} parent=1 // pred_region
      _
    $region41: #{tpu_custom_call.1} parent=1 // pred_fallthru
      _
    // Predicated region
    $region42: #{tpu_custom_call.1} parent=1 // pred_check
      _
    $region43: #{tpu_custom_call.1} parent=1 // pred_check_branch
      %42 = sbr.rel (0) target = $region45
    $region44: #{tpu_custom_call.1} parent=1 // pred_region
      _
    $region45: #{tpu_custom_call.1} parent=1 // pred_fallthru
      _
    // Predicated region
    $region46: #{tpu_custom_call.1} parent=1 // pred_check
      _
    $region47: #{tpu_custom_call.1} parent=1 // pred_check_branch
      %44 = sbr.rel (0) target = $region49
    $region48: #{tpu_custom_call.1} parent=1 // pred_region
      _
    $region49: #{tpu_custom_call.1} parent=1 // pred_fallthru
      _
    // Predicated region
    $region50: #{tpu_custom_call.1} parent=1 // pred_check
      _
    $region51: #{tpu_custom_call.1} parent=1 // pred_check_branch
      %46 = sbr.rel (0) target = $region53
    $region52: #{tpu_custom_call.1} parent=1 // pred_region
      _
    $region53: #{tpu_custom_call.1} parent=1 // pred_fallthru
      _
    // Predicated region
    $region54: #{tpu_custom_call.1} parent=1 // pred_check
      _
    $region55: #{tpu_custom_call.1} parent=1 // pred_check_branch
      %48 = sbr.rel (0) target = $region57
    $region56: #{tpu_custom_call.1} parent=1 // pred_region
      _
    $region57: #{tpu_custom_call.1} parent=1 // pred_fallthru
      _
    // Predicated region
    $region58: #{tpu_custom_call.1} parent=1 // pred_check
      _
    $region59: #{tpu_custom_call.1} parent=1 // pred_check_branch
      %50 = sbr.rel (0) target = $region61
    $region60: #{tpu_custom_call.1} parent=1 // pred_region
      _
    $region61: #{tpu_custom_call.1} parent=1 // pred_fallthru
      _
    %v52 = vld [vmem:[%s0] sm:$0xff]
    %v53 = vld [vmem:[%s0 + $0x8] sm:$0xff]
    %v54 = vld [vmem:[%s0 + $0x10] sm:$0xff]
    %v55 = vld [vmem:[%s0 + $0x18] sm:$0xff]
    %v56 = vld [vmem:[%s0 + $0x20] sm:$0xff]
    %v57 = vld [vmem:[%s0 + $0x28] sm:$0xff]
    %v58 = vld [vmem:[%s0 + $0x30] sm:$0xff]
    %v59 = vld [vmem:[%s0 + $0x38] sm:$0xff]
    %v60 = vld [vmem:[%s0 + $0x40] sm:$0xff]
    %v61 = vld [vmem:[%s0 + $0x48] sm:$0xff]
    %v62 = vld [vmem:[%s0 + $0x50] sm:$0xff]
    %v63 = vld [vmem:[%s0 + $0x58] sm:$0xff]
    %v64 = vld [vmem:[%s0 + $0x60] sm:$0xff]
    %v65 = vld [vmem:[%s0 + $0x68] sm:$0xff]
    %v66 = vld [vmem:[%s0 + $0x70] sm:$0xff]
    %v67 = vld [vmem:[%s0 + $0x78] sm:$0xff]
    %v68 = vld [vmem:[%s0 + $0x80] sm:$0xff]
    %v69 = vld [vmem:[%s0 + $0x88] sm:$0xff]
    %v70 = vld [vmem:[%s0 + $0x90] sm:$0xff]
    %v71 = vld [vmem:[%s0 + $0x98] sm:$0xff]
    %v72 = vld [vmem:[%s0 + $0xa0] sm:$0xff]
    %v73 = vld [vmem:[%s0 + $0xa8] sm:$0xff]
    %v74 = vld [vmem:[%s0 + $0xb0] sm:$0xff]
    %v75 = vld [vmem:[%s0 + $0xb8] sm:$0xff]
    %v76 = vld [vmem:[%s0 + $0xc0] sm:$0xff]
    %v77 = vld [vmem:[%s0 + $0xc8] sm:$0xff]
    %v78 = vld [vmem:[%s0 + $0xd0] sm:$0xff]
    %v79 = vld [vmem:[%s0 + $0xd8] sm:$0xff]
    %v80 = vld [vmem:[%s0 + $0xe0] sm:$0xff]
    %v81 = vld [vmem:[%s0 + $0xe8] sm:$0xff]
    %v82 = vld [vmem:[%s0 + $0xf0] sm:$0xff]
    %v83 = vld [vmem:[%s0 + $0xf8] sm:$0xff]
    %v84 = vld [vmem:[%s0 + $0x100] sm:$0xff]
    %v85 = vld [vmem:[%s0 + $0x108] sm:$0xff]
    %v86 = vld [vmem:[%s0 + $0x110] sm:$0xff]
    %v87 = vld [vmem:[%s0 + $0x118] sm:$0xff]
    %v88 = vld [vmem:[%s0 + $0x120] sm:$0xff]
    %v89 = vld [vmem:[%s0 + $0x128] sm:$0xff]
    %v90 = vld [vmem:[%s0 + $0x130] sm:$0xff]
    %v91 = vld [vmem:[%s0 + $0x138] sm:$0xff]
    %v92 = vld [vmem:[%s0 + $0x140] sm:$0xff]
    %v93 = vld [vmem:[%s0 + $0x148] sm:$0xff]
    %v94 = vld [vmem:[%s0 + $0x150] sm:$0xff]
    %v95 = vld [vmem:[%s0 + $0x158] sm:$0xff]
    %v96 = vld [vmem:[%s0 + $0x160] sm:$0xff]
    %v97 = vld [vmem:[%s0 + $0x168] sm:$0xff]
    %v98 = vld [vmem:[%s0 + $0x170] sm:$0xff]
    %v99 = vld [vmem:[%s0 + $0x178] sm:$0xff]
    %v100 = vld [vmem:[%s0 + $0x180] sm:$0xff]
    %v101 = vld [vmem:[%s0 + $0x188] sm:$0xff]
    %v102 = vld [vmem:[%s0 + $0x190] sm:$0xff]
    %v103 = vld [vmem:[%s0 + $0x198] sm:$0xff]
    %v104 = vld [vmem:[%s0 + $0x1a0] sm:$0xff]
    %v105 = vld [vmem:[%s0 + $0x1a8] sm:$0xff]
    %v106 = vld [vmem:[%s0 + $0x1b0] sm:$0xff]
    %v107 = vld [vmem:[%s0 + $0x1b8] sm:$0xff]
    %v108 = vld [vmem:[%s0 + $0x1c0] sm:$0xff]
    %v109 = vld [vmem:[%s0 + $0x1c8] sm:$0xff]
    %v110 = vld [vmem:[%s0 + $0x1d0] sm:$0xff]
    %v111 = vld [vmem:[%s0 + $0x1d8] sm:$0xff]
    %v112 = vld [vmem:[%s0 + $0x1e0] sm:$0xff]
    %v113 = vld [vmem:[%s0 + $0x1e8] sm:$0xff]
    %v114 = vld [vmem:[%s0 + $0x1f0] sm:$0xff]
    %v115 = vld [vmem:[%s0 + $0x1f8] sm:$0xff]
    %v116 = vpack.c.bf16 %v53, %v52
    %v117 = vpack.c.bf16 %v55, %v54
    %v118 = vpack.c.bf16 %v57, %v56
    %v119 = vpack.c.bf16 %v59, %v58
    %v120 = vpack.c.bf16 %v61, %v60
    %v121 = vpack.c.bf16 %v63, %v62
    %v122 = vpack.c.bf16 %v65, %v64
    %v123 = vpack.c.bf16 %v67, %v66
    %v124 = vpack.c.bf16 %v69, %v68
    %v125 = vpack.c.bf16 %v71, %v70
    %v126 = vpack.c.bf16 %v73, %v72
    %v127 = vpack.c.bf16 %v75, %v74
    %v128 = vpack.c.bf16 %v77, %v76
    %v129 = vpack.c.bf16 %v79, %v78
    %v130 = vpack.c.bf16 %v81, %v80
    %v131 = vpack.c.bf16 %v83, %v82
    %v132 = vpack.c.bf16 %v85, %v84
    %v133 = vpack.c.bf16 %v87, %v86
    %v134 = vpack.c.bf16 %v89, %v88
    %v135 = vpack.c.bf16 %v91, %v90
    %v136 = vpack.c.bf16 %v93, %v92
    %v137 = vpack.c.bf16 %v95, %v94
    %v138 = vpack.c.bf16 %v97, %v96
    %v139 = vpack.c.bf16 %v99, %v98
    %v140 = vpack.c.bf16 %v101, %v100
    %v141 = vpack.c.bf16 %v103, %v102
    %v142 = vpack.c.bf16 %v105, %v104
    %v143 = vpack.c.bf16 %v107, %v106
    %v144 = vpack.c.bf16 %v109, %v108
    %v145 = vpack.c.bf16 %v111, %v110
    %v146 = vpack.c.bf16 %v113, %v112
    %v147 = vpack.c.bf16 %v115, %v114
    %v148 = vld [vmem:[%s3] sm:$0xf]
    %v149 = vld [vmem:[%s3 + $0x4] sm:$0xf]
    %v150 = vld [vmem:[%s4] sm:$0x1]
    %v152 = vlaneseq
    %v153 = vshrl.u32 %v152, 7
    %v154 = vsub.s32 0, %v153
    %v155 = vrot.slane %v150, %v154
    %v159 = vunpack.c.l.b16 %v148
    %v160 = vunpack.c.l.b16 %v149
    %v161 = vpack.c.b16 %v160, %v159
    %vm163 = vcmask 130048
    %v165 = vsel %vm163, %v116, 0
    %v168 = vsel %vm163, %v117, 0
    %v171 = vsel %vm163, %v118, 0
    %v174 = vsel %vm163, %v119, 0
    %v177 = vsel %vm163, %v120, 0
    %v180 = vsel %vm163, %v121, 0
    %v183 = vsel %vm163, %v122, 0
    %v186 = vsel %vm163, %v123, 0
    %v189 = vsel %vm163, %v124, 0
    %v192 = vsel %vm163, %v125, 0
    %v195 = vsel %vm163, %v126, 0
    %v198 = vsel %vm163, %v127, 0
    %v201 = vsel %vm163, %v128, 0
    %v204 = vsel %vm163, %v129, 0
    %v207 = vsel %vm163, %v130, 0
    %v210 = vsel %vm163, %v131, 0
    %v213 = vsel %vm163, %v132, 0
    %v216 = vsel %vm163, %v133, 0
    %v219 = vsel %vm163, %v134, 0
    %v222 = vsel %vm163, %v135, 0
    %v225 = vsel %vm163, %v136, 0
    %v228 = vsel %vm163, %v137, 0
    %v231 = vsel %vm163, %v138, 0
    %v234 = vsel %vm163, %v139, 0
    %v237 = vsel %vm163, %v140, 0
    %v240 = vsel %vm163, %v141, 0
    %v243 = vsel %vm163, %v142, 0
    %v246 = vsel %vm163, %v143, 0
    %v249 = vsel %vm163, %v144, 0
    %v252 = vsel %vm163, %v145, 0
    %v255 = vsel %vm163, %v146, 0
    %v258 = vsel %vm163, %v147, 0
    %260 = vmatprep.subr.bf16.mxu0 0
    %261 = vmatpush1.bf16.msra.mxu0 0
    %262 = vmatprep.subr.bf16.mxu0 0
    %263 = vmatpush1.bf16.msra.mxu0 0
    %264 = vmatprep.subr.bf16.mxu0 0
    %265 = vmatpush1.bf16.msra.mxu0 0
    %266 = vmatprep.subr.bf16.mxu0 0
    %267 = vmatpush1.bf16.msra.mxu0 0
    %268 = vmatprep.subr.bf16.mxu0 0
    %269 = vmatpush1.bf16.msra.mxu0 0
    %270 = vmatprep.subr.bf16.mxu0 0
    %271 = vmatpush1.bf16.msra.mxu0 0
    %272 = vmatprep.subr.bf16.mxu0 0
    %273 = vmatpush1.bf16.msra.mxu0 0
    %274 = vmatprep.subr.bf16.mxu0 0
    %275 = vmatpush1.bf16.msra.mxu0 %v161
    %276 = vmatprep.subr.bf16.mxu0 0
    %277 = vmatpush2.bf16.msra.mxu0 0
    %278 = vmatprep.subr.bf16.mxu0 0
    %279 = vmatpush2.bf16.msra.mxu0 0
    %280 = vmatprep.subr.bf16.mxu0 0
    %281 = vmatpush2.bf16.msra.mxu0 0
    %282 = vmatprep.subr.bf16.mxu0 0
    %283 = vmatpush2.bf16.msra.mxu0 0
    %284 = vmatprep.subr.bf16.mxu0 0
    %285 = vmatpush2.bf16.msra.mxu0 0
    %286 = vmatprep.subr.bf16.mxu0 0
    %287 = vmatpush2.bf16.msra.mxu0 0
    %288 = vmatprep.subr.bf16.mxu0 0
    %289 = vmatpush2.bf16.msra.mxu0 0
    %290 = vmatprep.subr.bf16.mxu0 0
    %291 = vmatpush2.bf16.msra.mxu0 0
    %292 = vmatprep.mubr.bf16.mxu0 0
    %293 = vmatmul.mubr.bf16.gmra.mxu0 %v165
    %v294 = vpop.f32.mrf.mxu0
    %v295 = vadd.f32 %v155, %v294
    %v296 = vpop.f32.mrf.mxu0
    %v297 = vpop.f32.mrf.mxu0
    %v298 = vadd.f32 %v155, %v297
    %v299 = vpop.f32.mrf.mxu0
    %300 = vmatprep.mubr.bf16.mxu0 0
    %301 = vmatmul.mubr.bf16.gmra.mxu0 %v168
    %v302 = vpop.f32.mrf.mxu0
    %v303 = vadd.f32 %v155, %v302
    %v304 = vpop.f32.mrf.mxu0
    %v305 = vpop.f32.mrf.mxu0
    %v306 = vadd.f32 %v155, %v305
    %v307 = vpop.f32.mrf.mxu0
    %308 = vmatprep.mubr.bf16.mxu0 0
    %309 = vmatmul.mubr.bf16.gmra.mxu0 %v171
    %v310 = vpop.f32.mrf.mxu0
    %v311 = vadd.f32 %v155, %v310
    %v312 = vpop.f32.mrf.mxu0
    %v313 = vpop.f32.mrf.mxu0
    %v314 = vadd.f32 %v155, %v313
    %v315 = vpop.f32.mrf.mxu0
    %316 = vmatprep.mubr.bf16.mxu0 0
    %317 = vmatmul.mubr.bf16.gmra.mxu0 %v174
    %v318 = vpop.f32.mrf.mxu0
    %v319 = vadd.f32 %v155, %v318
    %v320 = vpop.f32.mrf.mxu0
    %v321 = vpop.f32.mrf.mxu0
    %v322 = vadd.f32 %v155, %v321
    %v323 = vpop.f32.mrf.mxu0
    %324 = vmatprep.mubr.bf16.mxu0 0
    %325 = vmatmul.mubr.bf16.gmra.mxu0 %v177
    %v326 = vpop.f32.mrf.mxu0
    %v327 = vadd.f32 %v155, %v326
    %v328 = vpop.f32.mrf.mxu0
    %v329 = vpop.f32.mrf.mxu0
    %v330 = vadd.f32 %v155, %v329
    %v331 = vpop.f32.mrf.mxu0
    %332 = vmatprep.mubr.bf16.mxu0 0
    %333 = vmatmul.mubr.bf16.gmra.mxu0 %v180
    %v334 = vpop.f32.mrf.mxu0
    %v335 = vadd.f32 %v155, %v334
    %v336 = vpop.f32.mrf.mxu0
    %v337 = vpop.f32.mrf.mxu0
    %v338 = vadd.f32 %v155, %v337
    %v339 = vpop.f32.mrf.mxu0
    %340 = vmatprep.mubr.bf16.mxu0 0
    %341 = vmatmul.mubr.bf16.gmra.mxu0 %v183
    %v342 = vpop.f32.mrf.mxu0
    %v343 = vadd.f32 %v155, %v342
    %v344 = vpop.f32.mrf.mxu0
    %v345 = vpop.f32.mrf.mxu0
    %v346 = vadd.f32 %v155, %v345
    %v347 = vpop.f32.mrf.mxu0
    %348 = vmatprep.mubr.bf16.mxu0 0
    %349 = vmatmul.mubr.bf16.gmra.mxu0 %v186
    %v350 = vpop.f32.mrf.mxu0
    %v351 = vadd.f32 %v155, %v350
    %v352 = vpop.f32.mrf.mxu0
    %v353 = vpop.f32.mrf.mxu0
    %v354 = vadd.f32 %v155, %v353
    %v355 = vpop.f32.mrf.mxu0
    %356 = vmatprep.mubr.bf16.mxu0 0
    %357 = vmatmul.mubr.bf16.gmra.mxu0 %v189
    %v358 = vpop.f32.mrf.mxu0
    %v359 = vadd.f32 %v155, %v358
    %v360 = vpop.f32.mrf.mxu0
    %v361 = vpop.f32.mrf.mxu0
    %v362 = vadd.f32 %v155, %v361
    %v363 = vpop.f32.mrf.mxu0
    %364 = vmatprep.mubr.bf16.mxu0 0
    %365 = vmatmul.mubr.bf16.gmra.mxu0 %v192
    %v366 = vpop.f32.mrf.mxu0
    %v367 = vadd.f32 %v155, %v366
    %v368 = vpop.f32.mrf.mxu0
    %v369 = vpop.f32.mrf.mxu0
    %v370 = vadd.f32 %v155, %v369
    %v371 = vpop.f32.mrf.mxu0
    %372 = vmatprep.mubr.bf16.mxu0 0
    %373 = vmatmul.mubr.bf16.gmra.mxu0 %v195
    %v374 = vpop.f32.mrf.mxu0
    %v375 = vadd.f32 %v155, %v374
    %v376 = vpop.f32.mrf.mxu0
    %v377 = vpop.f32.mrf.mxu0
    %v378 = vadd.f32 %v155, %v377
    %v379 = vpop.f32.mrf.mxu0
    %380 = vmatprep.mubr.bf16.mxu0 0
    %381 = vmatmul.mubr.bf16.gmra.mxu0 %v198
    %v382 = vpop.f32.mrf.mxu0
    %v383 = vadd.f32 %v155, %v382
    %v384 = vpop.f32.mrf.mxu0
    %v385 = vpop.f32.mrf.mxu0
    %v386 = vadd.f32 %v155, %v385
    %v387 = vpop.f32.mrf.mxu0
    %388 = vmatprep.mubr.bf16.mxu0 0
    %389 = vmatmul.mubr.bf16.gmra.mxu0 %v201
    %v390 = vpop.f32.mrf.mxu0
    %v391 = vadd.f32 %v155, %v390
    %v392 = vpop.f32.mrf.mxu0
    %v393 = vpop.f32.mrf.mxu0
    %v394 = vadd.f32 %v155, %v393
    %v395 = vpop.f32.mrf.mxu0
    %396 = vmatprep.mubr.bf16.mxu0 0
    %397 = vmatmul.mubr.bf16.gmra.mxu0 %v204
    %v398 = vpop.f32.mrf.mxu0
    %v399 = vadd.f32 %v155, %v398
    %v400 = vpop.f32.mrf.mxu0
    %v401 = vpop.f32.mrf.mxu0
    %v402 = vadd.f32 %v155, %v401
    %v403 = vpop.f32.mrf.mxu0
    %404 = vmatprep.mubr.bf16.mxu0 0
    %405 = vmatmul.mubr.bf16.gmra.mxu0 %v207
    %v406 = vpop.f32.mrf.mxu0
    %v407 = vadd.f32 %v155, %v406
    %v408 = vpop.f32.mrf.mxu0
    %v409 = vpop.f32.mrf.mxu0
    %v410 = vadd.f32 %v155, %v409
    %v411 = vpop.f32.mrf.mxu0
    %412 = vmatprep.mubr.bf16.mxu0 0
    %413 = vmatmul.mubr.bf16.gmra.mxu0 %v210
    %v414 = vpop.f32.mrf.mxu0
    %v415 = vadd.f32 %v155, %v414
    %v416 = vpop.f32.mrf.mxu0
    %v417 = vpop.f32.mrf.mxu0
    %v418 = vadd.f32 %v155, %v417
    %v419 = vpop.f32.mrf.mxu0
    %420 = vmatprep.mubr.bf16.mxu0 0
    %421 = vmatmul.mubr.bf16.gmra.mxu0 %v213
    %v422 = vpop.f32.mrf.mxu0
    %v423 = vadd.f32 %v155, %v422
    %v424 = vpop.f32.mrf.mxu0
    %v425 = vpop.f32.mrf.mxu0
    %v426 = vadd.f32 %v155, %v425
    %v427 = vpop.f32.mrf.mxu0
    %428 = vmatprep.mubr.bf16.mxu0 0
    %429 = vmatmul.mubr.bf16.gmra.mxu0 %v216
    %v430 = vpop.f32.mrf.mxu0
    %v431 = vadd.f32 %v155, %v430
    %v432 = vpop.f32.mrf.mxu0
    %v433 = vpop.f32.mrf.mxu0
    %v434 = vadd.f32 %v155, %v433
    %v435 = vpop.f32.mrf.mxu0
    %436 = vmatprep.mubr.bf16.mxu0 0
    %437 = vmatmul.mubr.bf16.gmra.mxu0 %v219
    %v438 = vpop.f32.mrf.mxu0
    %v439 = vadd.f32 %v155, %v438
    %v440 = vpop.f32.mrf.mxu0
    %v441 = vpop.f32.mrf.mxu0
    %v442 = vadd.f32 %v155, %v441
    %v443 = vpop.f32.mrf.mxu0
    %444 = vmatprep.mubr.bf16.mxu0 0
    %445 = vmatmul.mubr.bf16.gmra.mxu0 %v222
    %v446 = vpop.f32.mrf.mxu0
    %v447 = vadd.f32 %v155, %v446
    %v448 = vpop.f32.mrf.mxu0
    %v449 = vpop.f32.mrf.mxu0
    %v450 = vadd.f32 %v155, %v449
    %v451 = vpop.f32.mrf.mxu0
    %452 = vmatprep.mubr.bf16.mxu0 0
    %453 = vmatmul.mubr.bf16.gmra.mxu0 %v225
    %v454 = vpop.f32.mrf.mxu0
    %v455 = vadd.f32 %v155, %v454
    %v456 = vpop.f32.mrf.mxu0
    %v457 = vpop.f32.mrf.mxu0
    %v458 = vadd.f32 %v155, %v457
    %v459 = vpop.f32.mrf.mxu0
    %460 = vmatprep.mubr.bf16.mxu0 0
    %461 = vmatmul.mubr.bf16.gmra.mxu0 %v228
    %v462 = vpop.f32.mrf.mxu0
    %v463 = vadd.f32 %v155, %v462
    %v464 = vpop.f32.mrf.mxu0
    %v465 = vpop.f32.mrf.mxu0
    %v466 = vadd.f32 %v155, %v465
    %v467 = vpop.f32.mrf.mxu0
    %468 = vmatprep.mubr.bf16.mxu0 0
    %469 = vmatmul.mubr.bf16.gmra.mxu0 %v231
    %v470 = vpop.f32.mrf.mxu0
    %v471 = vadd.f32 %v155, %v470
    %v472 = vpop.f32.mrf.mxu0
    %v473 = vpop.f32.mrf.mxu0
    %v474 = vadd.f32 %v155, %v473
    %v475 = vpop.f32.mrf.mxu0
    %476 = vmatprep.mubr.bf16.mxu0 0
    %477 = vmatmul.mubr.bf16.gmra.mxu0 %v234
    %v478 = vpop.f32.mrf.mxu0
    %v479 = vadd.f32 %v155, %v478
    %v480 = vpop.f32.mrf.mxu0
    %v481 = vpop.f32.mrf.mxu0
    %v482 = vadd.f32 %v155, %v481
    %v483 = vpop.f32.mrf.mxu0
    %484 = vmatprep.mubr.bf16.mxu0 0
    %485 = vmatmul.mubr.bf16.gmra.mxu0 %v237
    %v486 = vpop.f32.mrf.mxu0
    %v487 = vadd.f32 %v155, %v486
    %v488 = vpop.f32.mrf.mxu0
    %v489 = vpop.f32.mrf.mxu0
    %v490 = vadd.f32 %v155, %v489
    %v491 = vpop.f32.mrf.mxu0
    %492 = vmatprep.mubr.bf16.mxu0 0
    %493 = vmatmul.mubr.bf16.gmra.mxu0 %v240
    %v494 = vpop.f32.mrf.mxu0
    %v495 = vadd.f32 %v155, %v494
    %v496 = vpop.f32.mrf.mxu0
    %v497 = vpop.f32.mrf.mxu0
    %v498 = vadd.f32 %v155, %v497
    %v499 = vpop.f32.mrf.mxu0
    %500 = vmatprep.mubr.bf16.mxu0 0
    %501 = vmatmul.mubr.bf16.gmra.mxu0 %v243
    %v502 = vpop.f32.mrf.mxu0
    %v503 = vadd.f32 %v155, %v502
    %v504 = vpop.f32.mrf.mxu0
    %v505 = vpop.f32.mrf.mxu0
    %v506 = vadd.f32 %v155, %v505
    %v507 = vpop.f32.mrf.mxu0
    %508 = vmatprep.mubr.bf16.mxu0 0
    %509 = vmatmul.mubr.bf16.gmra.mxu0 %v246
    %v510 = vpop.f32.mrf.mxu0
    %v511 = vadd.f32 %v155, %v510
    %v512 = vpop.f32.mrf.mxu0
    %v513 = vpop.f32.mrf.mxu0
    %v514 = vadd.f32 %v155, %v513
    %v515 = vpop.f32.mrf.mxu0
    %516 = vmatprep.mubr.bf16.mxu0 0
    %517 = vmatmul.mubr.bf16.gmra.mxu0 %v249
    %v518 = vpop.f32.mrf.mxu0
    %v519 = vadd.f32 %v155, %v518
    %v520 = vpop.f32.mrf.mxu0
    %v521 = vpop.f32.mrf.mxu0
    %v522 = vadd.f32 %v155, %v521
    %v523 = vpop.f32.mrf.mxu0
    %524 = vmatprep.mubr.bf16.mxu0 0
    %525 = vmatmul.mubr.bf16.gmra.mxu0 %v252
    %v526 = vpop.f32.mrf.mxu0
    %v527 = vadd.f32 %v155, %v526
    %v528 = vpop.f32.mrf.mxu0
    %v529 = vpop.f32.mrf.mxu0
    %v530 = vadd.f32 %v155, %v529
    %v531 = vpop.f32.mrf.mxu0
    %532 = vmatprep.mubr.bf16.mxu0 0
    %533 = vmatmul.mubr.bf16.gmra.mxu0 %v255
    %v534 = vpop.f32.mrf.mxu0
    %v535 = vadd.f32 %v155, %v534
    %v536 = vpop.f32.mrf.mxu0
    %v537 = vpop.f32.mrf.mxu0
    %v538 = vadd.f32 %v155, %v537
    %v539 = vpop.f32.mrf.mxu0
    %540 = vmatprep.mubr.bf16.mxu0 0
    %541 = vmatmul.mubr.bf16.gmra.mxu0 %v258
    %v542 = vpop.f32.mrf.mxu0
    %v543 = vadd.f32 %v155, %v542
    %v544 = vpop.f32.mrf.mxu0
    %v545 = vpop.f32.mrf.mxu0
    %v546 = vadd.f32 %v155, %v545
    %v547 = vpop.f32.mrf.mxu0
    %548 = vdwg.mxu0
    %v549 = vtanh.pop %v295
    %v550 = vtanh.pop %v298
    %v551 = vtanh.pop %v303
    %v552 = vtanh.pop %v306
    %v553 = vtanh.pop %v311
    %v554 = vtanh.pop %v314
    %v555 = vtanh.pop %v319
    %v556 = vtanh.pop %v322
    %v557 = vtanh.pop %v327
    %v558 = vtanh.pop %v330
    %v559 = vtanh.pop %v335
    %v560 = vtanh.pop %v338
    %v561 = vtanh.pop %v343
    %v562 = vtanh.pop %v346
    %v563 = vtanh.pop %v351
    %v564 = vtanh.pop %v354
    %v565 = vtanh.pop %v359
    %v566 = vtanh.pop %v362
    %v567 = vtanh.pop %v367
    %v568 = vtanh.pop %v370
    %v569 = vtanh.pop %v375
    %v570 = vtanh.pop %v378
    %v571 = vtanh.pop %v383
    %v572 = vtanh.pop %v386
    %v573 = vtanh.pop %v391
    %v574 = vtanh.pop %v394
    %v575 = vtanh.pop %v399
    %v576 = vtanh.pop %v402
    %v577 = vtanh.pop %v407
    %v578 = vtanh.pop %v410
    %v579 = vtanh.pop %v415
    %v580 = vtanh.pop %v418
    %v581 = vtanh.pop %v423
    %v582 = vtanh.pop %v426
    %v583 = vtanh.pop %v431
    %v584 = vtanh.pop %v434
    %v585 = vtanh.pop %v439
    %v586 = vtanh.pop %v442
    %v587 = vtanh.pop %v447
    %v588 = vtanh.pop %v450
    %v589 = vtanh.pop %v455
    %v590 = vtanh.pop %v458
    %v591 = vtanh.pop %v463
    %v592 = vtanh.pop %v466
    %v593 = vtanh.pop %v471
    %v594 = vtanh.pop %v474
    %v595 = vtanh.pop %v479
    %v596 = vtanh.pop %v482
    %v597 = vtanh.pop %v487
    %v598 = vtanh.pop %v490
    %v599 = vtanh.pop %v495
    %v600 = vtanh.pop %v498
    %v601 = vtanh.pop %v503
    %v602 = vtanh.pop %v506
    %v603 = vtanh.pop %v511
    %v604 = vtanh.pop %v514
    %v605 = vtanh.pop %v519
    %v606 = vtanh.pop %v522
    %v607 = vtanh.pop %v527
    %v608 = vtanh.pop %v530
    %v609 = vtanh.pop %v535
    %v610 = vtanh.pop %v538
    %v611 = vtanh.pop %v543
    %v612 = vtanh.pop %v546
    %v613 = vpack.c.bf16 %v550, %v549
    %v614 = vpack.c.bf16 %v552, %v551
    %v615 = vpack.c.bf16 %v554, %v553
    %v616 = vpack.c.bf16 %v556, %v555
    %v617 = vpack.c.bf16 %v558, %v557
    %v618 = vpack.c.bf16 %v560, %v559
    %v619 = vpack.c.bf16 %v562, %v561
    %v620 = vpack.c.bf16 %v564, %v563
    %v621 = vpack.c.bf16 %v566, %v565
    %v622 = vpack.c.bf16 %v568, %v567
    %v623 = vpack.c.bf16 %v570, %v569
    %v624 = vpack.c.bf16 %v572, %v571
    %v625 = vpack.c.bf16 %v574, %v573
    %v626 = vpack.c.bf16 %v576, %v575
    %v627 = vpack.c.bf16 %v578, %v577
    %v628 = vpack.c.bf16 %v580, %v579
    %v629 = vpack.c.bf16 %v582, %v581
    %v630 = vpack.c.bf16 %v584, %v583
    %v631 = vpack.c.bf16 %v586, %v585
    %v632 = vpack.c.bf16 %v588, %v587
    %v633 = vpack.c.bf16 %v590, %v589
    %v634 = vpack.c.bf16 %v592, %v591
    %v635 = vpack.c.bf16 %v594, %v593
    %v636 = vpack.c.bf16 %v596, %v595
    %v637 = vpack.c.bf16 %v598, %v597
    %v638 = vpack.c.bf16 %v600, %v599
    %v639 = vpack.c.bf16 %v602, %v601
    %v640 = vpack.c.bf16 %v604, %v603
    %v641 = vpack.c.bf16 %v606, %v605
    %v642 = vpack.c.bf16 %v608, %v607
    %v643 = vpack.c.bf16 %v610, %v609
    %v644 = vpack.c.bf16 %v612, %v611
    %v645 = vld [vmem:[%s5] sm:$0xf]
    %v646 = vld [vmem:[%s5 + $0x4] sm:$0xf]
    %v647 = vld [vmem:[%s5 + $0x8] sm:$0xf]
    %v648 = vld [vmem:[%s5 + $0xc] sm:$0xf]
    %v649 = vld [vmem:[%s5 + $0x10] sm:$0xf]
    %v650 = vld [vmem:[%s5 + $0x14] sm:$0xf]
    %v651 = vld [vmem:[%s5 + $0x18] sm:$0xf]
    %v652 = vld [vmem:[%s5 + $0x1c] sm:$0xf]
    %v653 = vld [vmem:[%s5 + $0x20] sm:$0xf]
    %v654 = vld [vmem:[%s5 + $0x24] sm:$0xf]
    %v655 = vld [vmem:[%s5 + $0x28] sm:$0xf]
    %v656 = vld [vmem:[%s5 + $0x2c] sm:$0xf]
    %v657 = vld [vmem:[%s5 + $0x30] sm:$0xf]
    %v658 = vld [vmem:[%s5 + $0x34] sm:$0xf]
    %v659 = vld [vmem:[%s5 + $0x38] sm:$0xf]
    %v660 = vld [vmem:[%s5 + $0x3c] sm:$0xf]
    %v661 = vld [vmem:[%s6] sm:$0x1]
    %v663 = vlaneseq
    %v664 = vshrl.u32 %v663, 7
    %v665 = vsub.s32 0, %v664
    %v666 = vrot.slane %v661, %v665
    %v684 = vunpack.c.l.b16 %v645
    %v685 = vunpack.c.l.b16 %v646
    %v686 = vunpack.c.l.b16 %v647
    %v687 = vunpack.c.l.b16 %v648
    %v688 = vunpack.c.l.b16 %v649
    %v689 = vunpack.c.l.b16 %v650
    %v690 = vunpack.c.l.b16 %v651
    %v691 = vunpack.c.l.b16 %v652
    %v692 = vunpack.c.l.b16 %v653
    %v693 = vunpack.c.l.b16 %v654
    %v694 = vunpack.c.l.b16 %v655
    %v695 = vunpack.c.l.b16 %v656
    %v696 = vunpack.c.l.b16 %v657
    %v697 = vunpack.c.l.b16 %v658
    %v698 = vunpack.c.l.b16 %v659
    %v699 = vunpack.c.l.b16 %v660
    %v700 = vpack.c.b16 %v685, %v684
    %v701 = vpack.c.b16 %v687, %v686
    %v702 = vpack.c.b16 %v689, %v688
    %v703 = vpack.c.b16 %v691, %v690
    %v704 = vpack.c.b16 %v693, %v692
    %v705 = vpack.c.b16 %v695, %v694
    %v706 = vpack.c.b16 %v697, %v696
    %v707 = vpack.c.b16 %v699, %v698
    %716 = vmatprep.subr.bf16.mxu0 0
    %717 = vmatpush1.bf16.msra.mxu0 %v707
    %718 = vmatprep.subr.bf16.mxu0 0
    %719 = vmatpush1.bf16.msra.mxu0 %v706
    %720 = vmatprep.subr.bf16.mxu0 0
    %721 = vmatpush1.bf16.msra.mxu0 %v705
    %722 = vmatprep.subr.bf16.mxu0 0
    %723 = vmatpush1.bf16.msra.mxu0 %v704
    %724 = vmatprep.subr.bf16.mxu0 0
    %725 = vmatpush1.bf16.msra.mxu0 %v703
    %726 = vmatprep.subr.bf16.mxu0 0
    %727 = vmatpush1.bf16.msra.mxu0 %v702
    %728 = vmatprep.subr.bf16.mxu0 0
    %729 = vmatpush1.bf16.msra.mxu0 %v701
    %730 = vmatprep.subr.bf16.mxu0 0
    %731 = vmatpush1.bf16.msra.mxu0 %v700
    %732 = vmatprep.subr.bf16.mxu0 0
    %733 = vmatpush2.bf16.msra.mxu0 0
    %734 = vmatprep.subr.bf16.mxu0 0
    %735 = vmatpush2.bf16.msra.mxu0 0
    %736 = vmatprep.subr.bf16.mxu0 0
    %737 = vmatpush2.bf16.msra.mxu0 0
    %738 = vmatprep.subr.bf16.mxu0 0
    %739 = vmatpush2.bf16.msra.mxu0 0
    %740 = vmatprep.subr.bf16.mxu0 0
    %741 = vmatpush2.bf16.msra.mxu0 0
    %742 = vmatprep.subr.bf16.mxu0 0
    %743 = vmatpush2.bf16.msra.mxu0 0
    %744 = vmatprep.subr.bf16.mxu0 0
    %745 = vmatpush2.bf16.msra.mxu0 0
    %746 = vmatprep.subr.bf16.mxu0 0
    %747 = vmatpush2.bf16.msra.mxu0 0
    %748 = vmatprep.mubr.bf16.mxu0 0
    %749 = vmatmul.mubr.bf16.gmra.mxu0 %v613
    %v750 = vpop.f32.mrf.mxu0
    %v751 = vadd.f32 %v666, %v750
    %v752 = vpop.f32.mrf.mxu0
    %v753 = vpop.f32.mrf.mxu0
    %v754 = vadd.f32 %v666, %v753
    %v755 = vpop.f32.mrf.mxu0
    %756 = vmatprep.mubr.bf16.mxu0 0
    %757 = vmatmul.mubr.bf16.gmra.mxu0 %v614
    %v758 = vpop.f32.mrf.mxu0
    %v759 = vadd.f32 %v666, %v758
    %v760 = vpop.f32.mrf.mxu0
    %v761 = vpop.f32.mrf.mxu0
    %v762 = vadd.f32 %v666, %v761
    %v763 = vpop.f32.mrf.mxu0
    %764 = vmatprep.mubr.bf16.mxu0 0
    %765 = vmatmul.mubr.bf16.gmra.mxu0 %v615
    %v766 = vpop.f32.mrf.mxu0
    %v767 = vadd.f32 %v666, %v766
    %v768 = vpop.f32.mrf.mxu0
    %v769 = vpop.f32.mrf.mxu0
    %v770 = vadd.f32 %v666, %v769
    %v771 = vpop.f32.mrf.mxu0
    %772 = vmatprep.mubr.bf16.mxu0 0
    %773 = vmatmul.mubr.bf16.gmra.mxu0 %v616
    %v774 = vpop.f32.mrf.mxu0
    %v775 = vadd.f32 %v666, %v774
    %v776 = vpop.f32.mrf.mxu0
    %v777 = vpop.f32.mrf.mxu0
    %v778 = vadd.f32 %v666, %v777
    %v779 = vpop.f32.mrf.mxu0
    %780 = vmatprep.mubr.bf16.mxu0 0
    %781 = vmatmul.mubr.bf16.gmra.mxu0 %v617
    %v782 = vpop.f32.mrf.mxu0
    %v783 = vadd.f32 %v666, %v782
    %v784 = vpop.f32.mrf.mxu0
    %v785 = vpop.f32.mrf.mxu0
    %v786 = vadd.f32 %v666, %v785
    %v787 = vpop.f32.mrf.mxu0
    %788 = vmatprep.mubr.bf16.mxu0 0
    %789 = vmatmul.mubr.bf16.gmra.mxu0 %v618
    %v790 = vpop.f32.mrf.mxu0
    %v791 = vadd.f32 %v666, %v790
    %v792 = vpop.f32.mrf.mxu0
    %v793 = vpop.f32.mrf.mxu0
    %v794 = vadd.f32 %v666, %v793
    %v795 = vpop.f32.mrf.mxu0
    %796 = vmatprep.mubr.bf16.mxu0 0
    %797 = vmatmul.mubr.bf16.gmra.mxu0 %v619
    %v798 = vpop.f32.mrf.mxu0
    %v799 = vadd.f32 %v666, %v798
    %v800 = vpop.f32.mrf.mxu0
    %v801 = vpop.f32.mrf.mxu0
    %v802 = vadd.f32 %v666, %v801
    %v803 = vpop.f32.mrf.mxu0
    %804 = vmatprep.mubr.bf16.mxu0 0
    %805 = vmatmul.mubr.bf16.gmra.mxu0 %v620
    %v806 = vpop.f32.mrf.mxu0
    %v807 = vadd.f32 %v666, %v806
    %v808 = vpop.f32.mrf.mxu0
    %v809 = vpop.f32.mrf.mxu0
    %v810 = vadd.f32 %v666, %v809
    %v811 = vpop.f32.mrf.mxu0
    %812 = vmatprep.mubr.bf16.mxu0 0
    %813 = vmatmul.mubr.bf16.gmra.mxu0 %v621
    %v814 = vpop.f32.mrf.mxu0
    %v815 = vadd.f32 %v666, %v814
    %v816 = vpop.f32.mrf.mxu0
    %v817 = vpop.f32.mrf.mxu0
    %v818 = vadd.f32 %v666, %v817
    %v819 = vpop.f32.mrf.mxu0
    %820 = vmatprep.mubr.bf16.mxu0 0
    %821 = vmatmul.mubr.bf16.gmra.mxu0 %v622
    %v822 = vpop.f32.mrf.mxu0
    %v823 = vadd.f32 %v666, %v822
    %v824 = vpop.f32.mrf.mxu0
    %v825 = vpop.f32.mrf.mxu0
    %v826 = vadd.f32 %v666, %v825
    %v827 = vpop.f32.mrf.mxu0
    %828 = vmatprep.mubr.bf16.mxu0 0
    %829 = vmatmul.mubr.bf16.gmra.mxu0 %v623
    %v830 = vpop.f32.mrf.mxu0
    %v831 = vadd.f32 %v666, %v830
    %v832 = vpop.f32.mrf.mxu0
    %v833 = vpop.f32.mrf.mxu0
    %v834 = vadd.f32 %v666, %v833
    %v835 = vpop.f32.mrf.mxu0
    %836 = vmatprep.mubr.bf16.mxu0 0
    %837 = vmatmul.mubr.bf16.gmra.mxu0 %v624
    %v838 = vpop.f32.mrf.mxu0
    %v839 = vadd.f32 %v666, %v838
    %v840 = vpop.f32.mrf.mxu0
    %v841 = vpop.f32.mrf.mxu0
    %v842 = vadd.f32 %v666, %v841
    %v843 = vpop.f32.mrf.mxu0
    %844 = vmatprep.mubr.bf16.mxu0 0
    %845 = vmatmul.mubr.bf16.gmra.mxu0 %v625
    %v846 = vpop.f32.mrf.mxu0
    %v847 = vadd.f32 %v666, %v846
    %v848 = vpop.f32.mrf.mxu0
    %v849 = vpop.f32.mrf.mxu0
    %v850 = vadd.f32 %v666, %v849
    %v851 = vpop.f32.mrf.mxu0
    %852 = vmatprep.mubr.bf16.mxu0 0
    %853 = vmatmul.mubr.bf16.gmra.mxu0 %v626
    %v854 = vpop.f32.mrf.mxu0
    %v855 = vadd.f32 %v666, %v854
    %v856 = vpop.f32.mrf.mxu0
    %v857 = vpop.f32.mrf.mxu0
    %v858 = vadd.f32 %v666, %v857
    %v859 = vpop.f32.mrf.mxu0
    %860 = vmatprep.mubr.bf16.mxu0 0
    %861 = vmatmul.mubr.bf16.gmra.mxu0 %v627
    %v862 = vpop.f32.mrf.mxu0
    %v863 = vadd.f32 %v666, %v862
    %v864 = vpop.f32.mrf.mxu0
    %v865 = vpop.f32.mrf.mxu0
    %v866 = vadd.f32 %v666, %v865
    %v867 = vpop.f32.mrf.mxu0
    %868 = vmatprep.mubr.bf16.mxu0 0
    %869 = vmatmul.mubr.bf16.gmra.mxu0 %v628
    %v870 = vpop.f32.mrf.mxu0
    %v871 = vadd.f32 %v666, %v870
    %v872 = vpop.f32.mrf.mxu0
    %v873 = vpop.f32.mrf.mxu0
    %v874 = vadd.f32 %v666, %v873
    %v875 = vpop.f32.mrf.mxu0
    %876 = vmatprep.mubr.bf16.mxu0 0
    %877 = vmatmul.mubr.bf16.gmra.mxu0 %v629
    %v878 = vpop.f32.mrf.mxu0
    %v879 = vadd.f32 %v666, %v878
    %v880 = vpop.f32.mrf.mxu0
    %v881 = vpop.f32.mrf.mxu0
    %v882 = vadd.f32 %v666, %v881
    %v883 = vpop.f32.mrf.mxu0
    %884 = vmatprep.mubr.bf16.mxu0 0
    %885 = vmatmul.mubr.bf16.gmra.mxu0 %v630
    %v886 = vpop.f32.mrf.mxu0
    %v887 = vadd.f32 %v666, %v886
    %v888 = vpop.f32.mrf.mxu0
    %v889 = vpop.f32.mrf.mxu0
    %v890 = vadd.f32 %v666, %v889
    %v891 = vpop.f32.mrf.mxu0
    %892 = vmatprep.mubr.bf16.mxu0 0
    %893 = vmatmul.mubr.bf16.gmra.mxu0 %v631
    %v894 = vpop.f32.mrf.mxu0
    %v895 = vadd.f32 %v666, %v894
    %v896 = vpop.f32.mrf.mxu0
    %v897 = vpop.f32.mrf.mxu0
    %v898 = vadd.f32 %v666, %v897
    %v899 = vpop.f32.mrf.mxu0
    %900 = vmatprep.mubr.bf16.mxu0 0
    %901 = vmatmul.mubr.bf16.gmra.mxu0 %v632
    %v902 = vpop.f32.mrf.mxu0
    %v903 = vadd.f32 %v666, %v902
    %v904 = vpop.f32.mrf.mxu0
    %v905 = vpop.f32.mrf.mxu0
    %v906 = vadd.f32 %v666, %v905
    %v907 = vpop.f32.mrf.mxu0
    %908 = vmatprep.mubr.bf16.mxu0 0
    %909 = vmatmul.mubr.bf16.gmra.mxu0 %v633
    %v910 = vpop.f32.mrf.mxu0
    %v911 = vadd.f32 %v666, %v910
    %v912 = vpop.f32.mrf.mxu0
    %v913 = vpop.f32.mrf.mxu0
    %v914 = vadd.f32 %v666, %v913
    %v915 = vpop.f32.mrf.mxu0
    %916 = vmatprep.mubr.bf16.mxu0 0
    %917 = vmatmul.mubr.bf16.gmra.mxu0 %v634
    %v918 = vpop.f32.mrf.mxu0
    %v919 = vadd.f32 %v666, %v918
    %v920 = vpop.f32.mrf.mxu0
    %v921 = vpop.f32.mrf.mxu0
    %v922 = vadd.f32 %v666, %v921
    %v923 = vpop.f32.mrf.mxu0
    %924 = vmatprep.mubr.bf16.mxu0 0
    %925 = vmatmul.mubr.bf16.gmra.mxu0 %v635
    %v926 = vpop.f32.mrf.mxu0
    %v927 = vadd.f32 %v666, %v926
    %v928 = vpop.f32.mrf.mxu0
    %v929 = vpop.f32.mrf.mxu0
    %v930 = vadd.f32 %v666, %v929
    %v931 = vpop.f32.mrf.mxu0
    %932 = vmatprep.mubr.bf16.mxu0 0
    %933 = vmatmul.mubr.bf16.gmra.mxu0 %v636
    %v934 = vpop.f32.mrf.mxu0
    %v935 = vadd.f32 %v666, %v934
    %v936 = vpop.f32.mrf.mxu0
    %v937 = vpop.f32.mrf.mxu0
    %v938 = vadd.f32 %v666, %v937
    %v939 = vpop.f32.mrf.mxu0
    %940 = vmatprep.mubr.bf16.mxu0 0
    %941 = vmatmul.mubr.bf16.gmra.mxu0 %v637
    %v942 = vpop.f32.mrf.mxu0
    %v943 = vadd.f32 %v666, %v942
    %v944 = vpop.f32.mrf.mxu0
    %v945 = vpop.f32.mrf.mxu0
    %v946 = vadd.f32 %v666, %v945
    %v947 = vpop.f32.mrf.mxu0
    %948 = vmatprep.mubr.bf16.mxu0 0
    %949 = vmatmul.mubr.bf16.gmra.mxu0 %v638
    %v950 = vpop.f32.mrf.mxu0
    %v951 = vadd.f32 %v666, %v950
    %v952 = vpop.f32.mrf.mxu0
    %v953 = vpop.f32.mrf.mxu0
    %v954 = vadd.f32 %v666, %v953
    %v955 = vpop.f32.mrf.mxu0
    %956 = vmatprep.mubr.bf16.mxu0 0
    %957 = vmatmul.mubr.bf16.gmra.mxu0 %v639
    %v958 = vpop.f32.mrf.mxu0
    %v959 = vadd.f32 %v666, %v958
    %v960 = vpop.f32.mrf.mxu0
    %v961 = vpop.f32.mrf.mxu0
    %v962 = vadd.f32 %v666, %v961
    %v963 = vpop.f32.mrf.mxu0
    %964 = vmatprep.mubr.bf16.mxu0 0
    %965 = vmatmul.mubr.bf16.gmra.mxu0 %v640
    %v966 = vpop.f32.mrf.mxu0
    %v967 = vadd.f32 %v666, %v966
    %v968 = vpop.f32.mrf.mxu0
    %v969 = vpop.f32.mrf.mxu0
    %v970 = vadd.f32 %v666, %v969
    %v971 = vpop.f32.mrf.mxu0
    %972 = vmatprep.mubr.bf16.mxu0 0
    %973 = vmatmul.mubr.bf16.gmra.mxu0 %v641
    %v974 = vpop.f32.mrf.mxu0
    %v975 = vadd.f32 %v666, %v974
    %v976 = vpop.f32.mrf.mxu0
    %v977 = vpop.f32.mrf.mxu0
    %v978 = vadd.f32 %v666, %v977
    %v979 = vpop.f32.mrf.mxu0
    %980 = vmatprep.mubr.bf16.mxu0 0
    %981 = vmatmul.mubr.bf16.gmra.mxu0 %v642
    %v982 = vpop.f32.mrf.mxu0
    %v983 = vadd.f32 %v666, %v982
    %v984 = vpop.f32.mrf.mxu0
    %v985 = vpop.f32.mrf.mxu0
    %v986 = vadd.f32 %v666, %v985
    %v987 = vpop.f32.mrf.mxu0
    %988 = vmatprep.mubr.bf16.mxu0 0
    %989 = vmatmul.mubr.bf16.gmra.mxu0 %v643
    %v990 = vpop.f32.mrf.mxu0
    %v991 = vadd.f32 %v666, %v990
    %v992 = vpop.f32.mrf.mxu0
    %v993 = vpop.f32.mrf.mxu0
    %v994 = vadd.f32 %v666, %v993
    %v995 = vpop.f32.mrf.mxu0
    %996 = vmatprep.mubr.bf16.mxu0 0
    %997 = vmatmul.mubr.bf16.gmra.mxu0 %v644
    %v998 = vpop.f32.mrf.mxu0
    %v999 = vadd.f32 %v666, %v998
    %v1000 = vpop.f32.mrf.mxu0
    %v1001 = vpop.f32.mrf.mxu0
    %v1002 = vadd.f32 %v666, %v1001
    %v1003 = vpop.f32.mrf.mxu0
    %1004 = vdwg.mxu0
    %v1005 = vtanh.pop %v751
    %v1006 = vtanh.pop %v754
    %v1007 = vtanh.pop %v759
    %v1008 = vtanh.pop %v762
    %v1009 = vtanh.pop %v767
    %v1010 = vtanh.pop %v770
    %v1011 = vtanh.pop %v775
    %v1012 = vtanh.pop %v778
    %v1013 = vtanh.pop %v783
    %v1014 = vtanh.pop %v786
    %v1015 = vtanh.pop %v791
    %v1016 = vtanh.pop %v794
    %v1017 = vtanh.pop %v799
    %v1018 = vtanh.pop %v802
    %v1019 = vtanh.pop %v807
    %v1020 = vtanh.pop %v810
    %v1021 = vtanh.pop %v815
    %v1022 = vtanh.pop %v818
    %v1023 = vtanh.pop %v823
    %v1024 = vtanh.pop %v826
    %v1025 = vtanh.pop %v831
    %v1026 = vtanh.pop %v834
    %v1027 = vtanh.pop %v839
    %v1028 = vtanh.pop %v842
    %v1029 = vtanh.pop %v847
    %v1030 = vtanh.pop %v850
    %v1031 = vtanh.pop %v855
    %v1032 = vtanh.pop %v858
    %v1033 = vtanh.pop %v863
    %v1034 = vtanh.pop %v866
    %v1035 = vtanh.pop %v871
    %v1036 = vtanh.pop %v874
    %v1037 = vtanh.pop %v879
    %v1038 = vtanh.pop %v882
    %v1039 = vtanh.pop %v887
    %v1040 = vtanh.pop %v890
    %v1041 = vtanh.pop %v895
    %v1042 = vtanh.pop %v898
    %v1043 = vtanh.pop %v903
    %v1044 = vtanh.pop %v906
    %v1045 = vtanh.pop %v911
    %v1046 = vtanh.pop %v914
    %v1047 = vtanh.pop %v919
    %v1048 = vtanh.pop %v922
    %v1049 = vtanh.pop %v927
    %v1050 = vtanh.pop %v930
    %v1051 = vtanh.pop %v935
    %v1052 = vtanh.pop %v938
    %v1053 = vtanh.pop %v943
    %v1054 = vtanh.pop %v946
    %v1055 = vtanh.pop %v951
    %v1056 = vtanh.pop %v954
    %v1057 = vtanh.pop %v959
    %v1058 = vtanh.pop %v962
    %v1059 = vtanh.pop %v967
    %v1060 = vtanh.pop %v970
    %v1061 = vtanh.pop %v975
    %v1062 = vtanh.pop %v978
    %v1063 = vtanh.pop %v983
    %v1064 = vtanh.pop %v986
    %v1065 = vtanh.pop %v991
    %v1066 = vtanh.pop %v994
    %v1067 = vtanh.pop %v999
    %v1068 = vtanh.pop %v1002
    %v1069 = vpack.c.bf16 %v1006, %v1005
    %v1070 = vpack.c.bf16 %v1008, %v1007
    %v1071 = vpack.c.bf16 %v1010, %v1009
    %v1072 = vpack.c.bf16 %v1012, %v1011
    %v1073 = vpack.c.bf16 %v1014, %v1013
    %v1074 = vpack.c.bf16 %v1016, %v1015
    %v1075 = vpack.c.bf16 %v1018, %v1017
    %v1076 = vpack.c.bf16 %v1020, %v1019
    %v1077 = vpack.c.bf16 %v1022, %v1021
    %v1078 = vpack.c.bf16 %v1024, %v1023
    %v1079 = vpack.c.bf16 %v1026, %v1025
    %v1080 = vpack.c.bf16 %v1028, %v1027
    %v1081 = vpack.c.bf16 %v1030, %v1029
    %v1082 = vpack.c.bf16 %v1032, %v1031
    %v1083 = vpack.c.bf16 %v1034, %v1033
    %v1084 = vpack.c.bf16 %v1036, %v1035
    %v1085 = vpack.c.bf16 %v1038, %v1037
    %v1086 = vpack.c.bf16 %v1040, %v1039
    %v1087 = vpack.c.bf16 %v1042, %v1041
    %v1088 = vpack.c.bf16 %v1044, %v1043
    %v1089 = vpack.c.bf16 %v1046, %v1045
    %v1090 = vpack.c.bf16 %v1048, %v1047
    %v1091 = vpack.c.bf16 %v1050, %v1049
    %v1092 = vpack.c.bf16 %v1052, %v1051
    %v1093 = vpack.c.bf16 %v1054, %v1053
    %v1094 = vpack.c.bf16 %v1056, %v1055
    %v1095 = vpack.c.bf16 %v1058, %v1057
    %v1096 = vpack.c.bf16 %v1060, %v1059
    %v1097 = vpack.c.bf16 %v1062, %v1061
    %v1098 = vpack.c.bf16 %v1064, %v1063
    %v1099 = vpack.c.bf16 %v1066, %v1065
    %v1100 = vpack.c.bf16 %v1068, %v1067
    %v1101 = vld [vmem:[%s7] sm:$0xf]
    %v1102 = vld [vmem:[%s7 + $0x4] sm:$0xf]
    %v1103 = vld [vmem:[%s7 + $0x8] sm:$0xf]
    %v1104 = vld [vmem:[%s7 + $0xc] sm:$0xf]
    %v1105 = vld [vmem:[%s7 + $0x10] sm:$0xf]
    %v1106 = vld [vmem:[%s7 + $0x14] sm:$0xf]
    %v1107 = vld [vmem:[%s7 + $0x18] sm:$0xf]
    %v1108 = vld [vmem:[%s7 + $0x1c] sm:$0xf]
    %v1109 = vld [vmem:[%s7 + $0x20] sm:$0xf]
    %v1110 = vld [vmem:[%s7 + $0x24] sm:$0xf]
    %v1111 = vld [vmem:[%s7 + $0x28] sm:$0xf]
    %v1112 = vld [vmem:[%s7 + $0x2c] sm:$0xf]
    %v1113 = vld [vmem:[%s7 + $0x30] sm:$0xf]
    %v1114 = vld [vmem:[%s7 + $0x34] sm:$0xf]
    %v1115 = vld [vmem:[%s7 + $0x38] sm:$0xf]
    %v1116 = vld [vmem:[%s7 + $0x3c] sm:$0xf]
    %v1117 = vld [vmem:[%s8] sm:$0x1]
    %v1119 = vlaneseq
    %v1120 = vshrl.u32 %v1119, 7
    %v1121 = vsub.s32 0, %v1120
    %v1122 = vrot.slane %v1117, %v1121
    %v1140 = vunpack.c.l.b16 %v1101
    %v1141 = vunpack.c.l.b16 %v1102
    %v1142 = vunpack.c.l.b16 %v1103
    %v1143 = vunpack.c.l.b16 %v1104
    %v1144 = vunpack.c.l.b16 %v1105
    %v1145 = vunpack.c.l.b16 %v1106
    %v1146 = vunpack.c.l.b16 %v1107
    %v1147 = vunpack.c.l.b16 %v1108
    %v1148 = vunpack.c.l.b16 %v1109
    %v1149 = vunpack.c.l.b16 %v1110
    %v1150 = vunpack.c.l.b16 %v1111
    %v1151 = vunpack.c.l.b16 %v1112
    %v1152 = vunpack.c.l.b16 %v1113
    %v1153 = vunpack.c.l.b16 %v1114
    %v1154 = vunpack.c.l.b16 %v1115
    %v1155 = vunpack.c.l.b16 %v1116
    %v1156 = vpack.c.b16 %v1141, %v1140
    %v1157 = vpack.c.b16 %v1143, %v1142
    %v1158 = vpack.c.b16 %v1145, %v1144
    %v1159 = vpack.c.b16 %v1147, %v1146
    %v1160 = vpack.c.b16 %v1149, %v1148
    %v1161 = vpack.c.b16 %v1151, %v1150
    %v1162 = vpack.c.b16 %v1153, %v1152
    %v1163 = vpack.c.b16 %v1155, %v1154
    %1172 = vmatprep.subr.bf16.mxu0 0
    %1173 = vmatpush1.bf16.msra.mxu0 %v1163
    %1174 = vmatprep.subr.bf16.mxu0 0
    %1175 = vmatpush1.bf16.msra.mxu0 %v1162
    %1176 = vmatprep.subr.bf16.mxu0 0
    %1177 = vmatpush1.bf16.msra.mxu0 %v1161
    %1178 = vmatprep.subr.bf16.mxu0 0
    %1179 = vmatpush1.bf16.msra.mxu0 %v1160
    %1180 = vmatprep.subr.bf16.mxu0 0
    %1181 = vmatpush1.bf16.msra.mxu0 %v1159
    %1182 = vmatprep.subr.bf16.mxu0 0
    %1183 = vmatpush1.bf16.msra.mxu0 %v1158
    %1184 = vmatprep.subr.bf16.mxu0 0
    %1185 = vmatpush1.bf16.msra.mxu0 %v1157
    %1186 = vmatprep.subr.bf16.mxu0 0
    %1187 = vmatpush1.bf16.msra.mxu0 %v1156
    %1188 = vmatprep.subr.bf16.mxu0 0
    %1189 = vmatpush2.bf16.msra.mxu0 0
    %1190 = vmatprep.subr.bf16.mxu0 0
    %1191 = vmatpush2.bf16.msra.mxu0 0
    %1192 = vmatprep.subr.bf16.mxu0 0
    %1193 = vmatpush2.bf16.msra.mxu0 0
    %1194 = vmatprep.subr.bf16.mxu0 0
    %1195 = vmatpush2.bf16.msra.mxu0 0
    %1196 = vmatprep.subr.bf16.mxu0 0
    %1197 = vmatpush2.bf16.msra.mxu0 0
    %1198 = vmatprep.subr.bf16.mxu0 0
    %1199 = vmatpush2.bf16.msra.mxu0 0
    %1200 = vmatprep.subr.bf16.mxu0 0
    %1201 = vmatpush2.bf16.msra.mxu0 0
    %1202 = vmatprep.subr.bf16.mxu0 0
    %1203 = vmatpush2.bf16.msra.mxu0 0
    %1204 = vmatprep.mubr.bf16.mxu0 0
    %1205 = vmatmul.mubr.bf16.gmra.mxu0 %v1069
    %v1206 = vpop.f32.mrf.mxu0
    %v1207 = vadd.f32 %v1122, %v1206
    %v1208 = vpop.f32.mrf.mxu0
    %v1209 = vpop.f32.mrf.mxu0
    %v1210 = vadd.f32 %v1122, %v1209
    %v1211 = vpop.f32.mrf.mxu0
    %1212 = vmatprep.mubr.bf16.mxu0 0
    %1213 = vmatmul.mubr.bf16.gmra.mxu0 %v1070
    %v1214 = vpop.f32.mrf.mxu0
    %v1215 = vadd.f32 %v1122, %v1214
    %v1216 = vpop.f32.mrf.mxu0
    %v1217 = vpop.f32.mrf.mxu0
    %v1218 = vadd.f32 %v1122, %v1217
    %v1219 = vpop.f32.mrf.mxu0
    %1220 = vmatprep.mubr.bf16.mxu0 0
    %1221 = vmatmul.mubr.bf16.gmra.mxu0 %v1071
    %v1222 = vpop.f32.mrf.mxu0
    %v1223 = vadd.f32 %v1122, %v1222
    %v1224 = vpop.f32.mrf.mxu0
    %v1225 = vpop.f32.mrf.mxu0
    %v1226 = vadd.f32 %v1122, %v1225
    %v1227 = vpop.f32.mrf.mxu0
    %1228 = vmatprep.mubr.bf16.mxu0 0
    %1229 = vmatmul.mubr.bf16.gmra.mxu0 %v1072
    %v1230 = vpop.f32.mrf.mxu0
    %v1231 = vadd.f32 %v1122, %v1230
    %v1232 = vpop.f32.mrf.mxu0
    %v1233 = vpop.f32.mrf.mxu0
    %v1234 = vadd.f32 %v1122, %v1233
    %v1235 = vpop.f32.mrf.mxu0
    %1236 = vmatprep.mubr.bf16.mxu0 0
    %1237 = vmatmul.mubr.bf16.gmra.mxu0 %v1073
    %v1238 = vpop.f32.mrf.mxu0
    %v1239 = vadd.f32 %v1122, %v1238
    %v1240 = vpop.f32.mrf.mxu0
    %v1241 = vpop.f32.mrf.mxu0
    %v1242 = vadd.f32 %v1122, %v1241
    %v1243 = vpop.f32.mrf.mxu0
    %1244 = vmatprep.mubr.bf16.mxu0 0
    %1245 = vmatmul.mubr.bf16.gmra.mxu0 %v1074
    %v1246 = vpop.f32.mrf.mxu0
    %v1247 = vadd.f32 %v1122, %v1246
    %v1248 = vpop.f32.mrf.mxu0
    %v1249 = vpop.f32.mrf.mxu0
    %v1250 = vadd.f32 %v1122, %v1249
    %v1251 = vpop.f32.mrf.mxu0
    %1252 = vmatprep.mubr.bf16.mxu0 0
    %1253 = vmatmul.mubr.bf16.gmra.mxu0 %v1075
    %v1254 = vpop.f32.mrf.mxu0
    %v1255 = vadd.f32 %v1122, %v1254
    %v1256 = vpop.f32.mrf.mxu0
    %v1257 = vpop.f32.mrf.mxu0
    %v1258 = vadd.f32 %v1122, %v1257
    %v1259 = vpop.f32.mrf.mxu0
    %1260 = vmatprep.mubr.bf16.mxu0 0
    %1261 = vmatmul.mubr.bf16.gmra.mxu0 %v1076
    %v1262 = vpop.f32.mrf.mxu0
    %v1263 = vadd.f32 %v1122, %v1262
    %v1264 = vpop.f32.mrf.mxu0
    %v1265 = vpop.f32.mrf.mxu0
    %v1266 = vadd.f32 %v1122, %v1265
    %v1267 = vpop.f32.mrf.mxu0
    %1268 = vmatprep.mubr.bf16.mxu0 0
    %1269 = vmatmul.mubr.bf16.gmra.mxu0 %v1077
    %v1270 = vpop.f32.mrf.mxu0
    %v1271 = vadd.f32 %v1122, %v1270
    %v1272 = vpop.f32.mrf.mxu0
    %v1273 = vpop.f32.mrf.mxu0
    %v1274 = vadd.f32 %v1122, %v1273
    %v1275 = vpop.f32.mrf.mxu0
    %1276 = vmatprep.mubr.bf16.mxu0 0
    %1277 = vmatmul.mubr.bf16.gmra.mxu0 %v1078
    %v1278 = vpop.f32.mrf.mxu0
    %v1279 = vadd.f32 %v1122, %v1278
    %v1280 = vpop.f32.mrf.mxu0
    %v1281 = vpop.f32.mrf.mxu0
    %v1282 = vadd.f32 %v1122, %v1281
    %v1283 = vpop.f32.mrf.mxu0
    %1284 = vmatprep.mubr.bf16.mxu0 0
    %1285 = vmatmul.mubr.bf16.gmra.mxu0 %v1079
    %v1286 = vpop.f32.mrf.mxu0
    %v1287 = vadd.f32 %v1122, %v1286
    %v1288 = vpop.f32.mrf.mxu0
    %v1289 = vpop.f32.mrf.mxu0
    %v1290 = vadd.f32 %v1122, %v1289
    %v1291 = vpop.f32.mrf.mxu0
    %1292 = vmatprep.mubr.bf16.mxu0 0
    %1293 = vmatmul.mubr.bf16.gmra.mxu0 %v1080
    %v1294 = vpop.f32.mrf.mxu0
    %v1295 = vadd.f32 %v1122, %v1294
    %v1296 = vpop.f32.mrf.mxu0
    %v1297 = vpop.f32.mrf.mxu0
    %v1298 = vadd.f32 %v1122, %v1297
    %v1299 = vpop.f32.mrf.mxu0
    %1300 = vmatprep.mubr.bf16.mxu0 0
    %1301 = vmatmul.mubr.bf16.gmra.mxu0 %v1081
    %v1302 = vpop.f32.mrf.mxu0
    %v1303 = vadd.f32 %v1122, %v1302
    %v1304 = vpop.f32.mrf.mxu0
    %v1305 = vpop.f32.mrf.mxu0
    %v1306 = vadd.f32 %v1122, %v1305
    %v1307 = vpop.f32.mrf.mxu0
    %1308 = vmatprep.mubr.bf16.mxu0 0
    %1309 = vmatmul.mubr.bf16.gmra.mxu0 %v1082
    %v1310 = vpop.f32.mrf.mxu0
    %v1311 = vadd.f32 %v1122, %v1310
    %v1312 = vpop.f32.mrf.mxu0
    %v1313 = vpop.f32.mrf.mxu0
    %v1314 = vadd.f32 %v1122, %v1313
    %v1315 = vpop.f32.mrf.mxu0
    %1316 = vmatprep.mubr.bf16.mxu0 0
    %1317 = vmatmul.mubr.bf16.gmra.mxu0 %v1083
    %v1318 = vpop.f32.mrf.mxu0
    %v1319 = vadd.f32 %v1122, %v1318
    %v1320 = vpop.f32.mrf.mxu0
    %v1321 = vpop.f32.mrf.mxu0
    %v1322 = vadd.f32 %v1122, %v1321
    %v1323 = vpop.f32.mrf.mxu0
    %1324 = vmatprep.mubr.bf16.mxu0 0
    %1325 = vmatmul.mubr.bf16.gmra.mxu0 %v1084
    %v1326 = vpop.f32.mrf.mxu0
    %v1327 = vadd.f32 %v1122, %v1326
    %v1328 = vpop.f32.mrf.mxu0
    %v1329 = vpop.f32.mrf.mxu0
    %v1330 = vadd.f32 %v1122, %v1329
    %v1331 = vpop.f32.mrf.mxu0
    %1332 = vmatprep.mubr.bf16.mxu0 0
    %1333 = vmatmul.mubr.bf16.gmra.mxu0 %v1085
    %v1334 = vpop.f32.mrf.mxu0
    %v1335 = vadd.f32 %v1122, %v1334
    %v1336 = vpop.f32.mrf.mxu0
    %v1337 = vpop.f32.mrf.mxu0
    %v1338 = vadd.f32 %v1122, %v1337
    %v1339 = vpop.f32.mrf.mxu0
    %1340 = vmatprep.mubr.bf16.mxu0 0
    %1341 = vmatmul.mubr.bf16.gmra.mxu0 %v1086
    %v1342 = vpop.f32.mrf.mxu0
    %v1343 = vadd.f32 %v1122, %v1342
    %v1344 = vpop.f32.mrf.mxu0
    %v1345 = vpop.f32.mrf.mxu0
    %v1346 = vadd.f32 %v1122, %v1345
    %v1347 = vpop.f32.mrf.mxu0
    %1348 = vmatprep.mubr.bf16.mxu0 0
    %1349 = vmatmul.mubr.bf16.gmra.mxu0 %v1087
    %v1350 = vpop.f32.mrf.mxu0
    %v1351 = vadd.f32 %v1122, %v1350
    %v1352 = vpop.f32.mrf.mxu0
    %v1353 = vpop.f32.mrf.mxu0
    %v1354 = vadd.f32 %v1122, %v1353
    %v1355 = vpop.f32.mrf.mxu0
    %1356 = vmatprep.mubr.bf16.mxu0 0
    %1357 = vmatmul.mubr.bf16.gmra.mxu0 %v1088
    %v1358 = vpop.f32.mrf.mxu0
    %v1359 = vadd.f32 %v1122, %v1358
    %v1360 = vpop.f32.mrf.mxu0
    %v1361 = vpop.f32.mrf.mxu0
    %v1362 = vadd.f32 %v1122, %v1361
    %v1363 = vpop.f32.mrf.mxu0
    %1364 = vmatprep.mubr.bf16.mxu0 0
    %1365 = vmatmul.mubr.bf16.gmra.mxu0 %v1089
    %v1366 = vpop.f32.mrf.mxu0
    %v1367 = vadd.f32 %v1122, %v1366
    %v1368 = vpop.f32.mrf.mxu0
    %v1369 = vpop.f32.mrf.mxu0
    %v1370 = vadd.f32 %v1122, %v1369
    %v1371 = vpop.f32.mrf.mxu0
    %1372 = vmatprep.mubr.bf16.mxu0 0
    %1373 = vmatmul.mubr.bf16.gmra.mxu0 %v1090
    %v1374 = vpop.f32.mrf.mxu0
    %v1375 = vadd.f32 %v1122, %v1374
    %v1376 = vpop.f32.mrf.mxu0
    %v1377 = vpop.f32.mrf.mxu0
    %v1378 = vadd.f32 %v1122, %v1377
    %v1379 = vpop.f32.mrf.mxu0
    %1380 = vmatprep.mubr.bf16.mxu0 0
    %1381 = vmatmul.mubr.bf16.gmra.mxu0 %v1091
    %v1382 = vpop.f32.mrf.mxu0
    %v1383 = vadd.f32 %v1122, %v1382
    %v1384 = vpop.f32.mrf.mxu0
    %v1385 = vpop.f32.mrf.mxu0
    %v1386 = vadd.f32 %v1122, %v1385
    %v1387 = vpop.f32.mrf.mxu0
    %1388 = vmatprep.mubr.bf16.mxu0 0
    %1389 = vmatmul.mubr.bf16.gmra.mxu0 %v1092
    %v1390 = vpop.f32.mrf.mxu0
    %v1391 = vadd.f32 %v1122, %v1390
    %v1392 = vpop.f32.mrf.mxu0
    %v1393 = vpop.f32.mrf.mxu0
    %v1394 = vadd.f32 %v1122, %v1393
    %v1395 = vpop.f32.mrf.mxu0
    %1396 = vmatprep.mubr.bf16.mxu0 0
    %1397 = vmatmul.mubr.bf16.gmra.mxu0 %v1093
    %v1398 = vpop.f32.mrf.mxu0
    %v1399 = vadd.f32 %v1122, %v1398
    %v1400 = vpop.f32.mrf.mxu0
    %v1401 = vpop.f32.mrf.mxu0
    %v1402 = vadd.f32 %v1122, %v1401
    %v1403 = vpop.f32.mrf.mxu0
    %1404 = vmatprep.mubr.bf16.mxu0 0
    %1405 = vmatmul.mubr.bf16.gmra.mxu0 %v1094
    %v1406 = vpop.f32.mrf.mxu0
    %v1407 = vadd.f32 %v1122, %v1406
    %v1408 = vpop.f32.mrf.mxu0
    %v1409 = vpop.f32.mrf.mxu0
    %v1410 = vadd.f32 %v1122, %v1409
    %v1411 = vpop.f32.mrf.mxu0
    %1412 = vmatprep.mubr.bf16.mxu0 0
    %1413 = vmatmul.mubr.bf16.gmra.mxu0 %v1095
    %v1414 = vpop.f32.mrf.mxu0
    %v1415 = vadd.f32 %v1122, %v1414
    %v1416 = vpop.f32.mrf.mxu0
    %v1417 = vpop.f32.mrf.mxu0
    %v1418 = vadd.f32 %v1122, %v1417
    %v1419 = vpop.f32.mrf.mxu0
    %1420 = vmatprep.mubr.bf16.mxu0 0
    %1421 = vmatmul.mubr.bf16.gmra.mxu0 %v1096
    %v1422 = vpop.f32.mrf.mxu0
    %v1423 = vadd.f32 %v1122, %v1422
    %v1424 = vpop.f32.mrf.mxu0
    %v1425 = vpop.f32.mrf.mxu0
    %v1426 = vadd.f32 %v1122, %v1425
    %v1427 = vpop.f32.mrf.mxu0
    %1428 = vmatprep.mubr.bf16.mxu0 0
    %1429 = vmatmul.mubr.bf16.gmra.mxu0 %v1097
    %v1430 = vpop.f32.mrf.mxu0
    %v1431 = vadd.f32 %v1122, %v1430
    %v1432 = vpop.f32.mrf.mxu0
    %v1433 = vpop.f32.mrf.mxu0
    %v1434 = vadd.f32 %v1122, %v1433
    %v1435 = vpop.f32.mrf.mxu0
    %1436 = vmatprep.mubr.bf16.mxu0 0
    %1437 = vmatmul.mubr.bf16.gmra.mxu0 %v1098
    %v1438 = vpop.f32.mrf.mxu0
    %v1439 = vadd.f32 %v1122, %v1438
    %v1440 = vpop.f32.mrf.mxu0
    %v1441 = vpop.f32.mrf.mxu0
    %v1442 = vadd.f32 %v1122, %v1441
    %v1443 = vpop.f32.mrf.mxu0
    %1444 = vmatprep.mubr.bf16.mxu0 0
    %1445 = vmatmul.mubr.bf16.gmra.mxu0 %v1099
    %v1446 = vpop.f32.mrf.mxu0
    %v1447 = vadd.f32 %v1122, %v1446
    %v1448 = vpop.f32.mrf.mxu0
    %v1449 = vpop.f32.mrf.mxu0
    %v1450 = vadd.f32 %v1122, %v1449
    %v1451 = vpop.f32.mrf.mxu0
    %1452 = vmatprep.mubr.bf16.mxu0 0
    %1453 = vmatmul.mubr.bf16.gmra.mxu0 %v1100
    %v1454 = vpop.f32.mrf.mxu0
    %v1455 = vadd.f32 %v1122, %v1454
    %v1456 = vpop.f32.mrf.mxu0
    %v1457 = vpop.f32.mrf.mxu0
    %v1458 = vadd.f32 %v1122, %v1457
    %v1459 = vpop.f32.mrf.mxu0
    %1460 = vdwg.mxu0
    %v1461 = vld [vmem:[%s1] sm:$0xff]
    %v1462 = vld [vmem:[%s1 + $0x8] sm:$0xff]
    %v1463 = vld [vmem:[%s1 + $0x10] sm:$0xff]
    %v1464 = vld [vmem:[%s1 + $0x18] sm:$0xff]
    %v1465 = vld [vmem:[%s1 + $0x20] sm:$0xff]
    %v1466 = vld [vmem:[%s1 + $0x28] sm:$0xff]
    %v1467 = vld [vmem:[%s1 + $0x30] sm:$0xff]
    %v1468 = vld [vmem:[%s1 + $0x38] sm:$0xff]
    %v1469 = vld [vmem:[%s1 + $0x40] sm:$0xff]
    %v1470 = vld [vmem:[%s1 + $0x48] sm:$0xff]
    %v1471 = vld [vmem:[%s1 + $0x50] sm:$0xff]
    %v1472 = vld [vmem:[%s1 + $0x58] sm:$0xff]
    %v1473 = vld [vmem:[%s1 + $0x60] sm:$0xff]
    %v1474 = vld [vmem:[%s1 + $0x68] sm:$0xff]
    %v1475 = vld [vmem:[%s1 + $0x70] sm:$0xff]
    %v1476 = vld [vmem:[%s1 + $0x78] sm:$0xff]
    %v1477 = vld [vmem:[%s1 + $0x80] sm:$0xff]
    %v1478 = vld [vmem:[%s1 + $0x88] sm:$0xff]
    %v1479 = vld [vmem:[%s1 + $0x90] sm:$0xff]
    %v1480 = vld [vmem:[%s1 + $0x98] sm:$0xff]
    %v1481 = vld [vmem:[%s1 + $0xa0] sm:$0xff]
    %v1482 = vld [vmem:[%s1 + $0xa8] sm:$0xff]
    %v1483 = vld [vmem:[%s1 + $0xb0] sm:$0xff]
    %v1484 = vld [vmem:[%s1 + $0xb8] sm:$0xff]
    %v1485 = vld [vmem:[%s1 + $0xc0] sm:$0xff]
    %v1486 = vld [vmem:[%s1 + $0xc8] sm:$0xff]
    %v1487 = vld [vmem:[%s1 + $0xd0] sm:$0xff]
    %v1488 = vld [vmem:[%s1 + $0xd8] sm:$0xff]
    %v1489 = vld [vmem:[%s1 + $0xe0] sm:$0xff]
    %v1490 = vld [vmem:[%s1 + $0xe8] sm:$0xff]
    %v1491 = vld [vmem:[%s1 + $0xf0] sm:$0xff]
    %v1492 = vld [vmem:[%s1 + $0xf8] sm:$0xff]
    %v1493 = vld [vmem:[%s1 + $0x100] sm:$0xff]
    %v1494 = vld [vmem:[%s1 + $0x108] sm:$0xff]
    %v1495 = vld [vmem:[%s1 + $0x110] sm:$0xff]
    %v1496 = vld [vmem:[%s1 + $0x118] sm:$0xff]
    %v1497 = vld [vmem:[%s1 + $0x120] sm:$0xff]
    %v1498 = vld [vmem:[%s1 + $0x128] sm:$0xff]
    %v1499 = vld [vmem:[%s1 + $0x130] sm:$0xff]
    %v1500 = vld [vmem:[%s1 + $0x138] sm:$0xff]
    %v1501 = vld [vmem:[%s1 + $0x140] sm:$0xff]
    %v1502 = vld [vmem:[%s1 + $0x148] sm:$0xff]
    %v1503 = vld [vmem:[%s1 + $0x150] sm:$0xff]
    %v1504 = vld [vmem:[%s1 + $0x158] sm:$0xff]
    %v1505 = vld [vmem:[%s1 + $0x160] sm:$0xff]
    %v1506 = vld [vmem:[%s1 + $0x168] sm:$0xff]
    %v1507 = vld [vmem:[%s1 + $0x170] sm:$0xff]
    %v1508 = vld [vmem:[%s1 + $0x178] sm:$0xff]
    %v1509 = vld [vmem:[%s1 + $0x180] sm:$0xff]
    %v1510 = vld [vmem:[%s1 + $0x188] sm:$0xff]
    %v1511 = vld [vmem:[%s1 + $0x190] sm:$0xff]
    %v1512 = vld [vmem:[%s1 + $0x198] sm:$0xff]
    %v1513 = vld [vmem:[%s1 + $0x1a0] sm:$0xff]
    %v1514 = vld [vmem:[%s1 + $0x1a8] sm:$0xff]
    %v1515 = vld [vmem:[%s1 + $0x1b0] sm:$0xff]
    %v1516 = vld [vmem:[%s1 + $0x1b8] sm:$0xff]
    %v1517 = vld [vmem:[%s1 + $0x1c0] sm:$0xff]
    %v1518 = vld [vmem:[%s1 + $0x1c8] sm:$0xff]
    %v1519 = vld [vmem:[%s1 + $0x1d0] sm:$0xff]
    %v1520 = vld [vmem:[%s1 + $0x1d8] sm:$0xff]
    %v1521 = vld [vmem:[%s1 + $0x1e0] sm:$0xff]
    %v1522 = vld [vmem:[%s1 + $0x1e8] sm:$0xff]
    %v1523 = vld [vmem:[%s1 + $0x1f0] sm:$0xff]
    %v1524 = vld [vmem:[%s1 + $0x1f8] sm:$0xff]
    %v1525 = vmul.f32 %v1207, 0.5
    %v1526 = vmul.f32 %v1210, 0.5
    %v1527 = vmul.f32 %v1215, 0.5
    %v1528 = vmul.f32 %v1218, 0.5
    %v1529 = vmul.f32 %v1223, 0.5
    %v1530 = vmul.f32 %v1226, 0.5
    %v1531 = vmul.f32 %v1231, 0.5
    %v1532 = vmul.f32 %v1234, 0.5
    %v1533 = vmul.f32 %v1239, 0.5
    %v1534 = vmul.f32 %v1242, 0.5
    %v1535 = vmul.f32 %v1247, 0.5
    %v1536 = vmul.f32 %v1250, 0.5
    %v1537 = vmul.f32 %v1255, 0.5
    %v1538 = vmul.f32 %v1258, 0.5
    %v1539 = vmul.f32 %v1263, 0.5
    %v1540 = vmul.f32 %v1266, 0.5
    %v1541 = vmul.f32 %v1271, 0.5
    %v1542 = vmul.f32 %v1274, 0.5
    %v1543 = vmul.f32 %v1279, 0.5
    %v1544 = vmul.f32 %v1282, 0.5
    %v1545 = vmul.f32 %v1287, 0.5
    %v1546 = vmul.f32 %v1290, 0.5
    %v1547 = vmul.f32 %v1295, 0.5
    %v1548 = vmul.f32 %v1298, 0.5
    %v1549 = vmul.f32 %v1303, 0.5
    %v1550 = vmul.f32 %v1306, 0.5
    %v1551 = vmul.f32 %v1311, 0.5
    %v1552 = vmul.f32 %v1314, 0.5
    %v1553 = vmul.f32 %v1319, 0.5
    %v1554 = vmul.f32 %v1322, 0.5
    %v1555 = vmul.f32 %v1327, 0.5
    %v1556 = vmul.f32 %v1330, 0.5
    %v1557 = vmul.f32 %v1335, 0.5
    %v1558 = vmul.f32 %v1338, 0.5
    %v1559 = vmul.f32 %v1343, 0.5
    %v1560 = vmul.f32 %v1346, 0.5
    %v1561 = vmul.f32 %v1351, 0.5
    %v1562 = vmul.f32 %v1354, 0.5
    %v1563 = vmul.f32 %v1359, 0.5
    %v1564 = vmul.f32 %v1362, 0.5
    %v1565 = vmul.f32 %v1367, 0.5
    %v1566 = vmul.f32 %v1370, 0.5
    %v1567 = vmul.f32 %v1375, 0.5
    %v1568 = vmul.f32 %v1378, 0.5
    %v1569 = vmul.f32 %v1383, 0.5
    %v1570 = vmul.f32 %v1386, 0.5
    %v1571 = vmul.f32 %v1391, 0.5
    %v1572 = vmul.f32 %v1394, 0.5
    %v1573 = vmul.f32 %v1399, 0.5
    %v1574 = vmul.f32 %v1402, 0.5
    %v1575 = vmul.f32 %v1407, 0.5
    %v1576 = vmul.f32 %v1410, 0.5
    %v1577 = vmul.f32 %v1415, 0.5
    %v1578 = vmul.f32 %v1418, 0.5
    %v1579 = vmul.f32 %v1423, 0.5
    %v1580 = vmul.f32 %v1426, 0.5
    %v1581 = vmul.f32 %v1431, 0.5
    %v1582 = vmul.f32 %v1434, 0.5
    %v1583 = vmul.f32 %v1439, 0.5
    %v1584 = vmul.f32 %v1442, 0.5
    %v1585 = vmul.f32 %v1447, 0.5
    %v1586 = vmul.f32 %v1450, 0.5
    %v1587 = vmul.f32 %v1455, 0.5
    %v1588 = vmul.f32 %v1458, 0.5
    %v1589 = vmul.f32 %v1525, 1.442695
    %v1590 = vpow.pop %v1589
    %v1591 = vmul.f32 %v1526, 1.442695
    %v1592 = vpow.pop %v1591
    %v1593 = vmul.f32 %v1527, 1.442695
    %v1594 = vpow.pop %v1593
    %v1595 = vmul.f32 %v1528, 1.442695
    %v1596 = vpow.pop %v1595
    %v1597 = vmul.f32 %v1529, 1.442695
    %v1598 = vpow.pop %v1597
    %v1599 = vmul.f32 %v1530, 1.442695
    %v1600 = vpow.pop %v1599
    %v1601 = vmul.f32 %v1531, 1.442695
    %v1602 = vpow.pop %v1601
    %v1603 = vmul.f32 %v1532, 1.442695
    %v1604 = vpow.pop %v1603
    %v1605 = vmul.f32 %v1533, 1.442695
    %v1606 = vpow.pop %v1605
    %v1607 = vmul.f32 %v1534, 1.442695
    %v1608 = vpow.pop %v1607
    %v1609 = vmul.f32 %v1535, 1.442695
    %v1610 = vpow.pop %v1609
    %v1611 = vmul.f32 %v1536, 1.442695
    %v1612 = vpow.pop %v1611
    %v1613 = vmul.f32 %v1537, 1.442695
    %v1614 = vpow.pop %v1613
    %v1615 = vmul.f32 %v1538, 1.442695
    %v1616 = vpow.pop %v1615
    %v1617 = vmul.f32 %v1539, 1.442695
    %v1618 = vpow.pop %v1617
    %v1619 = vmul.f32 %v1540, 1.442695
    %v1620 = vpow.pop %v1619
    %v1621 = vmul.f32 %v1541, 1.442695
    %v1622 = vpow.pop %v1621
    %v1623 = vmul.f32 %v1542, 1.442695
    %v1624 = vpow.pop %v1623
    %v1625 = vmul.f32 %v1543, 1.442695
    %v1626 = vpow.pop %v1625
    %v1627 = vmul.f32 %v1544, 1.442695
    %v1628 = vpow.pop %v1627
    %v1629 = vmul.f32 %v1545, 1.442695
    %v1630 = vpow.pop %v1629
    %v1631 = vmul.f32 %v1546, 1.442695
    %v1632 = vpow.pop %v1631
    %v1633 = vmul.f32 %v1547, 1.442695
    %v1634 = vpow.pop %v1633
    %v1635 = vmul.f32 %v1548, 1.442695
    %v1636 = vpow.pop %v1635
    %v1637 = vmul.f32 %v1549, 1.442695
    %v1638 = vpow.pop %v1637
    %v1639 = vmul.f32 %v1550, 1.442695
    %v1640 = vpow.pop %v1639
    %v1641 = vmul.f32 %v1551, 1.442695
    %v1642 = vpow.pop %v1641
    %v1643 = vmul.f32 %v1552, 1.442695
    %v1644 = vpow.pop %v1643
    %v1645 = vmul.f32 %v1553, 1.442695
    %v1646 = vpow.pop %v1645
    %v1647 = vmul.f32 %v1554, 1.442695
    %v1648 = vpow.pop %v1647
    %v1649 = vmul.f32 %v1555, 1.442695
    %v1650 = vpow.pop %v1649
    %v1651 = vmul.f32 %v1556, 1.442695
    %v1652 = vpow.pop %v1651
    %v1653 = vmul.f32 %v1557, 1.442695
    %v1654 = vpow.pop %v1653
    %v1655 = vmul.f32 %v1558, 1.442695
    %v1656 = vpow.pop %v1655
    %v1657 = vmul.f32 %v1559, 1.442695
    %v1658 = vpow.pop %v1657
    %v1659 = vmul.f32 %v1560, 1.442695
    %v1660 = vpow.pop %v1659
    %v1661 = vmul.f32 %v1561, 1.442695
    %v1662 = vpow.pop %v1661
    %v1663 = vmul.f32 %v1562, 1.442695
    %v1664 = vpow.pop %v1663
    %v1665 = vmul.f32 %v1563, 1.442695
    %v1666 = vpow.pop %v1665
    %v1667 = vmul.f32 %v1564, 1.442695
    %v1668 = vpow.pop %v1667
    %v1669 = vmul.f32 %v1565, 1.442695
    %v1670 = vpow.pop %v1669
    %v1671 = vmul.f32 %v1566, 1.442695
    %v1672 = vpow.pop %v1671
    %v1673 = vmul.f32 %v1567, 1.442695
    %v1674 = vpow.pop %v1673
    %v1675 = vmul.f32 %v1568, 1.442695
    %v1676 = vpow.pop %v1675
    %v1677 = vmul.f32 %v1569, 1.442695
    %v1678 = vpow.pop %v1677
    %v1679 = vmul.f32 %v1570, 1.442695
    %v1680 = vpow.pop %v1679
    %v1681 = vmul.f32 %v1571, 1.442695
    %v1682 = vpow.pop %v1681
    %v1683 = vmul.f32 %v1572, 1.442695
    %v1684 = vpow.pop %v1683
    %v1685 = vmul.f32 %v1573, 1.442695
    %v1686 = vpow.pop %v1685
    %v1687 = vmul.f32 %v1574, 1.442695
    %v1688 = vpow.pop %v1687
    %v1689 = vmul.f32 %v1575, 1.442695
    %v1690 = vpow.pop %v1689
    %v1691 = vmul.f32 %v1576, 1.442695
    %v1692 = vpow.pop %v1691
    %v1693 = vmul.f32 %v1577, 1.442695
    %v1694 = vpow.pop %v1693
    %v1695 = vmul.f32 %v1578, 1.442695
    %v1696 = vpow.pop %v1695
    %v1697 = vmul.f32 %v1579, 1.442695
    %v1698 = vpow.pop %v1697
    %v1699 = vmul.f32 %v1580, 1.442695
    %v1700 = vpow.pop %v1699
    %v1701 = vmul.f32 %v1581, 1.442695
    %v1702 = vpow.pop %v1701
    %v1703 = vmul.f32 %v1582, 1.442695
    %v1704 = vpow.pop %v1703
    %v1705 = vmul.f32 %v1583, 1.442695
    %v1706 = vpow.pop %v1705
    %v1707 = vmul.f32 %v1584, 1.442695
    %v1708 = vpow.pop %v1707
    %v1709 = vmul.f32 %v1585, 1.442695
    %v1710 = vpow.pop %v1709
    %v1711 = vmul.f32 %v1586, 1.442695
    %v1712 = vpow.pop %v1711
    %v1713 = vmul.f32 %v1587, 1.442695
    %v1714 = vpow.pop %v1713
    %v1715 = vmul.f32 %v1588, 1.442695
    %v1716 = vpow.pop %v1715
    %1781 = vrot.lane.b32.xlu0 %v1590, 120
    %v1782 = vpop.permute.xlu0 %1781
    %1783 = vrot.lane.b32.xlu0 %v1592, 120
    %v1784 = vpop.permute.xlu0 %1783
    %1785 = vrot.lane.b32.xlu0 %v1594, 120
    %v1786 = vpop.permute.xlu0 %1785
    %1787 = vrot.lane.b32.xlu0 %v1596, 120
    %v1788 = vpop.permute.xlu0 %1787
    %1789 = vrot.lane.b32.xlu0 %v1598, 120
    %v1790 = vpop.permute.xlu0 %1789
    %1791 = vrot.lane.b32.xlu0 %v1600, 120
    %v1792 = vpop.permute.xlu0 %1791
    %1793 = vrot.lane.b32.xlu0 %v1602, 120
    %v1794 = vpop.permute.xlu0 %1793
    %1795 = vrot.lane.b32.xlu0 %v1604, 120
    %v1796 = vpop.permute.xlu0 %1795
    %1797 = vrot.lane.b32.xlu0 %v1606, 120
    %v1798 = vpop.permute.xlu0 %1797
    %1799 = vrot.lane.b32.xlu0 %v1608, 120
    %v1800 = vpop.permute.xlu0 %1799
    %1801 = vrot.lane.b32.xlu0 %v1610, 120
    %v1802 = vpop.permute.xlu0 %1801
    %1803 = vrot.lane.b32.xlu0 %v1612, 120
    %v1804 = vpop.permute.xlu0 %1803
    %1805 = vrot.lane.b32.xlu0 %v1614, 120
    %v1806 = vpop.permute.xlu0 %1805
    %1807 = vrot.lane.b32.xlu0 %v1616, 120
    %v1808 = vpop.permute.xlu0 %1807
    %1809 = vrot.lane.b32.xlu0 %v1618, 120
    %v1810 = vpop.permute.xlu0 %1809
    %1811 = vrot.lane.b32.xlu0 %v1620, 120
    %v1812 = vpop.permute.xlu0 %1811
    %1813 = vrot.lane.b32.xlu0 %v1622, 120
    %v1814 = vpop.permute.xlu0 %1813
    %1815 = vrot.lane.b32.xlu0 %v1624, 120
    %v1816 = vpop.permute.xlu0 %1815
    %1817 = vrot.lane.b32.xlu0 %v1626, 120
    %v1818 = vpop.permute.xlu0 %1817
    %1819 = vrot.lane.b32.xlu0 %v1628, 120
    %v1820 = vpop.permute.xlu0 %1819
    %1821 = vrot.lane.b32.xlu0 %v1630, 120
    %v1822 = vpop.permute.xlu0 %1821
    %1823 = vrot.lane.b32.xlu0 %v1632, 120
    %v1824 = vpop.permute.xlu0 %1823
    %1825 = vrot.lane.b32.xlu0 %v1634, 120
    %v1826 = vpop.permute.xlu0 %1825
    %1827 = vrot.lane.b32.xlu0 %v1636, 120
    %v1828 = vpop.permute.xlu0 %1827
    %1829 = vrot.lane.b32.xlu0 %v1638, 120
    %v1830 = vpop.permute.xlu0 %1829
    %1831 = vrot.lane.b32.xlu0 %v1640, 120
    %v1832 = vpop.permute.xlu0 %1831
    %1833 = vrot.lane.b32.xlu0 %v1642, 120
    %v1834 = vpop.permute.xlu0 %1833
    %1835 = vrot.lane.b32.xlu0 %v1644, 120
    %v1836 = vpop.permute.xlu0 %1835
    %1837 = vrot.lane.b32.xlu0 %v1646, 120
    %v1838 = vpop.permute.xlu0 %1837
    %1839 = vrot.lane.b32.xlu0 %v1648, 120
    %v1840 = vpop.permute.xlu0 %1839
    %1841 = vrot.lane.b32.xlu0 %v1650, 120
    %v1842 = vpop.permute.xlu0 %1841
    %1843 = vrot.lane.b32.xlu0 %v1652, 120
    %v1844 = vpop.permute.xlu0 %1843
    %1845 = vrot.lane.b32.xlu0 %v1654, 120
    %v1846 = vpop.permute.xlu0 %1845
    %1847 = vrot.lane.b32.xlu0 %v1656, 120
    %v1848 = vpop.permute.xlu0 %1847
    %1849 = vrot.lane.b32.xlu0 %v1658, 120
    %v1850 = vpop.permute.xlu0 %1849
    %1851 = vrot.lane.b32.xlu0 %v1660, 120
    %v1852 = vpop.permute.xlu0 %1851
    %1853 = vrot.lane.b32.xlu0 %v1662, 120
    %v1854 = vpop.permute.xlu0 %1853
    %1855 = vrot.lane.b32.xlu0 %v1664, 120
    %v1856 = vpop.permute.xlu0 %1855
    %1857 = vrot.lane.b32.xlu0 %v1666, 120
    %v1858 = vpop.permute.xlu0 %1857
    %1859 = vrot.lane.b32.xlu0 %v1668, 120
    %v1860 = vpop.permute.xlu0 %1859
    %1861 = vrot.lane.b32.xlu0 %v1670, 120
    %v1862 = vpop.permute.xlu0 %1861
    %1863 = vrot.lane.b32.xlu0 %v1672, 120
    %v1864 = vpop.permute.xlu0 %1863
    %1865 = vrot.lane.b32.xlu0 %v1674, 120
    %v1866 = vpop.permute.xlu0 %1865
    %1867 = vrot.lane.b32.xlu0 %v1676, 120
    %v1868 = vpop.permute.xlu0 %1867
    %1869 = vrot.lane.b32.xlu0 %v1678, 120
    %v1870 = vpop.permute.xlu0 %1869
    %1871 = vrot.lane.b32.xlu0 %v1680, 120
    %v1872 = vpop.permute.xlu0 %1871
    %1873 = vrot.lane.b32.xlu0 %v1682, 120
    %v1874 = vpop.permute.xlu0 %1873
    %1875 = vrot.lane.b32.xlu0 %v1684, 120
    %v1876 = vpop.permute.xlu0 %1875
    %1877 = vrot.lane.b32.xlu0 %v1686, 120
    %v1878 = vpop.permute.xlu0 %1877
    %1879 = vrot.lane.b32.xlu0 %v1688, 120
    %v1880 = vpop.permute.xlu0 %1879
    %1881 = vrot.lane.b32.xlu0 %v1690, 120
    %v1882 = vpop.permute.xlu0 %1881
    %1883 = vrot.lane.b32.xlu0 %v1692, 120
    %v1884 = vpop.permute.xlu0 %1883
    %1885 = vrot.lane.b32.xlu0 %v1694, 120
    %v1886 = vpop.permute.xlu0 %1885
    %1887 = vrot.lane.b32.xlu0 %v1696, 120
    %v1888 = vpop.permute.xlu0 %1887
    %1889 = vrot.lane.b32.xlu0 %v1698, 120
    %v1890 = vpop.permute.xlu0 %1889
    %1891 = vrot.lane.b32.xlu0 %v1700, 120
    %v1892 = vpop.permute.xlu0 %1891
    %1893 = vrot.lane.b32.xlu0 %v1702, 120
    %v1894 = vpop.permute.xlu0 %1893
    %1895 = vrot.lane.b32.xlu0 %v1704, 120
    %v1896 = vpop.permute.xlu0 %1895
    %1897 = vrot.lane.b32.xlu0 %v1706, 120
    %v1898 = vpop.permute.xlu0 %1897
    %1899 = vrot.lane.b32.xlu0 %v1708, 120
    %v1900 = vpop.permute.xlu0 %1899
    %1901 = vrot.lane.b32.xlu0 %v1710, 120
    %v1902 = vpop.permute.xlu0 %1901
    %1903 = vrot.lane.b32.xlu0 %v1712, 120
    %v1904 = vpop.permute.xlu0 %1903
    %1905 = vrot.lane.b32.xlu0 %v1714, 120
    %v1906 = vpop.permute.xlu0 %1905
    %1907 = vrot.lane.b32.xlu0 %v1716, 120
    %v1908 = vpop.permute.xlu0 %1907
    %v1973 = vmul.f32 %v1461, %v1782
    %v1974 = vmul.f32 %v1462, %v1784
    %v1975 = vmul.f32 %v1463, %v1786
    %v1976 = vmul.f32 %v1464, %v1788
    %v1977 = vmul.f32 %v1465, %v1790
    %v1978 = vmul.f32 %v1466, %v1792
    %v1979 = vmul.f32 %v1467, %v1794
    %v1980 = vmul.f32 %v1468, %v1796
    %v1981 = vmul.f32 %v1469, %v1798
    %v1982 = vmul.f32 %v1470, %v1800
    %v1983 = vmul.f32 %v1471, %v1802
    %v1984 = vmul.f32 %v1472, %v1804
    %v1985 = vmul.f32 %v1473, %v1806
    %v1986 = vmul.f32 %v1474, %v1808
    %v1987 = vmul.f32 %v1475, %v1810
    %v1988 = vmul.f32 %v1476, %v1812
    %v1989 = vmul.f32 %v1477, %v1814
    %v1990 = vmul.f32 %v1478, %v1816
    %v1991 = vmul.f32 %v1479, %v1818
    %v1992 = vmul.f32 %v1480, %v1820
    %v1993 = vmul.f32 %v1481, %v1822
    %v1994 = vmul.f32 %v1482, %v1824
    %v1995 = vmul.f32 %v1483, %v1826
    %v1996 = vmul.f32 %v1484, %v1828
    %v1997 = vmul.f32 %v1485, %v1830
    %v1998 = vmul.f32 %v1486, %v1832
    %v1999 = vmul.f32 %v1487, %v1834
    %v2000 = vmul.f32 %v1488, %v1836
    %v2001 = vmul.f32 %v1489, %v1838
    %v2002 = vmul.f32 %v1490, %v1840
    %v2003 = vmul.f32 %v1491, %v1842
    %v2004 = vmul.f32 %v1492, %v1844
    %v2005 = vmul.f32 %v1493, %v1846
    %v2006 = vmul.f32 %v1494, %v1848
    %v2007 = vmul.f32 %v1495, %v1850
    %v2008 = vmul.f32 %v1496, %v1852
    %v2009 = vmul.f32 %v1497, %v1854
    %v2010 = vmul.f32 %v1498, %v1856
    %v2011 = vmul.f32 %v1499, %v1858
    %v2012 = vmul.f32 %v1500, %v1860
    %v2013 = vmul.f32 %v1501, %v1862
    %v2014 = vmul.f32 %v1502, %v1864
    %v2015 = vmul.f32 %v1503, %v1866
    %v2016 = vmul.f32 %v1504, %v1868
    %v2017 = vmul.f32 %v1505, %v1870
    %v2018 = vmul.f32 %v1506, %v1872
    %v2019 = vmul.f32 %v1507, %v1874
    %v2020 = vmul.f32 %v1508, %v1876
    %v2021 = vmul.f32 %v1509, %v1878
    %v2022 = vmul.f32 %v1510, %v1880
    %v2023 = vmul.f32 %v1511, %v1882
    %v2024 = vmul.f32 %v1512, %v1884
    %v2025 = vmul.f32 %v1513, %v1886
    %v2026 = vmul.f32 %v1514, %v1888
    %v2027 = vmul.f32 %v1515, %v1890
    %v2028 = vmul.f32 %v1516, %v1892
    %v2029 = vmul.f32 %v1517, %v1894
    %v2030 = vmul.f32 %v1518, %v1896
    %v2031 = vmul.f32 %v1519, %v1898
    %v2032 = vmul.f32 %v1520, %v1900
    %v2033 = vmul.f32 %v1521, %v1902
    %v2034 = vmul.f32 %v1522, %v1904
    %v2035 = vmul.f32 %v1523, %v1906
    %v2036 = vmul.f32 %v1524, %v1908
    %v2037 = vadd.f32 %v1207, %v1973
    %v2038 = vadd.f32 %v1210, %v1974
    %v2039 = vadd.f32 %v1215, %v1975
    %v2040 = vadd.f32 %v1218, %v1976
    %v2041 = vadd.f32 %v1223, %v1977
    %v2042 = vadd.f32 %v1226, %v1978
    %v2043 = vadd.f32 %v1231, %v1979
    %v2044 = vadd.f32 %v1234, %v1980
    %v2045 = vadd.f32 %v1239, %v1981
    %v2046 = vadd.f32 %v1242, %v1982
    %v2047 = vadd.f32 %v1247, %v1983
    %v2048 = vadd.f32 %v1250, %v1984
    %v2049 = vadd.f32 %v1255, %v1985
    %v2050 = vadd.f32 %v1258, %v1986
    %v2051 = vadd.f32 %v1263, %v1987
    %v2052 = vadd.f32 %v1266, %v1988
    %v2053 = vadd.f32 %v1271, %v1989
    %v2054 = vadd.f32 %v1274, %v1990
    %v2055 = vadd.f32 %v1279, %v1991
    %v2056 = vadd.f32 %v1282, %v1992
    %v2057 = vadd.f32 %v1287, %v1993
    %v2058 = vadd.f32 %v1290, %v1994
    %v2059 = vadd.f32 %v1295, %v1995
    %v2060 = vadd.f32 %v1298, %v1996
    %v2061 = vadd.f32 %v1303, %v1997
    %v2062 = vadd.f32 %v1306, %v1998
    %v2063 = vadd.f32 %v1311, %v1999
    %v2064 = vadd.f32 %v1314, %v2000
    %v2065 = vadd.f32 %v1319, %v2001
    %v2066 = vadd.f32 %v1322, %v2002
    %v2067 = vadd.f32 %v1327, %v2003
    %v2068 = vadd.f32 %v1330, %v2004
    %v2069 = vadd.f32 %v1335, %v2005
    %v2070 = vadd.f32 %v1338, %v2006
    %v2071 = vadd.f32 %v1343, %v2007
    %v2072 = vadd.f32 %v1346, %v2008
    %v2073 = vadd.f32 %v1351, %v2009
    %v2074 = vadd.f32 %v1354, %v2010
    %v2075 = vadd.f32 %v1359, %v2011
    %v2076 = vadd.f32 %v1362, %v2012
    %v2077 = vadd.f32 %v1367, %v2013
    %v2078 = vadd.f32 %v1370, %v2014
    %v2079 = vadd.f32 %v1375, %v2015
    %v2080 = vadd.f32 %v1378, %v2016
    %v2081 = vadd.f32 %v1383, %v2017
    %v2082 = vadd.f32 %v1386, %v2018
    %v2083 = vadd.f32 %v1391, %v2019
    %v2084 = vadd.f32 %v1394, %v2020
    %v2085 = vadd.f32 %v1399, %v2021
    %v2086 = vadd.f32 %v1402, %v2022
    %v2087 = vadd.f32 %v1407, %v2023
    %v2088 = vadd.f32 %v1410, %v2024
    %v2089 = vadd.f32 %v1415, %v2025
    %v2090 = vadd.f32 %v1418, %v2026
    %v2091 = vadd.f32 %v1423, %v2027
    %v2092 = vadd.f32 %v1426, %v2028
    %v2093 = vadd.f32 %v1431, %v2029
    %v2094 = vadd.f32 %v1434, %v2030
    %v2095 = vadd.f32 %v1439, %v2031
    %v2096 = vadd.f32 %v1442, %v2032
    %v2097 = vadd.f32 %v1447, %v2033
    %v2098 = vadd.f32 %v1450, %v2034
    %v2099 = vadd.f32 %v1455, %v2035
    %v2100 = vadd.f32 %v1458, %v2036
    %v2101 = vpack.c.bf16 %v2038, %v2037
    %v2102 = vpack.c.bf16 %v2040, %v2039
    %v2103 = vpack.c.bf16 %v2042, %v2041
    %v2104 = vpack.c.bf16 %v2044, %v2043
    %v2105 = vpack.c.bf16 %v2046, %v2045
    %v2106 = vpack.c.bf16 %v2048, %v2047
    %v2107 = vpack.c.bf16 %v2050, %v2049
    %v2108 = vpack.c.bf16 %v2052, %v2051
    %v2109 = vpack.c.bf16 %v2054, %v2053
    %v2110 = vpack.c.bf16 %v2056, %v2055
    %v2111 = vpack.c.bf16 %v2058, %v2057
    %v2112 = vpack.c.bf16 %v2060, %v2059
    %v2113 = vpack.c.bf16 %v2062, %v2061
    %v2114 = vpack.c.bf16 %v2064, %v2063
    %v2115 = vpack.c.bf16 %v2066, %v2065
    %v2116 = vpack.c.bf16 %v2068, %v2067
    %v2117 = vpack.c.bf16 %v2070, %v2069
    %v2118 = vpack.c.bf16 %v2072, %v2071
    %v2119 = vpack.c.bf16 %v2074, %v2073
    %v2120 = vpack.c.bf16 %v2076, %v2075
    %v2121 = vpack.c.bf16 %v2078, %v2077
    %v2122 = vpack.c.bf16 %v2080, %v2079
    %v2123 = vpack.c.bf16 %v2082, %v2081
    %v2124 = vpack.c.bf16 %v2084, %v2083
    %v2125 = vpack.c.bf16 %v2086, %v2085
    %v2126 = vpack.c.bf16 %v2088, %v2087
    %v2127 = vpack.c.bf16 %v2090, %v2089
    %v2128 = vpack.c.bf16 %v2092, %v2091
    %v2129 = vpack.c.bf16 %v2094, %v2093
    %v2130 = vpack.c.bf16 %v2096, %v2095
    %v2131 = vpack.c.bf16 %v2098, %v2097
    %v2132 = vpack.c.bf16 %v2100, %v2099
    %v2133 = vld [vmem:[%s9] sm:$0xf]
    %v2134 = vld [vmem:[%s10] sm:$0x1]
    %v2136 = vlaneseq
    %v2137 = vshrl.u32 %v2136, 7
    %v2138 = vsub.s32 0, %v2137
    %v2139 = vrot.slane %v2134, %v2138
    %vm2141 = vcmask 64512
    %v2143 = vsel %vm2141, %v2101, 0
    %v2146 = vsel %vm2141, %v2102, 0
    %v2149 = vsel %vm2141, %v2103, 0
    %v2152 = vsel %vm2141, %v2104, 0
    %v2155 = vsel %vm2141, %v2105, 0
    %v2158 = vsel %vm2141, %v2106, 0
    %v2161 = vsel %vm2141, %v2107, 0
    %v2164 = vsel %vm2141, %v2108, 0
    %v2167 = vsel %vm2141, %v2109, 0
    %v2170 = vsel %vm2141, %v2110, 0
    %v2173 = vsel %vm2141, %v2111, 0
    %v2176 = vsel %vm2141, %v2112, 0
    %v2179 = vsel %vm2141, %v2113, 0
    %v2182 = vsel %vm2141, %v2114, 0
    %v2185 = vsel %vm2141, %v2115, 0
    %v2188 = vsel %vm2141, %v2116, 0
    %v2191 = vsel %vm2141, %v2117, 0
    %v2194 = vsel %vm2141, %v2118, 0
    %v2197 = vsel %vm2141, %v2119, 0
    %v2200 = vsel %vm2141, %v2120, 0
    %v2203 = vsel %vm2141, %v2121, 0
    %v2206 = vsel %vm2141, %v2122, 0
    %v2209 = vsel %vm2141, %v2123, 0
    %v2212 = vsel %vm2141, %v2124, 0
    %v2215 = vsel %vm2141, %v2125, 0
    %v2218 = vsel %vm2141, %v2126, 0
    %v2221 = vsel %vm2141, %v2127, 0
    %v2224 = vsel %vm2141, %v2128, 0
    %v2227 = vsel %vm2141, %v2129, 0
    %v2230 = vsel %vm2141, %v2130, 0
    %v2233 = vsel %vm2141, %v2131, 0
    %v2236 = vsel %vm2141, %v2132, 0
    %vm2238 = vcmask 1043456
    %v2240 = vsel %vm2238, %v2133, 0
    %2242 = vmatprep.subr.bf16.mxu0 0
    %2243 = vmatpush1.bf16.msra.mxu0 0
    %2244 = vmatprep.subr.bf16.mxu0 0
    %2245 = vmatpush1.bf16.msra.mxu0 0
    %2246 = vmatprep.subr.bf16.mxu0 0
    %2247 = vmatpush1.bf16.msra.mxu0 0
    %2248 = vmatprep.subr.bf16.mxu0 0
    %2249 = vmatpush1.bf16.msra.mxu0 0
    %2250 = vmatprep.subr.bf16.mxu0 0
    %2251 = vmatpush1.bf16.msra.mxu0 0
    %2252 = vmatprep.subr.bf16.mxu0 0
    %2253 = vmatpush1.bf16.msra.mxu0 0
    %2254 = vmatprep.subr.bf16.mxu0 0
    %2255 = vmatpush1.bf16.msra.mxu0 0
    %2256 = vmatprep.subr.bf16.mxu0 0
    %2257 = vmatpush1.bf16.msra.mxu0 %v2240
    %2258 = vmatprep.subr.bf16.mxu0 0
    %2259 = vmatpush2.bf16.msra.mxu0 0
    %2260 = vmatprep.subr.bf16.mxu0 0
    %2261 = vmatpush2.bf16.msra.mxu0 0
    %2262 = vmatprep.subr.bf16.mxu0 0
    %2263 = vmatpush2.bf16.msra.mxu0 0
    %2264 = vmatprep.subr.bf16.mxu0 0
    %2265 = vmatpush2.bf16.msra.mxu0 0
    %2266 = vmatprep.subr.bf16.mxu0 0
    %2267 = vmatpush2.bf16.msra.mxu0 0
    %2268 = vmatprep.subr.bf16.mxu0 0
    %2269 = vmatpush2.bf16.msra.mxu0 0
    %2270 = vmatprep.subr.bf16.mxu0 0
    %2271 = vmatpush2.bf16.msra.mxu0 0
    %2272 = vmatprep.subr.bf16.mxu0 0
    %2273 = vmatpush2.bf16.msra.mxu0 0
    %2274 = vmatprep.mubr.bf16.mxu0 0
    %2275 = vmatmul.mubr.bf16.gmra.mxu0 %v2143
    %v2276 = vpop.f32.mrf.mxu0
    %v2277 = vadd.f32 %v2139, %v2276
    %v2278 = vpop.f32.mrf.mxu0
    %v2279 = vpop.f32.mrf.mxu0
    %v2280 = vadd.f32 %v2139, %v2279
    %v2281 = vpop.f32.mrf.mxu0
    %2282 = vmatprep.mubr.bf16.mxu0 0
    %2283 = vmatmul.mubr.bf16.gmra.mxu0 %v2146
    %v2284 = vpop.f32.mrf.mxu0
    %v2285 = vadd.f32 %v2139, %v2284
    %v2286 = vpop.f32.mrf.mxu0
    %v2287 = vpop.f32.mrf.mxu0
    %v2288 = vadd.f32 %v2139, %v2287
    %v2289 = vpop.f32.mrf.mxu0
    %2290 = vmatprep.mubr.bf16.mxu0 0
    %2291 = vmatmul.mubr.bf16.gmra.mxu0 %v2149
    %v2292 = vpop.f32.mrf.mxu0
    %v2293 = vadd.f32 %v2139, %v2292
    %v2294 = vpop.f32.mrf.mxu0
    %v2295 = vpop.f32.mrf.mxu0
    %v2296 = vadd.f32 %v2139, %v2295
    %v2297 = vpop.f32.mrf.mxu0
    %2298 = vmatprep.mubr.bf16.mxu0 0
    %2299 = vmatmul.mubr.bf16.gmra.mxu0 %v2152
    %v2300 = vpop.f32.mrf.mxu0
    %v2301 = vadd.f32 %v2139, %v2300
    %v2302 = vpop.f32.mrf.mxu0
    %v2303 = vpop.f32.mrf.mxu0
    %v2304 = vadd.f32 %v2139, %v2303
    %v2305 = vpop.f32.mrf.mxu0
    %2306 = vmatprep.mubr.bf16.mxu0 0
    %2307 = vmatmul.mubr.bf16.gmra.mxu0 %v2155
    %v2308 = vpop.f32.mrf.mxu0
    %v2309 = vadd.f32 %v2139, %v2308
    %v2310 = vpop.f32.mrf.mxu0
    %v2311 = vpop.f32.mrf.mxu0
    %v2312 = vadd.f32 %v2139, %v2311
    %v2313 = vpop.f32.mrf.mxu0
    %2314 = vmatprep.mubr.bf16.mxu0 0
    %2315 = vmatmul.mubr.bf16.gmra.mxu0 %v2158
    %v2316 = vpop.f32.mrf.mxu0
    %v2317 = vadd.f32 %v2139, %v2316
    %v2318 = vpop.f32.mrf.mxu0
    %v2319 = vpop.f32.mrf.mxu0
    %v2320 = vadd.f32 %v2139, %v2319
    %v2321 = vpop.f32.mrf.mxu0
    %2322 = vmatprep.mubr.bf16.mxu0 0
    %2323 = vmatmul.mubr.bf16.gmra.mxu0 %v2161
    %v2324 = vpop.f32.mrf.mxu0
    %v2325 = vadd.f32 %v2139, %v2324
    %v2326 = vpop.f32.mrf.mxu0
    %v2327 = vpop.f32.mrf.mxu0
    %v2328 = vadd.f32 %v2139, %v2327
    %v2329 = vpop.f32.mrf.mxu0
    %2330 = vmatprep.mubr.bf16.mxu0 0
    %2331 = vmatmul.mubr.bf16.gmra.mxu0 %v2164
    %v2332 = vpop.f32.mrf.mxu0
    %v2333 = vadd.f32 %v2139, %v2332
    %v2334 = vpop.f32.mrf.mxu0
    %v2335 = vpop.f32.mrf.mxu0
    %v2336 = vadd.f32 %v2139, %v2335
    %v2337 = vpop.f32.mrf.mxu0
    %2338 = vmatprep.mubr.bf16.mxu0 0
    %2339 = vmatmul.mubr.bf16.gmra.mxu0 %v2167
    %v2340 = vpop.f32.mrf.mxu0
    %v2341 = vadd.f32 %v2139, %v2340
    %v2342 = vpop.f32.mrf.mxu0
    %v2343 = vpop.f32.mrf.mxu0
    %v2344 = vadd.f32 %v2139, %v2343
    %v2345 = vpop.f32.mrf.mxu0
    %2346 = vmatprep.mubr.bf16.mxu0 0
    %2347 = vmatmul.mubr.bf16.gmra.mxu0 %v2170
    %v2348 = vpop.f32.mrf.mxu0
    %v2349 = vadd.f32 %v2139, %v2348
    %v2350 = vpop.f32.mrf.mxu0
    %v2351 = vpop.f32.mrf.mxu0
    %v2352 = vadd.f32 %v2139, %v2351
    %v2353 = vpop.f32.mrf.mxu0
    %2354 = vmatprep.mubr.bf16.mxu0 0
    %2355 = vmatmul.mubr.bf16.gmra.mxu0 %v2173
    %v2356 = vpop.f32.mrf.mxu0
    %v2357 = vadd.f32 %v2139, %v2356
    %v2358 = vpop.f32.mrf.mxu0
    %v2359 = vpop.f32.mrf.mxu0
    %v2360 = vadd.f32 %v2139, %v2359
    %v2361 = vpop.f32.mrf.mxu0
    %2362 = vmatprep.mubr.bf16.mxu0 0
    %2363 = vmatmul.mubr.bf16.gmra.mxu0 %v2176
    %v2364 = vpop.f32.mrf.mxu0
    %v2365 = vadd.f32 %v2139, %v2364
    %v2366 = vpop.f32.mrf.mxu0
    %v2367 = vpop.f32.mrf.mxu0
    %v2368 = vadd.f32 %v2139, %v2367
    %v2369 = vpop.f32.mrf.mxu0
    %2370 = vmatprep.mubr.bf16.mxu0 0
    %2371 = vmatmul.mubr.bf16.gmra.mxu0 %v2179
    %v2372 = vpop.f32.mrf.mxu0
    %v2373 = vadd.f32 %v2139, %v2372
    %v2374 = vpop.f32.mrf.mxu0
    %v2375 = vpop.f32.mrf.mxu0
    %v2376 = vadd.f32 %v2139, %v2375
    %v2377 = vpop.f32.mrf.mxu0
    %2378 = vmatprep.mubr.bf16.mxu0 0
    %2379 = vmatmul.mubr.bf16.gmra.mxu0 %v2182
    %v2380 = vpop.f32.mrf.mxu0
    %v2381 = vadd.f32 %v2139, %v2380
    %v2382 = vpop.f32.mrf.mxu0
    %v2383 = vpop.f32.mrf.mxu0
    %v2384 = vadd.f32 %v2139, %v2383
    %v2385 = vpop.f32.mrf.mxu0
    %2386 = vmatprep.mubr.bf16.mxu0 0
    %2387 = vmatmul.mubr.bf16.gmra.mxu0 %v2185
    %v2388 = vpop.f32.mrf.mxu0
    %v2389 = vadd.f32 %v2139, %v2388
    %v2390 = vpop.f32.mrf.mxu0
    %v2391 = vpop.f32.mrf.mxu0
    %v2392 = vadd.f32 %v2139, %v2391
    %v2393 = vpop.f32.mrf.mxu0
    %2394 = vmatprep.mubr.bf16.mxu0 0
    %2395 = vmatmul.mubr.bf16.gmra.mxu0 %v2188
    %v2396 = vpop.f32.mrf.mxu0
    %v2397 = vadd.f32 %v2139, %v2396
    %v2398 = vpop.f32.mrf.mxu0
    %v2399 = vpop.f32.mrf.mxu0
    %v2400 = vadd.f32 %v2139, %v2399
    %v2401 = vpop.f32.mrf.mxu0
    %2402 = vmatprep.mubr.bf16.mxu0 0
    %2403 = vmatmul.mubr.bf16.gmra.mxu0 %v2191
    %v2404 = vpop.f32.mrf.mxu0
    %v2405 = vadd.f32 %v2139, %v2404
    %v2406 = vpop.f32.mrf.mxu0
    %v2407 = vpop.f32.mrf.mxu0
    %v2408 = vadd.f32 %v2139, %v2407
    %v2409 = vpop.f32.mrf.mxu0
    %2410 = vmatprep.mubr.bf16.mxu0 0
    %2411 = vmatmul.mubr.bf16.gmra.mxu0 %v2194
    %v2412 = vpop.f32.mrf.mxu0
    %v2413 = vadd.f32 %v2139, %v2412
    %v2414 = vpop.f32.mrf.mxu0
    %v2415 = vpop.f32.mrf.mxu0
    %v2416 = vadd.f32 %v2139, %v2415
    %v2417 = vpop.f32.mrf.mxu0
    %2418 = vmatprep.mubr.bf16.mxu0 0
    %2419 = vmatmul.mubr.bf16.gmra.mxu0 %v2197
    %v2420 = vpop.f32.mrf.mxu0
    %v2421 = vadd.f32 %v2139, %v2420
    %v2422 = vpop.f32.mrf.mxu0
    %v2423 = vpop.f32.mrf.mxu0
    %v2424 = vadd.f32 %v2139, %v2423
    %v2425 = vpop.f32.mrf.mxu0
    %2426 = vmatprep.mubr.bf16.mxu0 0
    %2427 = vmatmul.mubr.bf16.gmra.mxu0 %v2200
    %v2428 = vpop.f32.mrf.mxu0
    %v2429 = vadd.f32 %v2139, %v2428
    %v2430 = vpop.f32.mrf.mxu0
    %v2431 = vpop.f32.mrf.mxu0
    %v2432 = vadd.f32 %v2139, %v2431
    %v2433 = vpop.f32.mrf.mxu0
    %2434 = vmatprep.mubr.bf16.mxu0 0
    %2435 = vmatmul.mubr.bf16.gmra.mxu0 %v2203
    %v2436 = vpop.f32.mrf.mxu0
    %v2437 = vadd.f32 %v2139, %v2436
    %v2438 = vpop.f32.mrf.mxu0
    %v2439 = vpop.f32.mrf.mxu0
    %v2440 = vadd.f32 %v2139, %v2439
    %v2441 = vpop.f32.mrf.mxu0
    %2442 = vmatprep.mubr.bf16.mxu0 0
    %2443 = vmatmul.mubr.bf16.gmra.mxu0 %v2206
    %v2444 = vpop.f32.mrf.mxu0
    %v2445 = vadd.f32 %v2139, %v2444
    %v2446 = vpop.f32.mrf.mxu0
    %v2447 = vpop.f32.mrf.mxu0
    %v2448 = vadd.f32 %v2139, %v2447
    %v2449 = vpop.f32.mrf.mxu0
    %2450 = vmatprep.mubr.bf16.mxu0 0
    %2451 = vmatmul.mubr.bf16.gmra.mxu0 %v2209
    %v2452 = vpop.f32.mrf.mxu0
    %v2453 = vadd.f32 %v2139, %v2452
    %v2454 = vpop.f32.mrf.mxu0
    %v2455 = vpop.f32.mrf.mxu0
    %v2456 = vadd.f32 %v2139, %v2455
    %v2457 = vpop.f32.mrf.mxu0
    %2458 = vmatprep.mubr.bf16.mxu0 0
    %2459 = vmatmul.mubr.bf16.gmra.mxu0 %v2212
    %v2460 = vpop.f32.mrf.mxu0
    %v2461 = vadd.f32 %v2139, %v2460
    %v2462 = vpop.f32.mrf.mxu0
    %v2463 = vpop.f32.mrf.mxu0
    %v2464 = vadd.f32 %v2139, %v2463
    %v2465 = vpop.f32.mrf.mxu0
    %2466 = vmatprep.mubr.bf16.mxu0 0
    %2467 = vmatmul.mubr.bf16.gmra.mxu0 %v2215
    %v2468 = vpop.f32.mrf.mxu0
    %v2469 = vadd.f32 %v2139, %v2468
    %v2470 = vpop.f32.mrf.mxu0
    %v2471 = vpop.f32.mrf.mxu0
    %v2472 = vadd.f32 %v2139, %v2471
    %v2473 = vpop.f32.mrf.mxu0
    %2474 = vmatprep.mubr.bf16.mxu0 0
    %2475 = vmatmul.mubr.bf16.gmra.mxu0 %v2218
    %v2476 = vpop.f32.mrf.mxu0
    %v2477 = vadd.f32 %v2139, %v2476
    %v2478 = vpop.f32.mrf.mxu0
    %v2479 = vpop.f32.mrf.mxu0
    %v2480 = vadd.f32 %v2139, %v2479
    %v2481 = vpop.f32.mrf.mxu0
    %2482 = vmatprep.mubr.bf16.mxu0 0
    %2483 = vmatmul.mubr.bf16.gmra.mxu0 %v2221
    %v2484 = vpop.f32.mrf.mxu0
    %v2485 = vadd.f32 %v2139, %v2484
    %v2486 = vpop.f32.mrf.mxu0
    %v2487 = vpop.f32.mrf.mxu0
    %v2488 = vadd.f32 %v2139, %v2487
    %v2489 = vpop.f32.mrf.mxu0
    %2490 = vmatprep.mubr.bf16.mxu0 0
    %2491 = vmatmul.mubr.bf16.gmra.mxu0 %v2224
    %v2492 = vpop.f32.mrf.mxu0
    %v2493 = vadd.f32 %v2139, %v2492
    %v2494 = vpop.f32.mrf.mxu0
    %v2495 = vpop.f32.mrf.mxu0
    %v2496 = vadd.f32 %v2139, %v2495
    %v2497 = vpop.f32.mrf.mxu0
    %2498 = vmatprep.mubr.bf16.mxu0 0
    %2499 = vmatmul.mubr.bf16.gmra.mxu0 %v2227
    %v2500 = vpop.f32.mrf.mxu0
    %v2501 = vadd.f32 %v2139, %v2500
    %v2502 = vpop.f32.mrf.mxu0
    %v2503 = vpop.f32.mrf.mxu0
    %v2504 = vadd.f32 %v2139, %v2503
    %v2505 = vpop.f32.mrf.mxu0
    %2506 = vmatprep.mubr.bf16.mxu0 0
    %2507 = vmatmul.mubr.bf16.gmra.mxu0 %v2230
    %v2508 = vpop.f32.mrf.mxu0
    %v2509 = vadd.f32 %v2139, %v2508
    %v2510 = vpop.f32.mrf.mxu0
    %v2511 = vpop.f32.mrf.mxu0
    %v2512 = vadd.f32 %v2139, %v2511
    %v2513 = vpop.f32.mrf.mxu0
    %2514 = vmatprep.mubr.bf16.mxu0 0
    %2515 = vmatmul.mubr.bf16.gmra.mxu0 %v2233
    %v2516 = vpop.f32.mrf.mxu0
    %v2517 = vadd.f32 %v2139, %v2516
    %v2518 = vpop.f32.mrf.mxu0
    %v2519 = vpop.f32.mrf.mxu0
    %v2520 = vadd.f32 %v2139, %v2519
    %v2521 = vpop.f32.mrf.mxu0
    %2522 = vmatprep.mubr.bf16.mxu0 0
    %2523 = vmatmul.mubr.bf16.gmra.mxu0 %v2236
    %v2524 = vpop.f32.mrf.mxu0
    %v2525 = vadd.f32 %v2139, %v2524
    %v2526 = vpop.f32.mrf.mxu0
    %v2527 = vpop.f32.mrf.mxu0
    %v2528 = vadd.f32 %v2139, %v2527
    %v2529 = vpop.f32.mrf.mxu0
    %2530 = vdwg.mxu0
    %v2531 = vtanh.pop %v2277
    %v2532 = vtanh.pop %v2280
    %v2533 = vtanh.pop %v2285
    %v2534 = vtanh.pop %v2288
    %v2535 = vtanh.pop %v2293
    %v2536 = vtanh.pop %v2296
    %v2537 = vtanh.pop %v2301
    %v2538 = vtanh.pop %v2304
    %v2539 = vtanh.pop %v2309
    %v2540 = vtanh.pop %v2312
    %v2541 = vtanh.pop %v2317
    %v2542 = vtanh.pop %v2320
    %v2543 = vtanh.pop %v2325
    %v2544 = vtanh.pop %v2328
    %v2545 = vtanh.pop %v2333
    %v2546 = vtanh.pop %v2336
    %v2547 = vtanh.pop %v2341
    %v2548 = vtanh.pop %v2344
    %v2549 = vtanh.pop %v2349
    %v2550 = vtanh.pop %v2352
    %v2551 = vtanh.pop %v2357
    %v2552 = vtanh.pop %v2360
    %v2553 = vtanh.pop %v2365
    %v2554 = vtanh.pop %v2368
    %v2555 = vtanh.pop %v2373
    %v2556 = vtanh.pop %v2376
    %v2557 = vtanh.pop %v2381
    %v2558 = vtanh.pop %v2384
    %v2559 = vtanh.pop %v2389
    %v2560 = vtanh.pop %v2392
    %v2561 = vtanh.pop %v2397
    %v2562 = vtanh.pop %v2400
    %v2563 = vtanh.pop %v2405
    %v2564 = vtanh.pop %v2408
    %v2565 = vtanh.pop %v2413
    %v2566 = vtanh.pop %v2416
    %v2567 = vtanh.pop %v2421
    %v2568 = vtanh.pop %v2424
    %v2569 = vtanh.pop %v2429
    %v2570 = vtanh.pop %v2432
    %v2571 = vtanh.pop %v2437
    %v2572 = vtanh.pop %v2440
    %v2573 = vtanh.pop %v2445
    %v2574 = vtanh.pop %v2448
    %v2575 = vtanh.pop %v2453
    %v2576 = vtanh.pop %v2456
    %v2577 = vtanh.pop %v2461
    %v2578 = vtanh.pop %v2464
    %v2579 = vtanh.pop %v2469
    %v2580 = vtanh.pop %v2472
    %v2581 = vtanh.pop %v2477
    %v2582 = vtanh.pop %v2480
    %v2583 = vtanh.pop %v2485
    %v2584 = vtanh.pop %v2488
    %v2585 = vtanh.pop %v2493
    %v2586 = vtanh.pop %v2496
    %v2587 = vtanh.pop %v2501
    %v2588 = vtanh.pop %v2504
    %v2589 = vtanh.pop %v2509
    %v2590 = vtanh.pop %v2512
    %v2591 = vtanh.pop %v2517
    %v2592 = vtanh.pop %v2520
    %v2593 = vtanh.pop %v2525
    %v2594 = vtanh.pop %v2528
    %v2595 = vpack.c.bf16 %v2532, %v2531
    %v2596 = vpack.c.bf16 %v2534, %v2533
    %v2597 = vpack.c.bf16 %v2536, %v2535
    %v2598 = vpack.c.bf16 %v2538, %v2537
    %v2599 = vpack.c.bf16 %v2540, %v2539
    %v2600 = vpack.c.bf16 %v2542, %v2541
    %v2601 = vpack.c.bf16 %v2544, %v2543
    %v2602 = vpack.c.bf16 %v2546, %v2545
    %v2603 = vpack.c.bf16 %v2548, %v2547
    %v2604 = vpack.c.bf16 %v2550, %v2549
    %v2605 = vpack.c.bf16 %v2552, %v2551
    %v2606 = vpack.c.bf16 %v2554, %v2553
    %v2607 = vpack.c.bf16 %v2556, %v2555
    %v2608 = vpack.c.bf16 %v2558, %v2557
    %v2609 = vpack.c.bf16 %v2560, %v2559
    %v2610 = vpack.c.bf16 %v2562, %v2561
    %v2611 = vpack.c.bf16 %v2564, %v2563
    %v2612 = vpack.c.bf16 %v2566, %v2565
    %v2613 = vpack.c.bf16 %v2568, %v2567
    %v2614 = vpack.c.bf16 %v2570, %v2569
    %v2615 = vpack.c.bf16 %v2572, %v2571
    %v2616 = vpack.c.bf16 %v2574, %v2573
    %v2617 = vpack.c.bf16 %v2576, %v2575
    %v2618 = vpack.c.bf16 %v2578, %v2577
    %v2619 = vpack.c.bf16 %v2580, %v2579
    %v2620 = vpack.c.bf16 %v2582, %v2581
    %v2621 = vpack.c.bf16 %v2584, %v2583
    %v2622 = vpack.c.bf16 %v2586, %v2585
    %v2623 = vpack.c.bf16 %v2588, %v2587
    %v2624 = vpack.c.bf16 %v2590, %v2589
    %v2625 = vpack.c.bf16 %v2592, %v2591
    %v2626 = vpack.c.bf16 %v2594, %v2593
    %v2627 = vld [vmem:[%s11] sm:$0xf]
    %v2628 = vld [vmem:[%s11 + $0x4] sm:$0xf]
    %v2629 = vld [vmem:[%s11 + $0x8] sm:$0xf]
    %v2630 = vld [vmem:[%s11 + $0xc] sm:$0xf]
    %v2631 = vld [vmem:[%s11 + $0x10] sm:$0xf]
    %v2632 = vld [vmem:[%s11 + $0x14] sm:$0xf]
    %v2633 = vld [vmem:[%s11 + $0x18] sm:$0xf]
    %v2634 = vld [vmem:[%s11 + $0x1c] sm:$0xf]
    %v2635 = vld [vmem:[%s11 + $0x20] sm:$0xf]
    %v2636 = vld [vmem:[%s11 + $0x24] sm:$0xf]
    %v2637 = vld [vmem:[%s11 + $0x28] sm:$0xf]
    %v2638 = vld [vmem:[%s11 + $0x2c] sm:$0xf]
    %v2639 = vld [vmem:[%s11 + $0x30] sm:$0xf]
    %v2640 = vld [vmem:[%s11 + $0x34] sm:$0xf]
    %v2641 = vld [vmem:[%s11 + $0x38] sm:$0xf]
    %v2642 = vld [vmem:[%s11 + $0x3c] sm:$0xf]
    %v2643 = vld [vmem:[%s12] sm:$0x1]
    %v2645 = vlaneseq
    %v2646 = vshrl.u32 %v2645, 7
    %v2647 = vsub.s32 0, %v2646
    %v2648 = vrot.slane %v2643, %v2647
    %v2666 = vunpack.c.l.b16 %v2627
    %v2667 = vunpack.c.l.b16 %v2628
    %v2668 = vunpack.c.l.b16 %v2629
    %v2669 = vunpack.c.l.b16 %v2630
    %v2670 = vunpack.c.l.b16 %v2631
    %v2671 = vunpack.c.l.b16 %v2632
    %v2672 = vunpack.c.l.b16 %v2633
    %v2673 = vunpack.c.l.b16 %v2634
    %v2674 = vunpack.c.l.b16 %v2635
    %v2675 = vunpack.c.l.b16 %v2636
    %v2676 = vunpack.c.l.b16 %v2637
    %v2677 = vunpack.c.l.b16 %v2638
    %v2678 = vunpack.c.l.b16 %v2639
    %v2679 = vunpack.c.l.b16 %v2640
    %v2680 = vunpack.c.l.b16 %v2641
    %v2681 = vunpack.c.l.b16 %v2642
    %v2682 = vpack.c.b16 %v2667, %v2666
    %v2683 = vpack.c.b16 %v2669, %v2668
    %v2684 = vpack.c.b16 %v2671, %v2670
    %v2685 = vpack.c.b16 %v2673, %v2672
    %v2686 = vpack.c.b16 %v2675, %v2674
    %v2687 = vpack.c.b16 %v2677, %v2676
    %v2688 = vpack.c.b16 %v2679, %v2678
    %v2689 = vpack.c.b16 %v2681, %v2680
    %2698 = vmatprep.subr.bf16.mxu0 0
    %2699 = vmatpush1.bf16.msra.mxu0 %v2689
    %2700 = vmatprep.subr.bf16.mxu0 0
    %2701 = vmatpush1.bf16.msra.mxu0 %v2688
    %2702 = vmatprep.subr.bf16.mxu0 0
    %2703 = vmatpush1.bf16.msra.mxu0 %v2687
    %2704 = vmatprep.subr.bf16.mxu0 0
    %2705 = vmatpush1.bf16.msra.mxu0 %v2686
    %2706 = vmatprep.subr.bf16.mxu0 0
    %2707 = vmatpush1.bf16.msra.mxu0 %v2685
    %2708 = vmatprep.subr.bf16.mxu0 0
    %2709 = vmatpush1.bf16.msra.mxu0 %v2684
    %2710 = vmatprep.subr.bf16.mxu0 0
    %2711 = vmatpush1.bf16.msra.mxu0 %v2683
    %2712 = vmatprep.subr.bf16.mxu0 0
    %2713 = vmatpush1.bf16.msra.mxu0 %v2682
    %2714 = vmatprep.subr.bf16.mxu0 0
    %2715 = vmatpush2.bf16.msra.mxu0 0
    %2716 = vmatprep.subr.bf16.mxu0 0
    %2717 = vmatpush2.bf16.msra.mxu0 0
    %2718 = vmatprep.subr.bf16.mxu0 0
    %2719 = vmatpush2.bf16.msra.mxu0 0
    %2720 = vmatprep.subr.bf16.mxu0 0
    %2721 = vmatpush2.bf16.msra.mxu0 0
    %2722 = vmatprep.subr.bf16.mxu0 0
    %2723 = vmatpush2.bf16.msra.mxu0 0
    %2724 = vmatprep.subr.bf16.mxu0 0
    %2725 = vmatpush2.bf16.msra.mxu0 0
    %2726 = vmatprep.subr.bf16.mxu0 0
    %2727 = vmatpush2.bf16.msra.mxu0 0
    %2728 = vmatprep.subr.bf16.mxu0 0
    %2729 = vmatpush2.bf16.msra.mxu0 0
    %2730 = vmatprep.mubr.bf16.mxu0 0
    %2731 = vmatmul.mubr.bf16.gmra.mxu0 %v2595
    %v2732 = vpop.f32.mrf.mxu0
    %v2733 = vadd.f32 %v2648, %v2732
    %v2734 = vpop.f32.mrf.mxu0
    %v2735 = vpop.f32.mrf.mxu0
    %v2736 = vadd.f32 %v2648, %v2735
    %v2737 = vpop.f32.mrf.mxu0
    %2738 = vmatprep.mubr.bf16.mxu0 0
    %2739 = vmatmul.mubr.bf16.gmra.mxu0 %v2596
    %v2740 = vpop.f32.mrf.mxu0
    %v2741 = vadd.f32 %v2648, %v2740
    %v2742 = vpop.f32.mrf.mxu0
    %v2743 = vpop.f32.mrf.mxu0
    %v2744 = vadd.f32 %v2648, %v2743
    %v2745 = vpop.f32.mrf.mxu0
    %2746 = vmatprep.mubr.bf16.mxu0 0
    %2747 = vmatmul.mubr.bf16.gmra.mxu0 %v2597
    %v2748 = vpop.f32.mrf.mxu0
    %v2749 = vadd.f32 %v2648, %v2748
    %v2750 = vpop.f32.mrf.mxu0
    %v2751 = vpop.f32.mrf.mxu0
    %v2752 = vadd.f32 %v2648, %v2751
    %v2753 = vpop.f32.mrf.mxu0
    %2754 = vmatprep.mubr.bf16.mxu0 0
    %2755 = vmatmul.mubr.bf16.gmra.mxu0 %v2598
    %v2756 = vpop.f32.mrf.mxu0
    %v2757 = vadd.f32 %v2648, %v2756
    %v2758 = vpop.f32.mrf.mxu0
    %v2759 = vpop.f32.mrf.mxu0
    %v2760 = vadd.f32 %v2648, %v2759
    %v2761 = vpop.f32.mrf.mxu0
    %2762 = vmatprep.mubr.bf16.mxu0 0
    %2763 = vmatmul.mubr.bf16.gmra.mxu0 %v2599
    %v2764 = vpop.f32.mrf.mxu0
    %v2765 = vadd.f32 %v2648, %v2764
    %v2766 = vpop.f32.mrf.mxu0
    %v2767 = vpop.f32.mrf.mxu0
    %v2768 = vadd.f32 %v2648, %v2767
    %v2769 = vpop.f32.mrf.mxu0
    %2770 = vmatprep.mubr.bf16.mxu0 0
    %2771 = vmatmul.mubr.bf16.gmra.mxu0 %v2600
    %v2772 = vpop.f32.mrf.mxu0
    %v2773 = vadd.f32 %v2648, %v2772
    %v2774 = vpop.f32.mrf.mxu0
    %v2775 = vpop.f32.mrf.mxu0
    %v2776 = vadd.f32 %v2648, %v2775
    %v2777 = vpop.f32.mrf.mxu0
    %2778 = vmatprep.mubr.bf16.mxu0 0
    %2779 = vmatmul.mubr.bf16.gmra.mxu0 %v2601
    %v2780 = vpop.f32.mrf.mxu0
    %v2781 = vadd.f32 %v2648, %v2780
    %v2782 = vpop.f32.mrf.mxu0
    %v2783 = vpop.f32.mrf.mxu0
    %v2784 = vadd.f32 %v2648, %v2783
    %v2785 = vpop.f32.mrf.mxu0
    %2786 = vmatprep.mubr.bf16.mxu0 0
    %2787 = vmatmul.mubr.bf16.gmra.mxu0 %v2602
    %v2788 = vpop.f32.mrf.mxu0
    %v2789 = vadd.f32 %v2648, %v2788
    %v2790 = vpop.f32.mrf.mxu0
    %v2791 = vpop.f32.mrf.mxu0
    %v2792 = vadd.f32 %v2648, %v2791
    %v2793 = vpop.f32.mrf.mxu0
    %2794 = vmatprep.mubr.bf16.mxu0 0
    %2795 = vmatmul.mubr.bf16.gmra.mxu0 %v2603
    %v2796 = vpop.f32.mrf.mxu0
    %v2797 = vadd.f32 %v2648, %v2796
    %v2798 = vpop.f32.mrf.mxu0
    %v2799 = vpop.f32.mrf.mxu0
    %v2800 = vadd.f32 %v2648, %v2799
    %v2801 = vpop.f32.mrf.mxu0
    %2802 = vmatprep.mubr.bf16.mxu0 0
    %2803 = vmatmul.mubr.bf16.gmra.mxu0 %v2604
    %v2804 = vpop.f32.mrf.mxu0
    %v2805 = vadd.f32 %v2648, %v2804
    %v2806 = vpop.f32.mrf.mxu0
    %v2807 = vpop.f32.mrf.mxu0
    %v2808 = vadd.f32 %v2648, %v2807
    %v2809 = vpop.f32.mrf.mxu0
    %2810 = vmatprep.mubr.bf16.mxu0 0
    %2811 = vmatmul.mubr.bf16.gmra.mxu0 %v2605
    %v2812 = vpop.f32.mrf.mxu0
    %v2813 = vadd.f32 %v2648, %v2812
    %v2814 = vpop.f32.mrf.mxu0
    %v2815 = vpop.f32.mrf.mxu0
    %v2816 = vadd.f32 %v2648, %v2815
    %v2817 = vpop.f32.mrf.mxu0
    %2818 = vmatprep.mubr.bf16.mxu0 0
    %2819 = vmatmul.mubr.bf16.gmra.mxu0 %v2606
    %v2820 = vpop.f32.mrf.mxu0
    %v2821 = vadd.f32 %v2648, %v2820
    %v2822 = vpop.f32.mrf.mxu0
    %v2823 = vpop.f32.mrf.mxu0
    %v2824 = vadd.f32 %v2648, %v2823
    %v2825 = vpop.f32.mrf.mxu0
    %2826 = vmatprep.mubr.bf16.mxu0 0
    %2827 = vmatmul.mubr.bf16.gmra.mxu0 %v2607
    %v2828 = vpop.f32.mrf.mxu0
    %v2829 = vadd.f32 %v2648, %v2828
    %v2830 = vpop.f32.mrf.mxu0
    %v2831 = vpop.f32.mrf.mxu0
    %v2832 = vadd.f32 %v2648, %v2831
    %v2833 = vpop.f32.mrf.mxu0
    %2834 = vmatprep.mubr.bf16.mxu0 0
    %2835 = vmatmul.mubr.bf16.gmra.mxu0 %v2608
    %v2836 = vpop.f32.mrf.mxu0
    %v2837 = vadd.f32 %v2648, %v2836
    %v2838 = vpop.f32.mrf.mxu0
    %v2839 = vpop.f32.mrf.mxu0
    %v2840 = vadd.f32 %v2648, %v2839
    %v2841 = vpop.f32.mrf.mxu0
    %2842 = vmatprep.mubr.bf16.mxu0 0
    %2843 = vmatmul.mubr.bf16.gmra.mxu0 %v2609
    %v2844 = vpop.f32.mrf.mxu0
    %v2845 = vadd.f32 %v2648, %v2844
    %v2846 = vpop.f32.mrf.mxu0
    %v2847 = vpop.f32.mrf.mxu0
    %v2848 = vadd.f32 %v2648, %v2847
    %v2849 = vpop.f32.mrf.mxu0
    %2850 = vmatprep.mubr.bf16.mxu0 0
    %2851 = vmatmul.mubr.bf16.gmra.mxu0 %v2610
    %v2852 = vpop.f32.mrf.mxu0
    %v2853 = vadd.f32 %v2648, %v2852
    %v2854 = vpop.f32.mrf.mxu0
    %v2855 = vpop.f32.mrf.mxu0
    %v2856 = vadd.f32 %v2648, %v2855
    %v2857 = vpop.f32.mrf.mxu0
    %2858 = vmatprep.mubr.bf16.mxu0 0
    %2859 = vmatmul.mubr.bf16.gmra.mxu0 %v2611
    %v2860 = vpop.f32.mrf.mxu0
    %v2861 = vadd.f32 %v2648, %v2860
    %v2862 = vpop.f32.mrf.mxu0
    %v2863 = vpop.f32.mrf.mxu0
    %v2864 = vadd.f32 %v2648, %v2863
    %v2865 = vpop.f32.mrf.mxu0
    %2866 = vmatprep.mubr.bf16.mxu0 0
    %2867 = vmatmul.mubr.bf16.gmra.mxu0 %v2612
    %v2868 = vpop.f32.mrf.mxu0
    %v2869 = vadd.f32 %v2648, %v2868
    %v2870 = vpop.f32.mrf.mxu0
    %v2871 = vpop.f32.mrf.mxu0
    %v2872 = vadd.f32 %v2648, %v2871
    %v2873 = vpop.f32.mrf.mxu0
    %2874 = vmatprep.mubr.bf16.mxu0 0
    %2875 = vmatmul.mubr.bf16.gmra.mxu0 %v2613
    %v2876 = vpop.f32.mrf.mxu0
    %v2877 = vadd.f32 %v2648, %v2876
    %v2878 = vpop.f32.mrf.mxu0
    %v2879 = vpop.f32.mrf.mxu0
    %v2880 = vadd.f32 %v2648, %v2879
    %v2881 = vpop.f32.mrf.mxu0
    %2882 = vmatprep.mubr.bf16.mxu0 0
    %2883 = vmatmul.mubr.bf16.gmra.mxu0 %v2614
    %v2884 = vpop.f32.mrf.mxu0
    %v2885 = vadd.f32 %v2648, %v2884
    %v2886 = vpop.f32.mrf.mxu0
    %v2887 = vpop.f32.mrf.mxu0
    %v2888 = vadd.f32 %v2648, %v2887
    %v2889 = vpop.f32.mrf.mxu0
    %2890 = vmatprep.mubr.bf16.mxu0 0
    %2891 = vmatmul.mubr.bf16.gmra.mxu0 %v2615
    %v2892 = vpop.f32.mrf.mxu0
    %v2893 = vadd.f32 %v2648, %v2892
    %v2894 = vpop.f32.mrf.mxu0
    %v2895 = vpop.f32.mrf.mxu0
    %v2896 = vadd.f32 %v2648, %v2895
    %v2897 = vpop.f32.mrf.mxu0
    %2898 = vmatprep.mubr.bf16.mxu0 0
    %2899 = vmatmul.mubr.bf16.gmra.mxu0 %v2616
    %v2900 = vpop.f32.mrf.mxu0
    %v2901 = vadd.f32 %v2648, %v2900
    %v2902 = vpop.f32.mrf.mxu0
    %v2903 = vpop.f32.mrf.mxu0
    %v2904 = vadd.f32 %v2648, %v2903
    %v2905 = vpop.f32.mrf.mxu0
    %2906 = vmatprep.mubr.bf16.mxu0 0
    %2907 = vmatmul.mubr.bf16.gmra.mxu0 %v2617
    %v2908 = vpop.f32.mrf.mxu0
    %v2909 = vadd.f32 %v2648, %v2908
    %v2910 = vpop.f32.mrf.mxu0
    %v2911 = vpop.f32.mrf.mxu0
    %v2912 = vadd.f32 %v2648, %v2911
    %v2913 = vpop.f32.mrf.mxu0
    %2914 = vmatprep.mubr.bf16.mxu0 0
    %2915 = vmatmul.mubr.bf16.gmra.mxu0 %v2618
    %v2916 = vpop.f32.mrf.mxu0
    %v2917 = vadd.f32 %v2648, %v2916
    %v2918 = vpop.f32.mrf.mxu0
    %v2919 = vpop.f32.mrf.mxu0
    %v2920 = vadd.f32 %v2648, %v2919
    %v2921 = vpop.f32.mrf.mxu0
    %2922 = vmatprep.mubr.bf16.mxu0 0
    %2923 = vmatmul.mubr.bf16.gmra.mxu0 %v2619
    %v2924 = vpop.f32.mrf.mxu0
    %v2925 = vadd.f32 %v2648, %v2924
    %v2926 = vpop.f32.mrf.mxu0
    %v2927 = vpop.f32.mrf.mxu0
    %v2928 = vadd.f32 %v2648, %v2927
    %v2929 = vpop.f32.mrf.mxu0
    %2930 = vmatprep.mubr.bf16.mxu0 0
    %2931 = vmatmul.mubr.bf16.gmra.mxu0 %v2620
    %v2932 = vpop.f32.mrf.mxu0
    %v2933 = vadd.f32 %v2648, %v2932
    %v2934 = vpop.f32.mrf.mxu0
    %v2935 = vpop.f32.mrf.mxu0
    %v2936 = vadd.f32 %v2648, %v2935
    %v2937 = vpop.f32.mrf.mxu0
    %2938 = vmatprep.mubr.bf16.mxu0 0
    %2939 = vmatmul.mubr.bf16.gmra.mxu0 %v2621
    %v2940 = vpop.f32.mrf.mxu0
    %v2941 = vadd.f32 %v2648, %v2940
    %v2942 = vpop.f32.mrf.mxu0
    %v2943 = vpop.f32.mrf.mxu0
    %v2944 = vadd.f32 %v2648, %v2943
    %v2945 = vpop.f32.mrf.mxu0
    %2946 = vmatprep.mubr.bf16.mxu0 0
    %2947 = vmatmul.mubr.bf16.gmra.mxu0 %v2622
    %v2948 = vpop.f32.mrf.mxu0
    %v2949 = vadd.f32 %v2648, %v2948
    %v2950 = vpop.f32.mrf.mxu0
    %v2951 = vpop.f32.mrf.mxu0
    %v2952 = vadd.f32 %v2648, %v2951
    %v2953 = vpop.f32.mrf.mxu0
    %2954 = vmatprep.mubr.bf16.mxu0 0
    %2955 = vmatmul.mubr.bf16.gmra.mxu0 %v2623
    %v2956 = vpop.f32.mrf.mxu0
    %v2957 = vadd.f32 %v2648, %v2956
    %v2958 = vpop.f32.mrf.mxu0
    %v2959 = vpop.f32.mrf.mxu0
    %v2960 = vadd.f32 %v2648, %v2959
    %v2961 = vpop.f32.mrf.mxu0
    %2962 = vmatprep.mubr.bf16.mxu0 0
    %2963 = vmatmul.mubr.bf16.gmra.mxu0 %v2624
    %v2964 = vpop.f32.mrf.mxu0
    %v2965 = vadd.f32 %v2648, %v2964
    %v2966 = vpop.f32.mrf.mxu0
    %v2967 = vpop.f32.mrf.mxu0
    %v2968 = vadd.f32 %v2648, %v2967
    %v2969 = vpop.f32.mrf.mxu0
    %2970 = vmatprep.mubr.bf16.mxu0 0
    %2971 = vmatmul.mubr.bf16.gmra.mxu0 %v2625
    %v2972 = vpop.f32.mrf.mxu0
    %v2973 = vadd.f32 %v2648, %v2972
    %v2974 = vpop.f32.mrf.mxu0
    %v2975 = vpop.f32.mrf.mxu0
    %v2976 = vadd.f32 %v2648, %v2975
    %v2977 = vpop.f32.mrf.mxu0
    %2978 = vmatprep.mubr.bf16.mxu0 0
    %2979 = vmatmul.mubr.bf16.gmra.mxu0 %v2626
    %v2980 = vpop.f32.mrf.mxu0
    %v2981 = vadd.f32 %v2648, %v2980
    %v2982 = vpop.f32.mrf.mxu0
    %v2983 = vpop.f32.mrf.mxu0
    %v2984 = vadd.f32 %v2648, %v2983
    %v2985 = vpop.f32.mrf.mxu0
    %2986 = vdwg.mxu0
    %v2987 = vtanh.pop %v2733
    %v2988 = vtanh.pop %v2736
    %v2989 = vtanh.pop %v2741
    %v2990 = vtanh.pop %v2744
    %v2991 = vtanh.pop %v2749
    %v2992 = vtanh.pop %v2752
    %v2993 = vtanh.pop %v2757
    %v2994 = vtanh.pop %v2760
    %v2995 = vtanh.pop %v2765
    %v2996 = vtanh.pop %v2768
    %v2997 = vtanh.pop %v2773
    %v2998 = vtanh.pop %v2776
    %v2999 = vtanh.pop %v2781
    %v3000 = vtanh.pop %v2784
    %v3001 = vtanh.pop %v2789
    %v3002 = vtanh.pop %v2792
    %v3003 = vtanh.pop %v2797
    %v3004 = vtanh.pop %v2800
    %v3005 = vtanh.pop %v2805
    %v3006 = vtanh.pop %v2808
    %v3007 = vtanh.pop %v2813
    %v3008 = vtanh.pop %v2816
    %v3009 = vtanh.pop %v2821
    %v3010 = vtanh.pop %v2824
    %v3011 = vtanh.pop %v2829
    %v3012 = vtanh.pop %v2832
    %v3013 = vtanh.pop %v2837
    %v3014 = vtanh.pop %v2840
    %v3015 = vtanh.pop %v2845
    %v3016 = vtanh.pop %v2848
    %v3017 = vtanh.pop %v2853
    %v3018 = vtanh.pop %v2856
    %v3019 = vtanh.pop %v2861
    %v3020 = vtanh.pop %v2864
    %v3021 = vtanh.pop %v2869
    %v3022 = vtanh.pop %v2872
    %v3023 = vtanh.pop %v2877
    %v3024 = vtanh.pop %v2880
    %v3025 = vtanh.pop %v2885
    %v3026 = vtanh.pop %v2888
    %v3027 = vtanh.pop %v2893
    %v3028 = vtanh.pop %v2896
    %v3029 = vtanh.pop %v2901
    %v3030 = vtanh.pop %v2904
    %v3031 = vtanh.pop %v2909
    %v3032 = vtanh.pop %v2912
    %v3033 = vtanh.pop %v2917
    %v3034 = vtanh.pop %v2920
    %v3035 = vtanh.pop %v2925
    %v3036 = vtanh.pop %v2928
    %v3037 = vtanh.pop %v2933
    %v3038 = vtanh.pop %v2936
    %v3039 = vtanh.pop %v2941
    %v3040 = vtanh.pop %v2944
    %v3041 = vtanh.pop %v2949
    %v3042 = vtanh.pop %v2952
    %v3043 = vtanh.pop %v2957
    %v3044 = vtanh.pop %v2960
    %v3045 = vtanh.pop %v2965
    %v3046 = vtanh.pop %v2968
    %v3047 = vtanh.pop %v2973
    %v3048 = vtanh.pop %v2976
    %v3049 = vtanh.pop %v2981
    %v3050 = vtanh.pop %v2984
    %v3051 = vpack.c.bf16 %v2988, %v2987
    %v3052 = vpack.c.bf16 %v2990, %v2989
    %v3053 = vpack.c.bf16 %v2992, %v2991
    %v3054 = vpack.c.bf16 %v2994, %v2993
    %v3055 = vpack.c.bf16 %v2996, %v2995
    %v3056 = vpack.c.bf16 %v2998, %v2997
    %v3057 = vpack.c.bf16 %v3000, %v2999
    %v3058 = vpack.c.bf16 %v3002, %v3001
    %v3059 = vpack.c.bf16 %v3004, %v3003
    %v3060 = vpack.c.bf16 %v3006, %v3005
    %v3061 = vpack.c.bf16 %v3008, %v3007
    %v3062 = vpack.c.bf16 %v3010, %v3009
    %v3063 = vpack.c.bf16 %v3012, %v3011
    %v3064 = vpack.c.bf16 %v3014, %v3013
    %v3065 = vpack.c.bf16 %v3016, %v3015
    %v3066 = vpack.c.bf16 %v3018, %v3017
    %v3067 = vpack.c.bf16 %v3020, %v3019
    %v3068 = vpack.c.bf16 %v3022, %v3021
    %v3069 = vpack.c.bf16 %v3024, %v3023
    %v3070 = vpack.c.bf16 %v3026, %v3025
    %v3071 = vpack.c.bf16 %v3028, %v3027
    %v3072 = vpack.c.bf16 %v3030, %v3029
    %v3073 = vpack.c.bf16 %v3032, %v3031
    %v3074 = vpack.c.bf16 %v3034, %v3033
    %v3075 = vpack.c.bf16 %v3036, %v3035
    %v3076 = vpack.c.bf16 %v3038, %v3037
    %v3077 = vpack.c.bf16 %v3040, %v3039
    %v3078 = vpack.c.bf16 %v3042, %v3041
    %v3079 = vpack.c.bf16 %v3044, %v3043
    %v3080 = vpack.c.bf16 %v3046, %v3045
    %v3081 = vpack.c.bf16 %v3048, %v3047
    %v3082 = vpack.c.bf16 %v3050, %v3049
    %v3083 = vld [vmem:[%s13] sm:$0xf]
    %v3084 = vld [vmem:[%s13 + $0x4] sm:$0xf]
    %v3085 = vld [vmem:[%s13 + $0x8] sm:$0xf]
    %v3086 = vld [vmem:[%s13 + $0xc] sm:$0xf]
    %v3087 = vld [vmem:[%s13 + $0x10] sm:$0xf]
    %v3088 = vld [vmem:[%s13 + $0x14] sm:$0xf]
    %v3089 = vld [vmem:[%s13 + $0x18] sm:$0xf]
    %v3090 = vld [vmem:[%s13 + $0x1c] sm:$0xf]
    %v3091 = vld [vmem:[%s13 + $0x20] sm:$0xf]
    %v3092 = vld [vmem:[%s13 + $0x24] sm:$0xf]
    %v3093 = vld [vmem:[%s13 + $0x28] sm:$0xf]
    %v3094 = vld [vmem:[%s13 + $0x2c] sm:$0xf]
    %v3095 = vld [vmem:[%s13 + $0x30] sm:$0xf]
    %v3096 = vld [vmem:[%s13 + $0x34] sm:$0xf]
    %v3097 = vld [vmem:[%s13 + $0x38] sm:$0xf]
    %v3098 = vld [vmem:[%s13 + $0x3c] sm:$0xf]
    %v3099 = vld [vmem:[%s14] sm:$0x1]
    %v3101 = vlaneseq
    %v3102 = vshrl.u32 %v3101, 7
    %v3103 = vsub.s32 0, %v3102
    %v3104 = vrot.slane %v3099, %v3103
    %v3122 = vunpack.c.l.b16 %v3083
    %v3123 = vunpack.c.l.b16 %v3084
    %v3124 = vunpack.c.l.b16 %v3085
    %v3125 = vunpack.c.l.b16 %v3086
    %v3126 = vunpack.c.l.b16 %v3087
    %v3127 = vunpack.c.l.b16 %v3088
    %v3128 = vunpack.c.l.b16 %v3089
    %v3129 = vunpack.c.l.b16 %v3090
    %v3130 = vunpack.c.l.b16 %v3091
    %v3131 = vunpack.c.l.b16 %v3092
    %v3132 = vunpack.c.l.b16 %v3093
    %v3133 = vunpack.c.l.b16 %v3094
    %v3134 = vunpack.c.l.b16 %v3095
    %v3135 = vunpack.c.l.b16 %v3096
    %v3136 = vunpack.c.l.b16 %v3097
    %v3137 = vunpack.c.l.b16 %v3098
    %v3138 = vpack.c.b16 %v3123, %v3122
    %v3139 = vpack.c.b16 %v3125, %v3124
    %v3140 = vpack.c.b16 %v3127, %v3126
    %v3141 = vpack.c.b16 %v3129, %v3128
    %v3142 = vpack.c.b16 %v3131, %v3130
    %v3143 = vpack.c.b16 %v3133, %v3132
    %v3144 = vpack.c.b16 %v3135, %v3134
    %v3145 = vpack.c.b16 %v3137, %v3136
    %3154 = vmatprep.subr.bf16.mxu0 0
    %3155 = vmatpush1.bf16.msra.mxu0 %v3145
    %3156 = vmatprep.subr.bf16.mxu0 0
    %3157 = vmatpush1.bf16.msra.mxu0 %v3144
    %3158 = vmatprep.subr.bf16.mxu0 0
    %3159 = vmatpush1.bf16.msra.mxu0 %v3143
    %3160 = vmatprep.subr.bf16.mxu0 0
    %3161 = vmatpush1.bf16.msra.mxu0 %v3142
    %3162 = vmatprep.subr.bf16.mxu0 0
    %3163 = vmatpush1.bf16.msra.mxu0 %v3141
    %3164 = vmatprep.subr.bf16.mxu0 0
    %3165 = vmatpush1.bf16.msra.mxu0 %v3140
    %3166 = vmatprep.subr.bf16.mxu0 0
    %3167 = vmatpush1.bf16.msra.mxu0 %v3139
    %3168 = vmatprep.subr.bf16.mxu0 0
    %3169 = vmatpush1.bf16.msra.mxu0 %v3138
    %3170 = vmatprep.subr.bf16.mxu0 0
    %3171 = vmatpush2.bf16.msra.mxu0 0
    %3172 = vmatprep.subr.bf16.mxu0 0
    %3173 = vmatpush2.bf16.msra.mxu0 0
    %3174 = vmatprep.subr.bf16.mxu0 0
    %3175 = vmatpush2.bf16.msra.mxu0 0
    %3176 = vmatprep.subr.bf16.mxu0 0
    %3177 = vmatpush2.bf16.msra.mxu0 0
    %3178 = vmatprep.subr.bf16.mxu0 0
    %3179 = vmatpush2.bf16.msra.mxu0 0
    %3180 = vmatprep.subr.bf16.mxu0 0
    %3181 = vmatpush2.bf16.msra.mxu0 0
    %3182 = vmatprep.subr.bf16.mxu0 0
    %3183 = vmatpush2.bf16.msra.mxu0 0
    %3184 = vmatprep.subr.bf16.mxu0 0
    %3185 = vmatpush2.bf16.msra.mxu0 0
    %3186 = vmatprep.mubr.bf16.mxu0 0
    %3187 = vmatmul.mubr.bf16.gmra.mxu0 %v3051
    %v3188 = vpop.f32.mrf.mxu0
    %v3189 = vadd.f32 %v3104, %v3188
    %v3190 = vpop.f32.mrf.mxu0
    %v3191 = vpop.f32.mrf.mxu0
    %v3192 = vadd.f32 %v3104, %v3191
    %v3193 = vpop.f32.mrf.mxu0
    %3194 = vmatprep.mubr.bf16.mxu0 0
    %3195 = vmatmul.mubr.bf16.gmra.mxu0 %v3052
    %v3196 = vpop.f32.mrf.mxu0
    %v3197 = vadd.f32 %v3104, %v3196
    %v3198 = vpop.f32.mrf.mxu0
    %v3199 = vpop.f32.mrf.mxu0
    %v3200 = vadd.f32 %v3104, %v3199
    %v3201 = vpop.f32.mrf.mxu0
    %3202 = vmatprep.mubr.bf16.mxu0 0
    %3203 = vmatmul.mubr.bf16.gmra.mxu0 %v3053
    %v3204 = vpop.f32.mrf.mxu0
    %v3205 = vadd.f32 %v3104, %v3204
    %v3206 = vpop.f32.mrf.mxu0
    %v3207 = vpop.f32.mrf.mxu0
    %v3208 = vadd.f32 %v3104, %v3207
    %v3209 = vpop.f32.mrf.mxu0
    %3210 = vmatprep.mubr.bf16.mxu0 0
    %3211 = vmatmul.mubr.bf16.gmra.mxu0 %v3054
    %v3212 = vpop.f32.mrf.mxu0
    %v3213 = vadd.f32 %v3104, %v3212
    %v3214 = vpop.f32.mrf.mxu0
    %v3215 = vpop.f32.mrf.mxu0
    %v3216 = vadd.f32 %v3104, %v3215
    %v3217 = vpop.f32.mrf.mxu0
    %3218 = vmatprep.mubr.bf16.mxu0 0
    %3219 = vmatmul.mubr.bf16.gmra.mxu0 %v3055
    %v3220 = vpop.f32.mrf.mxu0
    %v3221 = vadd.f32 %v3104, %v3220
    %v3222 = vpop.f32.mrf.mxu0
    %v3223 = vpop.f32.mrf.mxu0
    %v3224 = vadd.f32 %v3104, %v3223
    %v3225 = vpop.f32.mrf.mxu0
    %3226 = vmatprep.mubr.bf16.mxu0 0
    %3227 = vmatmul.mubr.bf16.gmra.mxu0 %v3056
    %v3228 = vpop.f32.mrf.mxu0
    %v3229 = vadd.f32 %v3104, %v3228
    %v3230 = vpop.f32.mrf.mxu0
    %v3231 = vpop.f32.mrf.mxu0
    %v3232 = vadd.f32 %v3104, %v3231
    %v3233 = vpop.f32.mrf.mxu0
    %3234 = vmatprep.mubr.bf16.mxu0 0
    %3235 = vmatmul.mubr.bf16.gmra.mxu0 %v3057
    %v3236 = vpop.f32.mrf.mxu0
    %v3237 = vadd.f32 %v3104, %v3236
    %v3238 = vpop.f32.mrf.mxu0
    %v3239 = vpop.f32.mrf.mxu0
    %v3240 = vadd.f32 %v3104, %v3239
    %v3241 = vpop.f32.mrf.mxu0
    %3242 = vmatprep.mubr.bf16.mxu0 0
    %3243 = vmatmul.mubr.bf16.gmra.mxu0 %v3058
    %v3244 = vpop.f32.mrf.mxu0
    %v3245 = vadd.f32 %v3104, %v3244
    %v3246 = vpop.f32.mrf.mxu0
    %v3247 = vpop.f32.mrf.mxu0
    %v3248 = vadd.f32 %v3104, %v3247
    %v3249 = vpop.f32.mrf.mxu0
    %3250 = vmatprep.mubr.bf16.mxu0 0
    %3251 = vmatmul.mubr.bf16.gmra.mxu0 %v3059
    %v3252 = vpop.f32.mrf.mxu0
    %v3253 = vadd.f32 %v3104, %v3252
    %v3254 = vpop.f32.mrf.mxu0
    %v3255 = vpop.f32.mrf.mxu0
    %v3256 = vadd.f32 %v3104, %v3255
    %v3257 = vpop.f32.mrf.mxu0
    %3258 = vmatprep.mubr.bf16.mxu0 0
    %3259 = vmatmul.mubr.bf16.gmra.mxu0 %v3060
    %v3260 = vpop.f32.mrf.mxu0
    %v3261 = vadd.f32 %v3104, %v3260
    %v3262 = vpop.f32.mrf.mxu0
    %v3263 = vpop.f32.mrf.mxu0
    %v3264 = vadd.f32 %v3104, %v3263
    %v3265 = vpop.f32.mrf.mxu0
    %3266 = vmatprep.mubr.bf16.mxu0 0
    %3267 = vmatmul.mubr.bf16.gmra.mxu0 %v3061
    %v3268 = vpop.f32.mrf.mxu0
    %v3269 = vadd.f32 %v3104, %v3268
    %v3270 = vpop.f32.mrf.mxu0
    %v3271 = vpop.f32.mrf.mxu0
    %v3272 = vadd.f32 %v3104, %v3271
    %v3273 = vpop.f32.mrf.mxu0
    %3274 = vmatprep.mubr.bf16.mxu0 0
    %3275 = vmatmul.mubr.bf16.gmra.mxu0 %v3062
    %v3276 = vpop.f32.mrf.mxu0
    %v3277 = vadd.f32 %v3104, %v3276
    %v3278 = vpop.f32.mrf.mxu0
    %v3279 = vpop.f32.mrf.mxu0
    %v3280 = vadd.f32 %v3104, %v3279
    %v3281 = vpop.f32.mrf.mxu0
    %3282 = vmatprep.mubr.bf16.mxu0 0
    %3283 = vmatmul.mubr.bf16.gmra.mxu0 %v3063
    %v3284 = vpop.f32.mrf.mxu0
    %v3285 = vadd.f32 %v3104, %v3284
    %v3286 = vpop.f32.mrf.mxu0
    %v3287 = vpop.f32.mrf.mxu0
    %v3288 = vadd.f32 %v3104, %v3287
    %v3289 = vpop.f32.mrf.mxu0
    %3290 = vmatprep.mubr.bf16.mxu0 0
    %3291 = vmatmul.mubr.bf16.gmra.mxu0 %v3064
    %v3292 = vpop.f32.mrf.mxu0
    %v3293 = vadd.f32 %v3104, %v3292
    %v3294 = vpop.f32.mrf.mxu0
    %v3295 = vpop.f32.mrf.mxu0
    %v3296 = vadd.f32 %v3104, %v3295
    %v3297 = vpop.f32.mrf.mxu0
    %3298 = vmatprep.mubr.bf16.mxu0 0
    %3299 = vmatmul.mubr.bf16.gmra.mxu0 %v3065
    %v3300 = vpop.f32.mrf.mxu0
    %v3301 = vadd.f32 %v3104, %v3300
    %v3302 = vpop.f32.mrf.mxu0
    %v3303 = vpop.f32.mrf.mxu0
    %v3304 = vadd.f32 %v3104, %v3303
    %v3305 = vpop.f32.mrf.mxu0
    %3306 = vmatprep.mubr.bf16.mxu0 0
    %3307 = vmatmul.mubr.bf16.gmra.mxu0 %v3066
    %v3308 = vpop.f32.mrf.mxu0
    %v3309 = vadd.f32 %v3104, %v3308
    %v3310 = vpop.f32.mrf.mxu0
    %v3311 = vpop.f32.mrf.mxu0
    %v3312 = vadd.f32 %v3104, %v3311
    %v3313 = vpop.f32.mrf.mxu0
    %3314 = vmatprep.mubr.bf16.mxu0 0
    %3315 = vmatmul.mubr.bf16.gmra.mxu0 %v3067
    %v3316 = vpop.f32.mrf.mxu0
    %v3317 = vadd.f32 %v3104, %v3316
    %v3318 = vpop.f32.mrf.mxu0
    %v3319 = vpop.f32.mrf.mxu0
    %v3320 = vadd.f32 %v3104, %v3319
    %v3321 = vpop.f32.mrf.mxu0
    %3322 = vmatprep.mubr.bf16.mxu0 0
    %3323 = vmatmul.mubr.bf16.gmra.mxu0 %v3068
    %v3324 = vpop.f32.mrf.mxu0
    %v3325 = vadd.f32 %v3104, %v3324
    %v3326 = vpop.f32.mrf.mxu0
    %v3327 = vpop.f32.mrf.mxu0
    %v3328 = vadd.f32 %v3104, %v3327
    %v3329 = vpop.f32.mrf.mxu0
    %3330 = vmatprep.mubr.bf16.mxu0 0
    %3331 = vmatmul.mubr.bf16.gmra.mxu0 %v3069
    %v3332 = vpop.f32.mrf.mxu0
    %v3333 = vadd.f32 %v3104, %v3332
    %v3334 = vpop.f32.mrf.mxu0
    %v3335 = vpop.f32.mrf.mxu0
    %v3336 = vadd.f32 %v3104, %v3335
    %v3337 = vpop.f32.mrf.mxu0
    %3338 = vmatprep.mubr.bf16.mxu0 0
    %3339 = vmatmul.mubr.bf16.gmra.mxu0 %v3070
    %v3340 = vpop.f32.mrf.mxu0
    %v3341 = vadd.f32 %v3104, %v3340
    %v3342 = vpop.f32.mrf.mxu0
    %v3343 = vpop.f32.mrf.mxu0
    %v3344 = vadd.f32 %v3104, %v3343
    %v3345 = vpop.f32.mrf.mxu0
    %3346 = vmatprep.mubr.bf16.mxu0 0
    %3347 = vmatmul.mubr.bf16.gmra.mxu0 %v3071
    %v3348 = vpop.f32.mrf.mxu0
    %v3349 = vadd.f32 %v3104, %v3348
    %v3350 = vpop.f32.mrf.mxu0
    %v3351 = vpop.f32.mrf.mxu0
    %v3352 = vadd.f32 %v3104, %v3351
    %v3353 = vpop.f32.mrf.mxu0
    %3354 = vmatprep.mubr.bf16.mxu0 0
    %3355 = vmatmul.mubr.bf16.gmra.mxu0 %v3072
    %v3356 = vpop.f32.mrf.mxu0
    %v3357 = vadd.f32 %v3104, %v3356
    %v3358 = vpop.f32.mrf.mxu0
    %v3359 = vpop.f32.mrf.mxu0
    %v3360 = vadd.f32 %v3104, %v3359
    %v3361 = vpop.f32.mrf.mxu0
    %3362 = vmatprep.mubr.bf16.mxu0 0
    %3363 = vmatmul.mubr.bf16.gmra.mxu0 %v3073
    %v3364 = vpop.f32.mrf.mxu0
    %v3365 = vadd.f32 %v3104, %v3364
    %v3366 = vpop.f32.mrf.mxu0
    %v3367 = vpop.f32.mrf.mxu0
    %v3368 = vadd.f32 %v3104, %v3367
    %v3369 = vpop.f32.mrf.mxu0
    %3370 = vmatprep.mubr.bf16.mxu0 0
    %3371 = vmatmul.mubr.bf16.gmra.mxu0 %v3074
    %v3372 = vpop.f32.mrf.mxu0
    %v3373 = vadd.f32 %v3104, %v3372
    %v3374 = vpop.f32.mrf.mxu0
    %v3375 = vpop.f32.mrf.mxu0
    %v3376 = vadd.f32 %v3104, %v3375
    %v3377 = vpop.f32.mrf.mxu0
    %3378 = vmatprep.mubr.bf16.mxu0 0
    %3379 = vmatmul.mubr.bf16.gmra.mxu0 %v3075
    %v3380 = vpop.f32.mrf.mxu0
    %v3381 = vadd.f32 %v3104, %v3380
    %v3382 = vpop.f32.mrf.mxu0
    %v3383 = vpop.f32.mrf.mxu0
    %v3384 = vadd.f32 %v3104, %v3383
    %v3385 = vpop.f32.mrf.mxu0
    %3386 = vmatprep.mubr.bf16.mxu0 0
    %3387 = vmatmul.mubr.bf16.gmra.mxu0 %v3076
    %v3388 = vpop.f32.mrf.mxu0
    %v3389 = vadd.f32 %v3104, %v3388
    %v3390 = vpop.f32.mrf.mxu0
    %v3391 = vpop.f32.mrf.mxu0
    %v3392 = vadd.f32 %v3104, %v3391
    %v3393 = vpop.f32.mrf.mxu0
    %3394 = vmatprep.mubr.bf16.mxu0 0
    %3395 = vmatmul.mubr.bf16.gmra.mxu0 %v3077
    %v3396 = vpop.f32.mrf.mxu0
    %v3397 = vadd.f32 %v3104, %v3396
    %v3398 = vpop.f32.mrf.mxu0
    %v3399 = vpop.f32.mrf.mxu0
    %v3400 = vadd.f32 %v3104, %v3399
    %v3401 = vpop.f32.mrf.mxu0
    %3402 = vmatprep.mubr.bf16.mxu0 0
    %3403 = vmatmul.mubr.bf16.gmra.mxu0 %v3078
    %v3404 = vpop.f32.mrf.mxu0
    %v3405 = vadd.f32 %v3104, %v3404
    %v3406 = vpop.f32.mrf.mxu0
    %v3407 = vpop.f32.mrf.mxu0
    %v3408 = vadd.f32 %v3104, %v3407
    %v3409 = vpop.f32.mrf.mxu0
    %3410 = vmatprep.mubr.bf16.mxu0 0
    %3411 = vmatmul.mubr.bf16.gmra.mxu0 %v3079
    %v3412 = vpop.f32.mrf.mxu0
    %v3413 = vadd.f32 %v3104, %v3412
    %v3414 = vpop.f32.mrf.mxu0
    %v3415 = vpop.f32.mrf.mxu0
    %v3416 = vadd.f32 %v3104, %v3415
    %v3417 = vpop.f32.mrf.mxu0
    %3418 = vmatprep.mubr.bf16.mxu0 0
    %3419 = vmatmul.mubr.bf16.gmra.mxu0 %v3080
    %v3420 = vpop.f32.mrf.mxu0
    %v3421 = vadd.f32 %v3104, %v3420
    %v3422 = vpop.f32.mrf.mxu0
    %v3423 = vpop.f32.mrf.mxu0
    %v3424 = vadd.f32 %v3104, %v3423
    %v3425 = vpop.f32.mrf.mxu0
    %3426 = vmatprep.mubr.bf16.mxu0 0
    %3427 = vmatmul.mubr.bf16.gmra.mxu0 %v3081
    %v3428 = vpop.f32.mrf.mxu0
    %v3429 = vadd.f32 %v3104, %v3428
    %v3430 = vpop.f32.mrf.mxu0
    %v3431 = vpop.f32.mrf.mxu0
    %v3432 = vadd.f32 %v3104, %v3431
    %v3433 = vpop.f32.mrf.mxu0
    %3434 = vmatprep.mubr.bf16.mxu0 0
    %3435 = vmatmul.mubr.bf16.gmra.mxu0 %v3082
    %v3436 = vpop.f32.mrf.mxu0
    %v3437 = vadd.f32 %v3104, %v3436
    %v3438 = vpop.f32.mrf.mxu0
    %v3439 = vpop.f32.mrf.mxu0
    %v3440 = vadd.f32 %v3104, %v3439
    %v3441 = vpop.f32.mrf.mxu0
    %3442 = vdwg.mxu0
    %v3443 = vld [vmem:[%s2] sm:$0xff]
    %v3444 = vld [vmem:[%s2 + $0x8] sm:$0xff]
    %v3445 = vld [vmem:[%s2 + $0x10] sm:$0xff]
    %v3446 = vld [vmem:[%s2 + $0x18] sm:$0xff]
    %v3447 = vld [vmem:[%s2 + $0x20] sm:$0xff]
    %v3448 = vld [vmem:[%s2 + $0x28] sm:$0xff]
    %v3449 = vld [vmem:[%s2 + $0x30] sm:$0xff]
    %v3450 = vld [vmem:[%s2 + $0x38] sm:$0xff]
    %v3451 = vld [vmem:[%s2 + $0x40] sm:$0xff]
    %v3452 = vld [vmem:[%s2 + $0x48] sm:$0xff]
    %v3453 = vld [vmem:[%s2 + $0x50] sm:$0xff]
    %v3454 = vld [vmem:[%s2 + $0x58] sm:$0xff]
    %v3455 = vld [vmem:[%s2 + $0x60] sm:$0xff]
    %v3456 = vld [vmem:[%s2 + $0x68] sm:$0xff]
    %v3457 = vld [vmem:[%s2 + $0x70] sm:$0xff]
    %v3458 = vld [vmem:[%s2 + $0x78] sm:$0xff]
    %v3459 = vld [vmem:[%s2 + $0x80] sm:$0xff]
    %v3460 = vld [vmem:[%s2 + $0x88] sm:$0xff]
    %v3461 = vld [vmem:[%s2 + $0x90] sm:$0xff]
    %v3462 = vld [vmem:[%s2 + $0x98] sm:$0xff]
    %v3463 = vld [vmem:[%s2 + $0xa0] sm:$0xff]
    %v3464 = vld [vmem:[%s2 + $0xa8] sm:$0xff]
    %v3465 = vld [vmem:[%s2 + $0xb0] sm:$0xff]
    %v3466 = vld [vmem:[%s2 + $0xb8] sm:$0xff]
    %v3467 = vld [vmem:[%s2 + $0xc0] sm:$0xff]
    %v3468 = vld [vmem:[%s2 + $0xc8] sm:$0xff]
    %v3469 = vld [vmem:[%s2 + $0xd0] sm:$0xff]
    %v3470 = vld [vmem:[%s2 + $0xd8] sm:$0xff]
    %v3471 = vld [vmem:[%s2 + $0xe0] sm:$0xff]
    %v3472 = vld [vmem:[%s2 + $0xe8] sm:$0xff]
    %v3473 = vld [vmem:[%s2 + $0xf0] sm:$0xff]
    %v3474 = vld [vmem:[%s2 + $0xf8] sm:$0xff]
    %v3475 = vld [vmem:[%s2 + $0x100] sm:$0xff]
    %v3476 = vld [vmem:[%s2 + $0x108] sm:$0xff]
    %v3477 = vld [vmem:[%s2 + $0x110] sm:$0xff]
    %v3478 = vld [vmem:[%s2 + $0x118] sm:$0xff]
    %v3479 = vld [vmem:[%s2 + $0x120] sm:$0xff]
    %v3480 = vld [vmem:[%s2 + $0x128] sm:$0xff]
    %v3481 = vld [vmem:[%s2 + $0x130] sm:$0xff]
    %v3482 = vld [vmem:[%s2 + $0x138] sm:$0xff]
    %v3483 = vld [vmem:[%s2 + $0x140] sm:$0xff]
    %v3484 = vld [vmem:[%s2 + $0x148] sm:$0xff]
    %v3485 = vld [vmem:[%s2 + $0x150] sm:$0xff]
    %v3486 = vld [vmem:[%s2 + $0x158] sm:$0xff]
    %v3487 = vld [vmem:[%s2 + $0x160] sm:$0xff]
    %v3488 = vld [vmem:[%s2 + $0x168] sm:$0xff]
    %v3489 = vld [vmem:[%s2 + $0x170] sm:$0xff]
    %v3490 = vld [vmem:[%s2 + $0x178] sm:$0xff]
    %v3491 = vld [vmem:[%s2 + $0x180] sm:$0xff]
    %v3492 = vld [vmem:[%s2 + $0x188] sm:$0xff]
    %v3493 = vld [vmem:[%s2 + $0x190] sm:$0xff]
    %v3494 = vld [vmem:[%s2 + $0x198] sm:$0xff]
    %v3495 = vld [vmem:[%s2 + $0x1a0] sm:$0xff]
    %v3496 = vld [vmem:[%s2 + $0x1a8] sm:$0xff]
    %v3497 = vld [vmem:[%s2 + $0x1b0] sm:$0xff]
    %v3498 = vld [vmem:[%s2 + $0x1b8] sm:$0xff]
    %v3499 = vld [vmem:[%s2 + $0x1c0] sm:$0xff]
    %v3500 = vld [vmem:[%s2 + $0x1c8] sm:$0xff]
    %v3501 = vld [vmem:[%s2 + $0x1d0] sm:$0xff]
    %v3502 = vld [vmem:[%s2 + $0x1d8] sm:$0xff]
    %v3503 = vld [vmem:[%s2 + $0x1e0] sm:$0xff]
    %v3504 = vld [vmem:[%s2 + $0x1e8] sm:$0xff]
    %v3505 = vld [vmem:[%s2 + $0x1f0] sm:$0xff]
    %v3506 = vld [vmem:[%s2 + $0x1f8] sm:$0xff]
    %v3507 = vmul.f32 %v3189, 0.5
    %v3508 = vmul.f32 %v3192, 0.5
    %v3509 = vmul.f32 %v3197, 0.5
    %v3510 = vmul.f32 %v3200, 0.5
    %v3511 = vmul.f32 %v3205, 0.5
    %v3512 = vmul.f32 %v3208, 0.5
    %v3513 = vmul.f32 %v3213, 0.5
    %v3514 = vmul.f32 %v3216, 0.5
    %v3515 = vmul.f32 %v3221, 0.5
    %v3516 = vmul.f32 %v3224, 0.5
    %v3517 = vmul.f32 %v3229, 0.5
    %v3518 = vmul.f32 %v3232, 0.5
    %v3519 = vmul.f32 %v3237, 0.5
    %v3520 = vmul.f32 %v3240, 0.5
    %v3521 = vmul.f32 %v3245, 0.5
    %v3522 = vmul.f32 %v3248, 0.5
    %v3523 = vmul.f32 %v3253, 0.5
    %v3524 = vmul.f32 %v3256, 0.5
    %v3525 = vmul.f32 %v3261, 0.5
    %v3526 = vmul.f32 %v3264, 0.5
    %v3527 = vmul.f32 %v3269, 0.5
    %v3528 = vmul.f32 %v3272, 0.5
    %v3529 = vmul.f32 %v3277, 0.5
    %v3530 = vmul.f32 %v3280, 0.5
    %v3531 = vmul.f32 %v3285, 0.5
    %v3532 = vmul.f32 %v3288, 0.5
    %v3533 = vmul.f32 %v3293, 0.5
    %v3534 = vmul.f32 %v3296, 0.5
    %v3535 = vmul.f32 %v3301, 0.5
    %v3536 = vmul.f32 %v3304, 0.5
    %v3537 = vmul.f32 %v3309, 0.5
    %v3538 = vmul.f32 %v3312, 0.5
    %v3539 = vmul.f32 %v3317, 0.5
    %v3540 = vmul.f32 %v3320, 0.5
    %v3541 = vmul.f32 %v3325, 0.5
    %v3542 = vmul.f32 %v3328, 0.5
    %v3543 = vmul.f32 %v3333, 0.5
    %v3544 = vmul.f32 %v3336, 0.5
    %v3545 = vmul.f32 %v3341, 0.5
    %v3546 = vmul.f32 %v3344, 0.5
    %v3547 = vmul.f32 %v3349, 0.5
    %v3548 = vmul.f32 %v3352, 0.5
    %v3549 = vmul.f32 %v3357, 0.5
    %v3550 = vmul.f32 %v3360, 0.5
    %v3551 = vmul.f32 %v3365, 0.5
    %v3552 = vmul.f32 %v3368, 0.5
    %v3553 = vmul.f32 %v3373, 0.5
    %v3554 = vmul.f32 %v3376, 0.5
    %v3555 = vmul.f32 %v3381, 0.5
    %v3556 = vmul.f32 %v3384, 0.5
    %v3557 = vmul.f32 %v3389, 0.5
    %v3558 = vmul.f32 %v3392, 0.5
    %v3559 = vmul.f32 %v3397, 0.5
    %v3560 = vmul.f32 %v3400, 0.5
    %v3561 = vmul.f32 %v3405, 0.5
    %v3562 = vmul.f32 %v3408, 0.5
    %v3563 = vmul.f32 %v3413, 0.5
    %v3564 = vmul.f32 %v3416, 0.5
    %v3565 = vmul.f32 %v3421, 0.5
    %v3566 = vmul.f32 %v3424, 0.5
    %v3567 = vmul.f32 %v3429, 0.5
    %v3568 = vmul.f32 %v3432, 0.5
    %v3569 = vmul.f32 %v3437, 0.5
    %v3570 = vmul.f32 %v3440, 0.5
    %v3571 = vmul.f32 %v3507, 1.442695
    %v3572 = vpow.pop %v3571
    %v3573 = vmul.f32 %v3508, 1.442695
    %v3574 = vpow.pop %v3573
    %v3575 = vmul.f32 %v3509, 1.442695
    %v3576 = vpow.pop %v3575
    %v3577 = vmul.f32 %v3510, 1.442695
    %v3578 = vpow.pop %v3577
    %v3579 = vmul.f32 %v3511, 1.442695
    %v3580 = vpow.pop %v3579
    %v3581 = vmul.f32 %v3512, 1.442695
    %v3582 = vpow.pop %v3581
    %v3583 = vmul.f32 %v3513, 1.442695
    %v3584 = vpow.pop %v3583
    %v3585 = vmul.f32 %v3514, 1.442695
    %v3586 = vpow.pop %v3585
    %v3587 = vmul.f32 %v3515, 1.442695
    %v3588 = vpow.pop %v3587
    %v3589 = vmul.f32 %v3516, 1.442695
    %v3590 = vpow.pop %v3589
    %v3591 = vmul.f32 %v3517, 1.442695
    %v3592 = vpow.pop %v3591
    %v3593 = vmul.f32 %v3518, 1.442695
    %v3594 = vpow.pop %v3593
    %v3595 = vmul.f32 %v3519, 1.442695
    %v3596 = vpow.pop %v3595
    %v3597 = vmul.f32 %v3520, 1.442695
    %v3598 = vpow.pop %v3597
    %v3599 = vmul.f32 %v3521, 1.442695
    %v3600 = vpow.pop %v3599
    %v3601 = vmul.f32 %v3522, 1.442695
    %v3602 = vpow.pop %v3601
    %v3603 = vmul.f32 %v3523, 1.442695
    %v3604 = vpow.pop %v3603
    %v3605 = vmul.f32 %v3524, 1.442695
    %v3606 = vpow.pop %v3605
    %v3607 = vmul.f32 %v3525, 1.442695
    %v3608 = vpow.pop %v3607
    %v3609 = vmul.f32 %v3526, 1.442695
    %v3610 = vpow.pop %v3609
    %v3611 = vmul.f32 %v3527, 1.442695
    %v3612 = vpow.pop %v3611
    %v3613 = vmul.f32 %v3528, 1.442695
    %v3614 = vpow.pop %v3613
    %v3615 = vmul.f32 %v3529, 1.442695
    %v3616 = vpow.pop %v3615
    %v3617 = vmul.f32 %v3530, 1.442695
    %v3618 = vpow.pop %v3617
    %v3619 = vmul.f32 %v3531, 1.442695
    %v3620 = vpow.pop %v3619
    %v3621 = vmul.f32 %v3532, 1.442695
    %v3622 = vpow.pop %v3621
    %v3623 = vmul.f32 %v3533, 1.442695
    %v3624 = vpow.pop %v3623
    %v3625 = vmul.f32 %v3534, 1.442695
    %v3626 = vpow.pop %v3625
    %v3627 = vmul.f32 %v3535, 1.442695
    %v3628 = vpow.pop %v3627
    %v3629 = vmul.f32 %v3536, 1.442695
    %v3630 = vpow.pop %v3629
    %v3631 = vmul.f32 %v3537, 1.442695
    %v3632 = vpow.pop %v3631
    %v3633 = vmul.f32 %v3538, 1.442695
    %v3634 = vpow.pop %v3633
    %v3635 = vmul.f32 %v3539, 1.442695
    %v3636 = vpow.pop %v3635
    %v3637 = vmul.f32 %v3540, 1.442695
    %v3638 = vpow.pop %v3637
    %v3639 = vmul.f32 %v3541, 1.442695
    %v3640 = vpow.pop %v3639
    %v3641 = vmul.f32 %v3542, 1.442695
    %v3642 = vpow.pop %v3641
    %v3643 = vmul.f32 %v3543, 1.442695
    %v3644 = vpow.pop %v3643
    %v3645 = vmul.f32 %v3544, 1.442695
    %v3646 = vpow.pop %v3645
    %v3647 = vmul.f32 %v3545, 1.442695
    %v3648 = vpow.pop %v3647
    %v3649 = vmul.f32 %v3546, 1.442695
    %v3650 = vpow.pop %v3649
    %v3651 = vmul.f32 %v3547, 1.442695
    %v3652 = vpow.pop %v3651
    %v3653 = vmul.f32 %v3548, 1.442695
    %v3654 = vpow.pop %v3653
    %v3655 = vmul.f32 %v3549, 1.442695
    %v3656 = vpow.pop %v3655
    %v3657 = vmul.f32 %v3550, 1.442695
    %v3658 = vpow.pop %v3657
    %v3659 = vmul.f32 %v3551, 1.442695
    %v3660 = vpow.pop %v3659
    %v3661 = vmul.f32 %v3552, 1.442695
    %v3662 = vpow.pop %v3661
    %v3663 = vmul.f32 %v3553, 1.442695
    %v3664 = vpow.pop %v3663
    %v3665 = vmul.f32 %v3554, 1.442695
    %v3666 = vpow.pop %v3665
    %v3667 = vmul.f32 %v3555, 1.442695
    %v3668 = vpow.pop %v3667
    %v3669 = vmul.f32 %v3556, 1.442695
    %v3670 = vpow.pop %v3669
    %v3671 = vmul.f32 %v3557, 1.442695
    %v3672 = vpow.pop %v3671
    %v3673 = vmul.f32 %v3558, 1.442695
    %v3674 = vpow.pop %v3673
    %v3675 = vmul.f32 %v3559, 1.442695
    %v3676 = vpow.pop %v3675
    %v3677 = vmul.f32 %v3560, 1.442695
    %v3678 = vpow.pop %v3677
    %v3679 = vmul.f32 %v3561, 1.442695
    %v3680 = vpow.pop %v3679
    %v3681 = vmul.f32 %v3562, 1.442695
    %v3682 = vpow.pop %v3681
    %v3683 = vmul.f32 %v3563, 1.442695
    %v3684 = vpow.pop %v3683
    %v3685 = vmul.f32 %v3564, 1.442695
    %v3686 = vpow.pop %v3685
    %v3687 = vmul.f32 %v3565, 1.442695
    %v3688 = vpow.pop %v3687
    %v3689 = vmul.f32 %v3566, 1.442695
    %v3690 = vpow.pop %v3689
    %v3691 = vmul.f32 %v3567, 1.442695
    %v3692 = vpow.pop %v3691
    %v3693 = vmul.f32 %v3568, 1.442695
    %v3694 = vpow.pop %v3693
    %v3695 = vmul.f32 %v3569, 1.442695
    %v3696 = vpow.pop %v3695
    %v3697 = vmul.f32 %v3570, 1.442695
    %v3698 = vpow.pop %v3697
    %3763 = vrot.lane.b32.xlu0 %v3572, 96
    %v3764 = vpop.permute.xlu0 %3763
    %3765 = vrot.lane.b32.xlu0 %v3574, 96
    %v3766 = vpop.permute.xlu0 %3765
    %3767 = vrot.lane.b32.xlu0 %v3576, 96
    %v3768 = vpop.permute.xlu0 %3767
    %3769 = vrot.lane.b32.xlu0 %v3578, 96
    %v3770 = vpop.permute.xlu0 %3769
    %3771 = vrot.lane.b32.xlu0 %v3580, 96
    %v3772 = vpop.permute.xlu0 %3771
    %3773 = vrot.lane.b32.xlu0 %v3582, 96
    %v3774 = vpop.permute.xlu0 %3773
    %3775 = vrot.lane.b32.xlu0 %v3584, 96
    %v3776 = vpop.permute.xlu0 %3775
    %3777 = vrot.lane.b32.xlu0 %v3586, 96
    %v3778 = vpop.permute.xlu0 %3777
    %3779 = vrot.lane.b32.xlu0 %v3588, 96
    %v3780 = vpop.permute.xlu0 %3779
    %3781 = vrot.lane.b32.xlu0 %v3590, 96
    %v3782 = vpop.permute.xlu0 %3781
    %3783 = vrot.lane.b32.xlu0 %v3592, 96
    %v3784 = vpop.permute.xlu0 %3783
    %3785 = vrot.lane.b32.xlu0 %v3594, 96
    %v3786 = vpop.permute.xlu0 %3785
    %3787 = vrot.lane.b32.xlu0 %v3596, 96
    %v3788 = vpop.permute.xlu0 %3787
    %3789 = vrot.lane.b32.xlu0 %v3598, 96
    %v3790 = vpop.permute.xlu0 %3789
    %3791 = vrot.lane.b32.xlu0 %v3600, 96
    %v3792 = vpop.permute.xlu0 %3791
    %3793 = vrot.lane.b32.xlu0 %v3602, 96
    %v3794 = vpop.permute.xlu0 %3793
    %3795 = vrot.lane.b32.xlu0 %v3604, 96
    %v3796 = vpop.permute.xlu0 %3795
    %3797 = vrot.lane.b32.xlu0 %v3606, 96
    %v3798 = vpop.permute.xlu0 %3797
    %3799 = vrot.lane.b32.xlu0 %v3608, 96
    %v3800 = vpop.permute.xlu0 %3799
    %3801 = vrot.lane.b32.xlu0 %v3610, 96
    %v3802 = vpop.permute.xlu0 %3801
    %3803 = vrot.lane.b32.xlu0 %v3612, 96
    %v3804 = vpop.permute.xlu0 %3803
    %3805 = vrot.lane.b32.xlu0 %v3614, 96
    %v3806 = vpop.permute.xlu0 %3805
    %3807 = vrot.lane.b32.xlu0 %v3616, 96
    %v3808 = vpop.permute.xlu0 %3807
    %3809 = vrot.lane.b32.xlu0 %v3618, 96
    %v3810 = vpop.permute.xlu0 %3809
    %3811 = vrot.lane.b32.xlu0 %v3620, 96
    %v3812 = vpop.permute.xlu0 %3811
    %3813 = vrot.lane.b32.xlu0 %v3622, 96
    %v3814 = vpop.permute.xlu0 %3813
    %3815 = vrot.lane.b32.xlu0 %v3624, 96
    %v3816 = vpop.permute.xlu0 %3815
    %3817 = vrot.lane.b32.xlu0 %v3626, 96
    %v3818 = vpop.permute.xlu0 %3817
    %3819 = vrot.lane.b32.xlu0 %v3628, 96
    %v3820 = vpop.permute.xlu0 %3819
    %3821 = vrot.lane.b32.xlu0 %v3630, 96
    %v3822 = vpop.permute.xlu0 %3821
    %3823 = vrot.lane.b32.xlu0 %v3632, 96
    %v3824 = vpop.permute.xlu0 %3823
    %3825 = vrot.lane.b32.xlu0 %v3634, 96
    %v3826 = vpop.permute.xlu0 %3825
    %3827 = vrot.lane.b32.xlu0 %v3636, 96
    %v3828 = vpop.permute.xlu0 %3827
    %3829 = vrot.lane.b32.xlu0 %v3638, 96
    %v3830 = vpop.permute.xlu0 %3829
    %3831 = vrot.lane.b32.xlu0 %v3640, 96
    %v3832 = vpop.permute.xlu0 %3831
    %3833 = vrot.lane.b32.xlu0 %v3642, 96
    %v3834 = vpop.permute.xlu0 %3833
    %3835 = vrot.lane.b32.xlu0 %v3644, 96
    %v3836 = vpop.permute.xlu0 %3835
    %3837 = vrot.lane.b32.xlu0 %v3646, 96
    %v3838 = vpop.permute.xlu0 %3837
    %3839 = vrot.lane.b32.xlu0 %v3648, 96
    %v3840 = vpop.permute.xlu0 %3839
    %3841 = vrot.lane.b32.xlu0 %v3650, 96
    %v3842 = vpop.permute.xlu0 %3841
    %3843 = vrot.lane.b32.xlu0 %v3652, 96
    %v3844 = vpop.permute.xlu0 %3843
    %3845 = vrot.lane.b32.xlu0 %v3654, 96
    %v3846 = vpop.permute.xlu0 %3845
    %3847 = vrot.lane.b32.xlu0 %v3656, 96
    %v3848 = vpop.permute.xlu0 %3847
    %3849 = vrot.lane.b32.xlu0 %v3658, 96
    %v3850 = vpop.permute.xlu0 %3849
    %3851 = vrot.lane.b32.xlu0 %v3660, 96
    %v3852 = vpop.permute.xlu0 %3851
    %3853 = vrot.lane.b32.xlu0 %v3662, 96
    %v3854 = vpop.permute.xlu0 %3853
    %3855 = vrot.lane.b32.xlu0 %v3664, 96
    %v3856 = vpop.permute.xlu0 %3855
    %3857 = vrot.lane.b32.xlu0 %v3666, 96
    %v3858 = vpop.permute.xlu0 %3857
    %3859 = vrot.lane.b32.xlu0 %v3668, 96
    %v3860 = vpop.permute.xlu0 %3859
    %3861 = vrot.lane.b32.xlu0 %v3670, 96
    %v3862 = vpop.permute.xlu0 %3861
    %3863 = vrot.lane.b32.xlu0 %v3672, 96
    %v3864 = vpop.permute.xlu0 %3863
    %3865 = vrot.lane.b32.xlu0 %v3674, 96
    %v3866 = vpop.permute.xlu0 %3865
    %3867 = vrot.lane.b32.xlu0 %v3676, 96
    %v3868 = vpop.permute.xlu0 %3867
    %3869 = vrot.lane.b32.xlu0 %v3678, 96
    %v3870 = vpop.permute.xlu0 %3869
    %3871 = vrot.lane.b32.xlu0 %v3680, 96
    %v3872 = vpop.permute.xlu0 %3871
    %3873 = vrot.lane.b32.xlu0 %v3682, 96
    %v3874 = vpop.permute.xlu0 %3873
    %3875 = vrot.lane.b32.xlu0 %v3684, 96
    %v3876 = vpop.permute.xlu0 %3875
    %3877 = vrot.lane.b32.xlu0 %v3686, 96
    %v3878 = vpop.permute.xlu0 %3877
    %3879 = vrot.lane.b32.xlu0 %v3688, 96
    %v3880 = vpop.permute.xlu0 %3879
    %3881 = vrot.lane.b32.xlu0 %v3690, 96
    %v3882 = vpop.permute.xlu0 %3881
    %3883 = vrot.lane.b32.xlu0 %v3692, 96
    %v3884 = vpop.permute.xlu0 %3883
    %3885 = vrot.lane.b32.xlu0 %v3694, 96
    %v3886 = vpop.permute.xlu0 %3885
    %3887 = vrot.lane.b32.xlu0 %v3696, 96
    %v3888 = vpop.permute.xlu0 %3887
    %3889 = vrot.lane.b32.xlu0 %v3698, 96
    %v3890 = vpop.permute.xlu0 %3889
    %v3955 = vmul.f32 %v3443, %v3764
    %v3956 = vmul.f32 %v3444, %v3766
    %v3957 = vmul.f32 %v3445, %v3768
    %v3958 = vmul.f32 %v3446, %v3770
    %v3959 = vmul.f32 %v3447, %v3772
    %v3960 = vmul.f32 %v3448, %v3774
    %v3961 = vmul.f32 %v3449, %v3776
    %v3962 = vmul.f32 %v3450, %v3778
    %v3963 = vmul.f32 %v3451, %v3780
    %v3964 = vmul.f32 %v3452, %v3782
    %v3965 = vmul.f32 %v3453, %v3784
    %v3966 = vmul.f32 %v3454, %v3786
    %v3967 = vmul.f32 %v3455, %v3788
    %v3968 = vmul.f32 %v3456, %v3790
    %v3969 = vmul.f32 %v3457, %v3792
    %v3970 = vmul.f32 %v3458, %v3794
    %v3971 = vmul.f32 %v3459, %v3796
    %v3972 = vmul.f32 %v3460, %v3798
    %v3973 = vmul.f32 %v3461, %v3800
    %v3974 = vmul.f32 %v3462, %v3802
    %v3975 = vmul.f32 %v3463, %v3804
    %v3976 = vmul.f32 %v3464, %v3806
    %v3977 = vmul.f32 %v3465, %v3808
    %v3978 = vmul.f32 %v3466, %v3810
    %v3979 = vmul.f32 %v3467, %v3812
    %v3980 = vmul.f32 %v3468, %v3814
    %v3981 = vmul.f32 %v3469, %v3816
    %v3982 = vmul.f32 %v3470, %v3818
    %v3983 = vmul.f32 %v3471, %v3820
    %v3984 = vmul.f32 %v3472, %v3822
    %v3985 = vmul.f32 %v3473, %v3824
    %v3986 = vmul.f32 %v3474, %v3826
    %v3987 = vmul.f32 %v3475, %v3828
    %v3988 = vmul.f32 %v3476, %v3830
    %v3989 = vmul.f32 %v3477, %v3832
    %v3990 = vmul.f32 %v3478, %v3834
    %v3991 = vmul.f32 %v3479, %v3836
    %v3992 = vmul.f32 %v3480, %v3838
    %v3993 = vmul.f32 %v3481, %v3840
    %v3994 = vmul.f32 %v3482, %v3842
    %v3995 = vmul.f32 %v3483, %v3844
    %v3996 = vmul.f32 %v3484, %v3846
    %v3997 = vmul.f32 %v3485, %v3848
    %v3998 = vmul.f32 %v3486, %v3850
    %v3999 = vmul.f32 %v3487, %v3852
    %v4000 = vmul.f32 %v3488, %v3854
    %v4001 = vmul.f32 %v3489, %v3856
    %v4002 = vmul.f32 %v3490, %v3858
    %v4003 = vmul.f32 %v3491, %v3860
    %v4004 = vmul.f32 %v3492, %v3862
    %v4005 = vmul.f32 %v3493, %v3864
    %v4006 = vmul.f32 %v3494, %v3866
    %v4007 = vmul.f32 %v3495, %v3868
    %v4008 = vmul.f32 %v3496, %v3870
    %v4009 = vmul.f32 %v3497, %v3872
    %v4010 = vmul.f32 %v3498, %v3874
    %v4011 = vmul.f32 %v3499, %v3876
    %v4012 = vmul.f32 %v3500, %v3878
    %v4013 = vmul.f32 %v3501, %v3880
    %v4014 = vmul.f32 %v3502, %v3882
    %v4015 = vmul.f32 %v3503, %v3884
    %v4016 = vmul.f32 %v3504, %v3886
    %v4017 = vmul.f32 %v3505, %v3888
    %v4018 = vmul.f32 %v3506, %v3890
    %4083 = vrot.lane.b32.xlu0 %v3955, 16
    %v4084 = vpop.permute.xlu0 %4083
    %4085 = vrot.lane.b32.xlu0 %v3956, 16
    %v4086 = vpop.permute.xlu0 %4085
    %4087 = vrot.lane.b32.xlu0 %v3957, 16
    %v4088 = vpop.permute.xlu0 %4087
    %4089 = vrot.lane.b32.xlu0 %v3958, 16
    %v4090 = vpop.permute.xlu0 %4089
    %4091 = vrot.lane.b32.xlu0 %v3959, 16
    %v4092 = vpop.permute.xlu0 %4091
    %4093 = vrot.lane.b32.xlu0 %v3960, 16
    %v4094 = vpop.permute.xlu0 %4093
    %4095 = vrot.lane.b32.xlu0 %v3961, 16
    %v4096 = vpop.permute.xlu0 %4095
    %4097 = vrot.lane.b32.xlu0 %v3962, 16
    %v4098 = vpop.permute.xlu0 %4097
    %4099 = vrot.lane.b32.xlu0 %v3963, 16
    %v4100 = vpop.permute.xlu0 %4099
    %4101 = vrot.lane.b32.xlu0 %v3964, 16
    %v4102 = vpop.permute.xlu0 %4101
    %4103 = vrot.lane.b32.xlu0 %v3965, 16
    %v4104 = vpop.permute.xlu0 %4103
    %4105 = vrot.lane.b32.xlu0 %v3966, 16
    %v4106 = vpop.permute.xlu0 %4105
    %4107 = vrot.lane.b32.xlu0 %v3967, 16
    %v4108 = vpop.permute.xlu0 %4107
    %4109 = vrot.lane.b32.xlu0 %v3968, 16
    %v4110 = vpop.permute.xlu0 %4109
    %4111 = vrot.lane.b32.xlu0 %v3969, 16
    %v4112 = vpop.permute.xlu0 %4111
    %4113 = vrot.lane.b32.xlu0 %v3970, 16
    %v4114 = vpop.permute.xlu0 %4113
    %4115 = vrot.lane.b32.xlu0 %v3971, 16
    %v4116 = vpop.permute.xlu0 %4115
    %4117 = vrot.lane.b32.xlu0 %v3972, 16
    %v4118 = vpop.permute.xlu0 %4117
    %4119 = vrot.lane.b32.xlu0 %v3973, 16
    %v4120 = vpop.permute.xlu0 %4119
    %4121 = vrot.lane.b32.xlu0 %v3974, 16
    %v4122 = vpop.permute.xlu0 %4121
    %4123 = vrot.lane.b32.xlu0 %v3975, 16
    %v4124 = vpop.permute.xlu0 %4123
    %4125 = vrot.lane.b32.xlu0 %v3976, 16
    %v4126 = vpop.permute.xlu0 %4125
    %4127 = vrot.lane.b32.xlu0 %v3977, 16
    %v4128 = vpop.permute.xlu0 %4127
    %4129 = vrot.lane.b32.xlu0 %v3978, 16
    %v4130 = vpop.permute.xlu0 %4129
    %4131 = vrot.lane.b32.xlu0 %v3979, 16
    %v4132 = vpop.permute.xlu0 %4131
    %4133 = vrot.lane.b32.xlu0 %v3980, 16
    %v4134 = vpop.permute.xlu0 %4133
    %4135 = vrot.lane.b32.xlu0 %v3981, 16
    %v4136 = vpop.permute.xlu0 %4135
    %4137 = vrot.lane.b32.xlu0 %v3982, 16
    %v4138 = vpop.permute.xlu0 %4137
    %4139 = vrot.lane.b32.xlu0 %v3983, 16
    %v4140 = vpop.permute.xlu0 %4139
    %4141 = vrot.lane.b32.xlu0 %v3984, 16
    %v4142 = vpop.permute.xlu0 %4141
    %4143 = vrot.lane.b32.xlu0 %v3985, 16
    %v4144 = vpop.permute.xlu0 %4143
    %4145 = vrot.lane.b32.xlu0 %v3986, 16
    %v4146 = vpop.permute.xlu0 %4145
    %4147 = vrot.lane.b32.xlu0 %v3987, 16
    %v4148 = vpop.permute.xlu0 %4147
    %4149 = vrot.lane.b32.xlu0 %v3988, 16
    %v4150 = vpop.permute.xlu0 %4149
    %4151 = vrot.lane.b32.xlu0 %v3989, 16
    %v4152 = vpop.permute.xlu0 %4151
    %4153 = vrot.lane.b32.xlu0 %v3990, 16
    %v4154 = vpop.permute.xlu0 %4153
    %4155 = vrot.lane.b32.xlu0 %v3991, 16
    %v4156 = vpop.permute.xlu0 %4155
    %4157 = vrot.lane.b32.xlu0 %v3992, 16
    %v4158 = vpop.permute.xlu0 %4157
    %4159 = vrot.lane.b32.xlu0 %v3993, 16
    %v4160 = vpop.permute.xlu0 %4159
    %4161 = vrot.lane.b32.xlu0 %v3994, 16
    %v4162 = vpop.permute.xlu0 %4161
    %4163 = vrot.lane.b32.xlu0 %v3995, 16
    %v4164 = vpop.permute.xlu0 %4163
    %4165 = vrot.lane.b32.xlu0 %v3996, 16
    %v4166 = vpop.permute.xlu0 %4165
    %4167 = vrot.lane.b32.xlu0 %v3997, 16
    %v4168 = vpop.permute.xlu0 %4167
    %4169 = vrot.lane.b32.xlu0 %v3998, 16
    %v4170 = vpop.permute.xlu0 %4169
    %4171 = vrot.lane.b32.xlu0 %v3999, 16
    %v4172 = vpop.permute.xlu0 %4171
    %4173 = vrot.lane.b32.xlu0 %v4000, 16
    %v4174 = vpop.permute.xlu0 %4173
    %4175 = vrot.lane.b32.xlu0 %v4001, 16
    %v4176 = vpop.permute.xlu0 %4175
    %4177 = vrot.lane.b32.xlu0 %v4002, 16
    %v4178 = vpop.permute.xlu0 %4177
    %4179 = vrot.lane.b32.xlu0 %v4003, 16
    %v4180 = vpop.permute.xlu0 %4179
    %4181 = vrot.lane.b32.xlu0 %v4004, 16
    %v4182 = vpop.permute.xlu0 %4181
    %4183 = vrot.lane.b32.xlu0 %v4005, 16
    %v4184 = vpop.permute.xlu0 %4183
    %4185 = vrot.lane.b32.xlu0 %v4006, 16
    %v4186 = vpop.permute.xlu0 %4185
    %4187 = vrot.lane.b32.xlu0 %v4007, 16
    %v4188 = vpop.permute.xlu0 %4187
    %4189 = vrot.lane.b32.xlu0 %v4008, 16
    %v4190 = vpop.permute.xlu0 %4189
    %4191 = vrot.lane.b32.xlu0 %v4009, 16
    %v4192 = vpop.permute.xlu0 %4191
    %4193 = vrot.lane.b32.xlu0 %v4010, 16
    %v4194 = vpop.permute.xlu0 %4193
    %4195 = vrot.lane.b32.xlu0 %v4011, 16
    %v4196 = vpop.permute.xlu0 %4195
    %4197 = vrot.lane.b32.xlu0 %v4012, 16
    %v4198 = vpop.permute.xlu0 %4197
    %4199 = vrot.lane.b32.xlu0 %v4013, 16
    %v4200 = vpop.permute.xlu0 %4199
    %4201 = vrot.lane.b32.xlu0 %v4014, 16
    %v4202 = vpop.permute.xlu0 %4201
    %4203 = vrot.lane.b32.xlu0 %v4015, 16
    %v4204 = vpop.permute.xlu0 %4203
    %4205 = vrot.lane.b32.xlu0 %v4016, 16
    %v4206 = vpop.permute.xlu0 %4205
    %4207 = vrot.lane.b32.xlu0 %v4017, 16
    %v4208 = vpop.permute.xlu0 %4207
    %4209 = vrot.lane.b32.xlu0 %v4018, 16
    %v4210 = vpop.permute.xlu0 %4209
    %v4275 = vadd.f32 %v3189, %v4084
    %v4276 = vadd.f32 %v3192, %v4086
    %v4277 = vadd.f32 %v3197, %v4088
    %v4278 = vadd.f32 %v3200, %v4090
    %v4279 = vadd.f32 %v3205, %v4092
    %v4280 = vadd.f32 %v3208, %v4094
    %v4281 = vadd.f32 %v3213, %v4096
    %v4282 = vadd.f32 %v3216, %v4098
    %v4283 = vadd.f32 %v3221, %v4100
    %v4284 = vadd.f32 %v3224, %v4102
    %v4285 = vadd.f32 %v3229, %v4104
    %v4286 = vadd.f32 %v3232, %v4106
    %v4287 = vadd.f32 %v3237, %v4108
    %v4288 = vadd.f32 %v3240, %v4110
    %v4289 = vadd.f32 %v3245, %v4112
    %v4290 = vadd.f32 %v3248, %v4114
    %v4291 = vadd.f32 %v3253, %v4116
    %v4292 = vadd.f32 %v3256, %v4118
    %v4293 = vadd.f32 %v3261, %v4120
    %v4294 = vadd.f32 %v3264, %v4122
    %v4295 = vadd.f32 %v3269, %v4124
    %v4296 = vadd.f32 %v3272, %v4126
    %v4297 = vadd.f32 %v3277, %v4128
    %v4298 = vadd.f32 %v3280, %v4130
    %v4299 = vadd.f32 %v3285, %v4132
    %v4300 = vadd.f32 %v3288, %v4134
    %v4301 = vadd.f32 %v3293, %v4136
    %v4302 = vadd.f32 %v3296, %v4138
    %v4303 = vadd.f32 %v3301, %v4140
    %v4304 = vadd.f32 %v3304, %v4142
    %v4305 = vadd.f32 %v3309, %v4144
    %v4306 = vadd.f32 %v3312, %v4146
    %v4307 = vadd.f32 %v3317, %v4148
    %v4308 = vadd.f32 %v3320, %v4150
    %v4309 = vadd.f32 %v3325, %v4152
    %v4310 = vadd.f32 %v3328, %v4154
    %v4311 = vadd.f32 %v3333, %v4156
    %v4312 = vadd.f32 %v3336, %v4158
    %v4313 = vadd.f32 %v3341, %v4160
    %v4314 = vadd.f32 %v3344, %v4162
    %v4315 = vadd.f32 %v3349, %v4164
    %v4316 = vadd.f32 %v3352, %v4166
    %v4317 = vadd.f32 %v3357, %v4168
    %v4318 = vadd.f32 %v3360, %v4170
    %v4319 = vadd.f32 %v3365, %v4172
    %v4320 = vadd.f32 %v3368, %v4174
    %v4321 = vadd.f32 %v3373, %v4176
    %v4322 = vadd.f32 %v3376, %v4178
    %v4323 = vadd.f32 %v3381, %v4180
    %v4324 = vadd.f32 %v3384, %v4182
    %v4325 = vadd.f32 %v3389, %v4184
    %v4326 = vadd.f32 %v3392, %v4186
    %v4327 = vadd.f32 %v3397, %v4188
    %v4328 = vadd.f32 %v3400, %v4190
    %v4329 = vadd.f32 %v3405, %v4192
    %v4330 = vadd.f32 %v3408, %v4194
    %v4331 = vadd.f32 %v3413, %v4196
    %v4332 = vadd.f32 %v3416, %v4198
    %v4333 = vadd.f32 %v3421, %v4200
    %v4334 = vadd.f32 %v3424, %v4202
    %v4335 = vadd.f32 %v3429, %v4204
    %v4336 = vadd.f32 %v3432, %v4206
    %v4337 = vadd.f32 %v3437, %v4208
    %v4338 = vadd.f32 %v3440, %v4210
    %v4339 = vadd.f32 %v1207, %v3189
    %v4340 = vadd.f32 %v1210, %v3192
    %v4341 = vadd.f32 %v1215, %v3197
    %v4342 = vadd.f32 %v1218, %v3200
    %v4343 = vadd.f32 %v1223, %v3205
    %v4344 = vadd.f32 %v1226, %v3208
    %v4345 = vadd.f32 %v1231, %v3213
    %v4346 = vadd.f32 %v1234, %v3216
    %v4347 = vadd.f32 %v1239, %v3221
    %v4348 = vadd.f32 %v1242, %v3224
    %v4349 = vadd.f32 %v1247, %v3229
    %v4350 = vadd.f32 %v1250, %v3232
    %v4351 = vadd.f32 %v1255, %v3237
    %v4352 = vadd.f32 %v1258, %v3240
    %v4353 = vadd.f32 %v1263, %v3245
    %v4354 = vadd.f32 %v1266, %v3248
    %v4355 = vadd.f32 %v1271, %v3253
    %v4356 = vadd.f32 %v1274, %v3256
    %v4357 = vadd.f32 %v1279, %v3261
    %v4358 = vadd.f32 %v1282, %v3264
    %v4359 = vadd.f32 %v1287, %v3269
    %v4360 = vadd.f32 %v1290, %v3272
    %v4361 = vadd.f32 %v1295, %v3277
    %v4362 = vadd.f32 %v1298, %v3280
    %v4363 = vadd.f32 %v1303, %v3285
    %v4364 = vadd.f32 %v1306, %v3288
    %v4365 = vadd.f32 %v1311, %v3293
    %v4366 = vadd.f32 %v1314, %v3296
    %v4367 = vadd.f32 %v1319, %v3301
    %v4368 = vadd.f32 %v1322, %v3304
    %v4369 = vadd.f32 %v1327, %v3309
    %v4370 = vadd.f32 %v1330, %v3312
    %v4371 = vadd.f32 %v1335, %v3317
    %v4372 = vadd.f32 %v1338, %v3320
    %v4373 = vadd.f32 %v1343, %v3325
    %v4374 = vadd.f32 %v1346, %v3328
    %v4375 = vadd.f32 %v1351, %v3333
    %v4376 = vadd.f32 %v1354, %v3336
    %v4377 = vadd.f32 %v1359, %v3341
    %v4378 = vadd.f32 %v1362, %v3344
    %v4379 = vadd.f32 %v1367, %v3349
    %v4380 = vadd.f32 %v1370, %v3352
    %v4381 = vadd.f32 %v1375, %v3357
    %v4382 = vadd.f32 %v1378, %v3360
    %v4383 = vadd.f32 %v1383, %v3365
    %v4384 = vadd.f32 %v1386, %v3368
    %v4385 = vadd.f32 %v1391, %v3373
    %v4386 = vadd.f32 %v1394, %v3376
    %v4387 = vadd.f32 %v1399, %v3381
    %v4388 = vadd.f32 %v1402, %v3384
    %v4389 = vadd.f32 %v1407, %v3389
    %v4390 = vadd.f32 %v1410, %v3392
    %v4391 = vadd.f32 %v1415, %v3397
    %v4392 = vadd.f32 %v1418, %v3400
    %v4393 = vadd.f32 %v1423, %v3405
    %v4394 = vadd.f32 %v1426, %v3408
    %v4395 = vadd.f32 %v1431, %v3413
    %v4396 = vadd.f32 %v1434, %v3416
    %v4397 = vadd.f32 %v1439, %v3421
    %v4398 = vadd.f32 %v1442, %v3424
    %v4399 = vadd.f32 %v1447, %v3429
    %v4400 = vadd.f32 %v1450, %v3432
    %v4401 = vadd.f32 %v1455, %v3437
    %v4402 = vadd.f32 %v1458, %v3440
    %4403 = vst [vmem:[#allocation2] sm:$0xff] %v4339
    %4404 = vst [vmem:[#allocation2 + $0x8] sm:$0xff] %v4340
    %4405 = vst [vmem:[#allocation2 + $0x10] sm:$0xff] %v4341
    %4406 = vst [vmem:[#allocation2 + $0x18] sm:$0xff] %v4342
    %4407 = vst [vmem:[#allocation2 + $0x20] sm:$0xff] %v4343
    %4408 = vst [vmem:[#allocation2 + $0x28] sm:$0xff] %v4344
    %4409 = vst [vmem:[#allocation2 + $0x30] sm:$0xff] %v4345
    %4410 = vst [vmem:[#allocation2 + $0x38] sm:$0xff] %v4346
    %4411 = vst [vmem:[#allocation2 + $0x40] sm:$0xff] %v4347
    %4412 = vst [vmem:[#allocation2 + $0x48] sm:$0xff] %v4348
    %4413 = vst [vmem:[#allocation2 + $0x50] sm:$0xff] %v4349
    %4414 = vst [vmem:[#allocation2 + $0x58] sm:$0xff] %v4350
    %4415 = vst [vmem:[#allocation2 + $0x60] sm:$0xff] %v4351
    %4416 = vst [vmem:[#allocation2 + $0x68] sm:$0xff] %v4352
    %4417 = vst [vmem:[#allocation2 + $0x70] sm:$0xff] %v4353
    %4418 = vst [vmem:[#allocation2 + $0x78] sm:$0xff] %v4354
    %4419 = vst [vmem:[#allocation2 + $0x80] sm:$0xff] %v4355
    %4420 = vst [vmem:[#allocation2 + $0x88] sm:$0xff] %v4356
    %4421 = vst [vmem:[#allocation2 + $0x90] sm:$0xff] %v4357
    %4422 = vst [vmem:[#allocation2 + $0x98] sm:$0xff] %v4358
    %4423 = vst [vmem:[#allocation2 + $0xa0] sm:$0xff] %v4359
    %4424 = vst [vmem:[#allocation2 + $0xa8] sm:$0xff] %v4360
    %4425 = vst [vmem:[#allocation2 + $0xb0] sm:$0xff] %v4361
    %4426 = vst [vmem:[#allocation2 + $0xb8] sm:$0xff] %v4362
    %4427 = vst [vmem:[#allocation2 + $0xc0] sm:$0xff] %v4363
    %4428 = vst [vmem:[#allocation2 + $0xc8] sm:$0xff] %v4364
    %4429 = vst [vmem:[#allocation2 + $0xd0] sm:$0xff] %v4365
    %4430 = vst [vmem:[#allocation2 + $0xd8] sm:$0xff] %v4366
    %4431 = vst [vmem:[#allocation2 + $0xe0] sm:$0xff] %v4367
    %4432 = vst [vmem:[#allocation2 + $0xe8] sm:$0xff] %v4368
    %4433 = vst [vmem:[#allocation2 + $0xf0] sm:$0xff] %v4369
    %4434 = vst [vmem:[#allocation2 + $0xf8] sm:$0xff] %v4370
    %4435 = vst [vmem:[#allocation2 + $0x100] sm:$0xff] %v4371
    %4436 = vst [vmem:[#allocation2 + $0x108] sm:$0xff] %v4372
    %4437 = vst [vmem:[#allocation2 + $0x110] sm:$0xff] %v4373
    %4438 = vst [vmem:[#allocation2 + $0x118] sm:$0xff] %v4374
    %4439 = vst [vmem:[#allocation2 + $0x120] sm:$0xff] %v4375
    %4440 = vst [vmem:[#allocation2 + $0x128] sm:$0xff] %v4376
    %4441 = vst [vmem:[#allocation2 + $0x130] sm:$0xff] %v4377
    %4442 = vst [vmem:[#allocation2 + $0x138] sm:$0xff] %v4378
    %4443 = vst [vmem:[#allocation2 + $0x140] sm:$0xff] %v4379
    %4444 = vst [vmem:[#allocation2 + $0x148] sm:$0xff] %v4380
    %4445 = vst [vmem:[#allocation2 + $0x150] sm:$0xff] %v4381
    %4446 = vst [vmem:[#allocation2 + $0x158] sm:$0xff] %v4382
    %4447 = vst [vmem:[#allocation2 + $0x160] sm:$0xff] %v4383
    %4448 = vst [vmem:[#allocation2 + $0x168] sm:$0xff] %v4384
    %4449 = vst [vmem:[#allocation2 + $0x170] sm:$0xff] %v4385
    %4450 = vst [vmem:[#allocation2 + $0x178] sm:$0xff] %v4386
    %4451 = vst [vmem:[#allocation2 + $0x180] sm:$0xff] %v4387
    %4452 = vst [vmem:[#allocation2 + $0x188] sm:$0xff] %v4388
    %4453 = vst [vmem:[#allocation2 + $0x190] sm:$0xff] %v4389
    %4454 = vst [vmem:[#allocation2 + $0x198] sm:$0xff] %v4390
    %4455 = vst [vmem:[#allocation2 + $0x1a0] sm:$0xff] %v4391
    %4456 = vst [vmem:[#allocation2 + $0x1a8] sm:$0xff] %v4392
    %4457 = vst [vmem:[#allocation2 + $0x1b0] sm:$0xff] %v4393
    %4458 = vst [vmem:[#allocation2 + $0x1b8] sm:$0xff] %v4394
    %4459 = vst [vmem:[#allocation2 + $0x1c0] sm:$0xff] %v4395
    %4460 = vst [vmem:[#allocation2 + $0x1c8] sm:$0xff] %v4396
    %4461 = vst [vmem:[#allocation2 + $0x1d0] sm:$0xff] %v4397
    %4462 = vst [vmem:[#allocation2 + $0x1d8] sm:$0xff] %v4398
    %4463 = vst [vmem:[#allocation2 + $0x1e0] sm:$0xff] %v4399
    %4464 = vst [vmem:[#allocation2 + $0x1e8] sm:$0xff] %v4400
    %4465 = vst [vmem:[#allocation2 + $0x1f0] sm:$0xff] %v4401
    %4466 = vst [vmem:[#allocation2 + $0x1f8] sm:$0xff] %v4402
    %4531 = vrot.lane.b32.xlu0 %v4275, 32
    %v4532 = vpop.permute.xlu0 %4531
    %4533 = vrot.lane.b32.xlu0 %v4276, 32
    %v4534 = vpop.permute.xlu0 %4533
    %4535 = vrot.lane.b32.xlu0 %v4277, 32
    %v4536 = vpop.permute.xlu0 %4535
    %4537 = vrot.lane.b32.xlu0 %v4278, 32
    %v4538 = vpop.permute.xlu0 %4537
    %4539 = vrot.lane.b32.xlu0 %v4279, 32
    %v4540 = vpop.permute.xlu0 %4539
    %4541 = vrot.lane.b32.xlu0 %v4280, 32
    %v4542 = vpop.permute.xlu0 %4541
    %4543 = vrot.lane.b32.xlu0 %v4281, 32
    %v4544 = vpop.permute.xlu0 %4543
    %4545 = vrot.lane.b32.xlu0 %v4282, 32
    %v4546 = vpop.permute.xlu0 %4545
    %4547 = vrot.lane.b32.xlu0 %v4283, 32
    %v4548 = vpop.permute.xlu0 %4547
    %4549 = vrot.lane.b32.xlu0 %v4284, 32
    %v4550 = vpop.permute.xlu0 %4549
    %4551 = vrot.lane.b32.xlu0 %v4285, 32
    %v4552 = vpop.permute.xlu0 %4551
    %4553 = vrot.lane.b32.xlu0 %v4286, 32
    %v4554 = vpop.permute.xlu0 %4553
    %4555 = vrot.lane.b32.xlu0 %v4287, 32
    %v4556 = vpop.permute.xlu0 %4555
    %4557 = vrot.lane.b32.xlu0 %v4288, 32
    %v4558 = vpop.permute.xlu0 %4557
    %4559 = vrot.lane.b32.xlu0 %v4289, 32
    %v4560 = vpop.permute.xlu0 %4559
    %4561 = vrot.lane.b32.xlu0 %v4290, 32
    %v4562 = vpop.permute.xlu0 %4561
    %4563 = vrot.lane.b32.xlu0 %v4291, 32
    %v4564 = vpop.permute.xlu0 %4563
    %4565 = vrot.lane.b32.xlu0 %v4292, 32
    %v4566 = vpop.permute.xlu0 %4565
    %4567 = vrot.lane.b32.xlu0 %v4293, 32
    %v4568 = vpop.permute.xlu0 %4567
    %4569 = vrot.lane.b32.xlu0 %v4294, 32
    %v4570 = vpop.permute.xlu0 %4569
    %4571 = vrot.lane.b32.xlu0 %v4295, 32
    %v4572 = vpop.permute.xlu0 %4571
    %4573 = vrot.lane.b32.xlu0 %v4296, 32
    %v4574 = vpop.permute.xlu0 %4573
    %4575 = vrot.lane.b32.xlu0 %v4297, 32
    %v4576 = vpop.permute.xlu0 %4575
    %4577 = vrot.lane.b32.xlu0 %v4298, 32
    %v4578 = vpop.permute.xlu0 %4577
    %4579 = vrot.lane.b32.xlu0 %v4299, 32
    %v4580 = vpop.permute.xlu0 %4579
    %4581 = vrot.lane.b32.xlu0 %v4300, 32
    %v4582 = vpop.permute.xlu0 %4581
    %4583 = vrot.lane.b32.xlu0 %v4301, 32
    %v4584 = vpop.permute.xlu0 %4583
    %4585 = vrot.lane.b32.xlu0 %v4302, 32
    %v4586 = vpop.permute.xlu0 %4585
    %4587 = vrot.lane.b32.xlu0 %v4303, 32
    %v4588 = vpop.permute.xlu0 %4587
    %4589 = vrot.lane.b32.xlu0 %v4304, 32
    %v4590 = vpop.permute.xlu0 %4589
    %4591 = vrot.lane.b32.xlu0 %v4305, 32
    %v4592 = vpop.permute.xlu0 %4591
    %4593 = vrot.lane.b32.xlu0 %v4306, 32
    %v4594 = vpop.permute.xlu0 %4593
    %4595 = vrot.lane.b32.xlu0 %v4307, 32
    %v4596 = vpop.permute.xlu0 %4595
    %4597 = vrot.lane.b32.xlu0 %v4308, 32
    %v4598 = vpop.permute.xlu0 %4597
    %4599 = vrot.lane.b32.xlu0 %v4309, 32
    %v4600 = vpop.permute.xlu0 %4599
    %4601 = vrot.lane.b32.xlu0 %v4310, 32
    %v4602 = vpop.permute.xlu0 %4601
    %4603 = vrot.lane.b32.xlu0 %v4311, 32
    %v4604 = vpop.permute.xlu0 %4603
    %4605 = vrot.lane.b32.xlu0 %v4312, 32
    %v4606 = vpop.permute.xlu0 %4605
    %4607 = vrot.lane.b32.xlu0 %v4313, 32
    %v4608 = vpop.permute.xlu0 %4607
    %4609 = vrot.lane.b32.xlu0 %v4314, 32
    %v4610 = vpop.permute.xlu0 %4609
    %4611 = vrot.lane.b32.xlu0 %v4315, 32
    %v4612 = vpop.permute.xlu0 %4611
    %4613 = vrot.lane.b32.xlu0 %v4316, 32
    %v4614 = vpop.permute.xlu0 %4613
    %4615 = vrot.lane.b32.xlu0 %v4317, 32
    %v4616 = vpop.permute.xlu0 %4615
    %4617 = vrot.lane.b32.xlu0 %v4318, 32
    %v4618 = vpop.permute.xlu0 %4617
    %4619 = vrot.lane.b32.xlu0 %v4319, 32
    %v4620 = vpop.permute.xlu0 %4619
    %4621 = vrot.lane.b32.xlu0 %v4320, 32
    %v4622 = vpop.permute.xlu0 %4621
    %4623 = vrot.lane.b32.xlu0 %v4321, 32
    %v4624 = vpop.permute.xlu0 %4623
    %4625 = vrot.lane.b32.xlu0 %v4322, 32
    %v4626 = vpop.permute.xlu0 %4625
    %4627 = vrot.lane.b32.xlu0 %v4323, 32
    %v4628 = vpop.permute.xlu0 %4627
    %4629 = vrot.lane.b32.xlu0 %v4324, 32
    %v4630 = vpop.permute.xlu0 %4629
    %4631 = vrot.lane.b32.xlu0 %v4325, 32
    %v4632 = vpop.permute.xlu0 %4631
    %4633 = vrot.lane.b32.xlu0 %v4326, 32
    %v4634 = vpop.permute.xlu0 %4633
    %4635 = vrot.lane.b32.xlu0 %v4327, 32
    %v4636 = vpop.permute.xlu0 %4635
    %4637 = vrot.lane.b32.xlu0 %v4328, 32
    %v4638 = vpop.permute.xlu0 %4637
    %4639 = vrot.lane.b32.xlu0 %v4329, 32
    %v4640 = vpop.permute.xlu0 %4639
    %4641 = vrot.lane.b32.xlu0 %v4330, 32
    %v4642 = vpop.permute.xlu0 %4641
    %4643 = vrot.lane.b32.xlu0 %v4331, 32
    %v4644 = vpop.permute.xlu0 %4643
    %4645 = vrot.lane.b32.xlu0 %v4332, 32
    %v4646 = vpop.permute.xlu0 %4645
    %4647 = vrot.lane.b32.xlu0 %v4333, 32
    %v4648 = vpop.permute.xlu0 %4647
    %4649 = vrot.lane.b32.xlu0 %v4334, 32
    %v4650 = vpop.permute.xlu0 %4649
    %4651 = vrot.lane.b32.xlu0 %v4335, 32
    %v4652 = vpop.permute.xlu0 %4651
    %4653 = vrot.lane.b32.xlu0 %v4336, 32
    %v4654 = vpop.permute.xlu0 %4653
    %4655 = vrot.lane.b32.xlu0 %v4337, 32
    %v4656 = vpop.permute.xlu0 %4655
    %4657 = vrot.lane.b32.xlu0 %v4338, 32
    %v4658 = vpop.permute.xlu0 %4657
    %vm4723 = vcmask 523648
    %4724 = vst.msk [vmem:[#allocation2] sm:$0xff] %vm4723, %v4532
    %4725 = vst.msk [vmem:[#allocation2 + $0x8] sm:$0xff] %vm4723, %v4534
    %4726 = vst.msk [vmem:[#allocation2 + $0x10] sm:$0xff] %vm4723, %v4536
    %4727 = vst.msk [vmem:[#allocation2 + $0x18] sm:$0xff] %vm4723, %v4538
    %4728 = vst.msk [vmem:[#allocation2 + $0x20] sm:$0xff] %vm4723, %v4540
    %4729 = vst.msk [vmem:[#allocation2 + $0x28] sm:$0xff] %vm4723, %v4542
    %4730 = vst.msk [vmem:[#allocation2 + $0x30] sm:$0xff] %vm4723, %v4544
    %4731 = vst.msk [vmem:[#allocation2 + $0x38] sm:$0xff] %vm4723, %v4546
    %4732 = vst.msk [vmem:[#allocation2 + $0x40] sm:$0xff] %vm4723, %v4548
    %4733 = vst.msk [vmem:[#allocation2 + $0x48] sm:$0xff] %vm4723, %v4550
    %4734 = vst.msk [vmem:[#allocation2 + $0x50] sm:$0xff] %vm4723, %v4552
    %4735 = vst.msk [vmem:[#allocation2 + $0x58] sm:$0xff] %vm4723, %v4554
    %4736 = vst.msk [vmem:[#allocation2 + $0x60] sm:$0xff] %vm4723, %v4556
    %4737 = vst.msk [vmem:[#allocation2 + $0x68] sm:$0xff] %vm4723, %v4558
    %4738 = vst.msk [vmem:[#allocation2 + $0x70] sm:$0xff] %vm4723, %v4560
    %4739 = vst.msk [vmem:[#allocation2 + $0x78] sm:$0xff] %vm4723, %v4562
    %4740 = vst.msk [vmem:[#allocation2 + $0x80] sm:$0xff] %vm4723, %v4564
    %4741 = vst.msk [vmem:[#allocation2 + $0x88] sm:$0xff] %vm4723, %v4566
    %4742 = vst.msk [vmem:[#allocation2 + $0x90] sm:$0xff] %vm4723, %v4568
    %4743 = vst.msk [vmem:[#allocation2 + $0x98] sm:$0xff] %vm4723, %v4570
    %4744 = vst.msk [vmem:[#allocation2 + $0xa0] sm:$0xff] %vm4723, %v4572
    %4745 = vst.msk [vmem:[#allocation2 + $0xa8] sm:$0xff] %vm4723, %v4574
    %4746 = vst.msk [vmem:[#allocation2 + $0xb0] sm:$0xff] %vm4723, %v4576
    %4747 = vst.msk [vmem:[#allocation2 + $0xb8] sm:$0xff] %vm4723, %v4578
    %4748 = vst.msk [vmem:[#allocation2 + $0xc0] sm:$0xff] %vm4723, %v4580
    %4749 = vst.msk [vmem:[#allocation2 + $0xc8] sm:$0xff] %vm4723, %v4582
    %4750 = vst.msk [vmem:[#allocation2 + $0xd0] sm:$0xff] %vm4723, %v4584
    %4751 = vst.msk [vmem:[#allocation2 + $0xd8] sm:$0xff] %vm4723, %v4586
    %4752 = vst.msk [vmem:[#allocation2 + $0xe0] sm:$0xff] %vm4723, %v4588
    %4753 = vst.msk [vmem:[#allocation2 + $0xe8] sm:$0xff] %vm4723, %v4590
    %4754 = vst.msk [vmem:[#allocation2 + $0xf0] sm:$0xff] %vm4723, %v4592
    %4755 = vst.msk [vmem:[#allocation2 + $0xf8] sm:$0xff] %vm4723, %v4594
    %4756 = vst.msk [vmem:[#allocation2 + $0x100] sm:$0xff] %vm4723, %v4596
    %4757 = vst.msk [vmem:[#allocation2 + $0x108] sm:$0xff] %vm4723, %v4598
    %4758 = vst.msk [vmem:[#allocation2 + $0x110] sm:$0xff] %vm4723, %v4600
    %4759 = vst.msk [vmem:[#allocation2 + $0x118] sm:$0xff] %vm4723, %v4602
    %4760 = vst.msk [vmem:[#allocation2 + $0x120] sm:$0xff] %vm4723, %v4604
    %4761 = vst.msk [vmem:[#allocation2 + $0x128] sm:$0xff] %vm4723, %v4606
    %4762 = vst.msk [vmem:[#allocation2 + $0x130] sm:$0xff] %vm4723, %v4608
    %4763 = vst.msk [vmem:[#allocation2 + $0x138] sm:$0xff] %vm4723, %v4610
    %4764 = vst.msk [vmem:[#allocation2 + $0x140] sm:$0xff] %vm4723, %v4612
    %4765 = vst.msk [vmem:[#allocation2 + $0x148] sm:$0xff] %vm4723, %v4614
    %4766 = vst.msk [vmem:[#allocation2 + $0x150] sm:$0xff] %vm4723, %v4616
    %4767 = vst.msk [vmem:[#allocation2 + $0x158] sm:$0xff] %vm4723, %v4618
    %4768 = vst.msk [vmem:[#allocation2 + $0x160] sm:$0xff] %vm4723, %v4620
    %4769 = vst.msk [vmem:[#allocation2 + $0x168] sm:$0xff] %vm4723, %v4622
    %4770 = vst.msk [vmem:[#allocation2 + $0x170] sm:$0xff] %vm4723, %v4624
    %4771 = vst.msk [vmem:[#allocation2 + $0x178] sm:$0xff] %vm4723, %v4626
    %4772 = vst.msk [vmem:[#allocation2 + $0x180] sm:$0xff] %vm4723, %v4628
    %4773 = vst.msk [vmem:[#allocation2 + $0x188] sm:$0xff] %vm4723, %v4630
    %4774 = vst.msk [vmem:[#allocation2 + $0x190] sm:$0xff] %vm4723, %v4632
    %4775 = vst.msk [vmem:[#allocation2 + $0x198] sm:$0xff] %vm4723, %v4634
    %4776 = vst.msk [vmem:[#allocation2 + $0x1a0] sm:$0xff] %vm4723, %v4636
    %4777 = vst.msk [vmem:[#allocation2 + $0x1a8] sm:$0xff] %vm4723, %v4638
    %4778 = vst.msk [vmem:[#allocation2 + $0x1b0] sm:$0xff] %vm4723, %v4640
    %4779 = vst.msk [vmem:[#allocation2 + $0x1b8] sm:$0xff] %vm4723, %v4642
    %4780 = vst.msk [vmem:[#allocation2 + $0x1c0] sm:$0xff] %vm4723, %v4644
    %4781 = vst.msk [vmem:[#allocation2 + $0x1c8] sm:$0xff] %vm4723, %v4646
    %4782 = vst.msk [vmem:[#allocation2 + $0x1d0] sm:$0xff] %vm4723, %v4648
    %4783 = vst.msk [vmem:[#allocation2 + $0x1d8] sm:$0xff] %vm4723, %v4650
    %4784 = vst.msk [vmem:[#allocation2 + $0x1e0] sm:$0xff] %vm4723, %v4652
    %4785 = vst.msk [vmem:[#allocation2 + $0x1e8] sm:$0xff] %vm4723, %v4654
    %4786 = vst.msk [vmem:[#allocation2 + $0x1f0] sm:$0xff] %vm4723, %v4656
    %4787 = vst.msk [vmem:[#allocation2 + $0x1f8] sm:$0xff] %vm4723, %v4658
    // Predicated region
    $region62: #{tpu_custom_call.1} parent=1 // pred_check
      _
    $region63: #{tpu_custom_call.1} parent=1 // pred_check_branch
      %4789 = sbr.rel (0) target = $region65
    $region64: #{tpu_custom_call.1} parent=1 // pred_region
      %s4791 = ssub.s32 8192, 8192
      %4792 = vsyncadd [#allocation3], %s4791
      %s4793 = sshll.u32 [#allocation2], 4
      %s4794 = int_to_ptr.vmem [resolvable:$true] %s4793
      %4799 = dma.vmem_to_hbm [thread:$0]  %s4794, 8192, %s15, [#allocation3], 128, 128, 8
    $region65: #{tpu_custom_call.1} parent=1 // pred_fallthru
      _
    // Predicated region
    $region66: #{tpu_custom_call.1} parent=1 // pred_check
      _
    $region67: #{tpu_custom_call.1} parent=1 // pred_check_branch
      %4801 = sbr.rel (0) target = $region69
    $region68: #{tpu_custom_call.1} parent=1 // pred_region
      %4802 = dma.done [#allocation3], 8192
    $region69: #{tpu_custom_call.1} parent=1 // pred_fallthru
      _
    %4803 = vsyncpa [#allocation3], 1

</llo_original>
